<compile_context>
chip_gen: v7x
topology: tpu7x:2x2x1
jax: 0.10.0
libtpu: 0.0.40
codegen_flags: <defaults>
</compile_context>

<pallas_src>
import functools

import jax
import jax.numpy as jnp
from jax.experimental import pallas as pl
from jax.experimental.pallas import tpu as pltpu

DEPTH = 10
NCH = 6        # n_channels
IMG_CH = 3     # image_channels
EPS = 1e-4     # BatchNorm eps from the module


# ----------------------------------------------------------------------------
# Pallas kernel: one 3x3 conv layer on one image
#   (previous layer's BN/bias + ReLU fused on the input, BN partial sums out)
# ----------------------------------------------------------------------------
def _dncnn_layer_kernel(x_ref, w_ref, scale_ref, shift_ref, mask_ref,
                        z_ref, stats_ref, *, Cout, Wp, relu_in):
    """x_ref: (Cin, P) padded+flattened activations of one image.
       w_ref: (9, 8, Cin) packed 3x3 weights (out channels zero-padded to 8).
       scale_ref / shift_ref: (Cin, 1) fused input affine (prev BN / bias).
       mask_ref: (1, P) 1.0 on interior pixels, 0.0 on the zero-pad border.
       z_ref: (Cout, P) raw conv output.  stats_ref: (Cout, 2) (sum, sum_sq)."""
    mask = mask_ref[...]
    x = x_ref[...].astype(jnp.float32)
    # Previous layer's BatchNorm / bias (+ ReLU), folded into this layer.
    x = x * scale_ref[...] + shift_ref[...]
    if relu_in:
        x = jnp.maximum(x, 0.0)
    x = x * mask                       # keep the spatial zero-padding exact
    pix = x.shape[-1]
    del pix

    # dx-shifted copies: xs[dx][:, p] == x[:, p + dx - 1].  Wraparound only
    # lands in the masked border, so it never reaches interior outputs.
    xs = [x if dx == 1 else jnp.roll(x, 1 - dx, axis=1) for dx in range(3)]

    # 9 small accumulated MXU matmuls; dy handled by rolling the partial sums
    # by whole padded rows (+-Wp), so only 4 lane shifts total.
    acc = jnp.zeros((8, x.shape[-1]), jnp.float32)
    for dy in range(3):
        part = jnp.zeros((8, x.shape[-1]), jnp.float32)
        for dx in range(3):
            part = part + jnp.dot(w_ref[dy * 3 + dx], xs[dx],
                                  preferred_element_type=jnp.float32)
        if dy != 1:
            part = jnp.roll(part, (1 - dy) * Wp, axis=1)
        acc = acc + part

    acc = acc * mask                   # zero the pad border (also fixes wrap)
    out = acc[:Cout]

    # BatchNorm partial statistics for this image (finalized in plain JAX).
    s1 = jnp.sum(out, axis=1, keepdims=True)                 # (Cout, 1)
    s2 = jnp.sum(out * out, axis=1, keepdims=True)           # (Cout, 1)
    col = jax.lax.broadcasted_iota(jnp.int32, (Cout, 2), 1)
    stats_ref[...] = jnp.where(col == 0, s1, s2)

    z_ref[...] = out.astype(z_ref.dtype)


# ----------------------------------------------------------------------------
# Per-layer wrapper
# ----------------------------------------------------------------------------
def _prep_weight(w_oihw):
    cout, cin = int(w_oihw.shape[0]), int(w_oihw.shape[1])
    wt = jnp.transpose(w_oihw.astype(jnp.float32), (2, 3, 0, 1))
    wt = wt.reshape(9, cout, cin)                 # [ky*3+kx, co, ci]
    return jnp.pad(wt, ((0, 0), (0, 8 - cout), (0, 0)))


def _conv_layer(x_flat, w_packed, in_scale, in_shift, mask, *,
                relu_in, act_dtype, Cout, Wp):
    N, Cin, P = map(int, x_flat.shape)
    kern = functools.partial(_dncnn_layer_kernel, Cout=Cout, Wp=Wp,
                             relu_in=relu_in)
    z, stats = pl.pallas_call(
        kern,
        out_shape=(jax.ShapeDtypeStruct((N, Cout, P), act_dtype),
                   jax.ShapeDtypeStruct((N, Cout, 2), jnp.float32)),
        grid=(N,),
        in_specs=[
            pl.BlockSpec((None, Cin, P), lambda n: (n, 0, 0)),   # activations
            pl.BlockSpec((9, 8, Cin), lambda n: (0, 0, 0)),      # packed weights
            pl.BlockSpec((Cin, 1), lambda n: (0, 0)),            # fused scale
            pl.BlockSpec((Cin, 1), lambda n: (0, 0)),            # fused shift
            pl.BlockSpec((1, P), lambda n: (0, 0)),              # interior mask
        ],
        out_specs=(
            pl.BlockSpec((None, Cout, P), lambda n: (n, 0, 0)),
            pl.BlockSpec((None, Cout, 2), lambda n: (n, 0, 0)),
        ),
        compiler_params=pltpu.CompilerParams(
            dimension_semantics=("parallel",),
            vmem_limit_bytes=32 * 1024 * 1024),
    )(x_flat, w_packed,
      in_scale.reshape(Cin, 1).astype(jnp.float32),
      in_shift.reshape(Cin, 1).astype(jnp.float32),
      mask)
    return z, stats


# ----------------------------------------------------------------------------
# Full DnCNN forward (Pallas)
# ----------------------------------------------------------------------------
def _to_flat(x_nchw, act_dtype):
    xp = jnp.pad(x_nchw, ((0, 0), (0, 0), (1, 1), (1, 1)))   # zero pad H and W
    N, C, Hp, Wp = xp.shape
    return xp.reshape(N, C, Hp * Wp).astype(act_dtype)


def _interior_mask(H, W):
    m = jnp.zeros((H + 2, W + 2), jnp.float32).at[1:H + 1, 1:W + 1].set(1.0)
    return m.reshape(1, (H + 2) * (W + 2))


def dncnn_pallas(x_nchw, params, act_dtype=jnp.float32):
    N, C, H, W = map(int, x_nchw.shape)
    assert C == IMG_CH
    Wp = W + 2
    count = float(N * H * W)

    mask = _interior_mask(H, W)
    cur = _to_flat(x_nchw, act_dtype)

    # Layer 0: Conv(3->6, bias).  Bias + ReLU are folded into layer 1's input.
    z, _ = _conv_layer(cur, _prep_weight(params['w'][0]),
                       jnp.ones((IMG_CH,), jnp.float32),
                       jnp.zeros((IMG_CH,), jnp.float32),
                       mask, relu_in=False, act_dtype=act_dtype,
                       Cout=NCH, Wp=Wp)
    in_scale = jnp.ones((NCH,), jnp.float32)
    in_shift = params['b0'].astype(jnp.float32)

    # Layers 1..8: Conv(6->6) -> BN(batch stats) -> ReLU (BN+ReLU folded fwd).
    for i in range(1, DEPTH - 1):
        z, stats = _conv_layer(z, _prep_weight(params['w'][i]),
                               in_scale, in_shift, mask, relu_in=True,
                               act_dtype=act_dtype, Cout=NCH, Wp=Wp)
        tot = jnp.sum(stats, axis=0)                         # (NCH, 2)
        mean = tot[:, 0] / count
        var = jnp.maximum(tot[:, 1] / count - mean * mean, 0.0)   # biased var
        scale = params['gamma'][i] * jax.lax.rsqrt(var + EPS)
        in_scale = scale
        in_shift = params['beta'][i] - mean * scale

    # Layer 9: Conv(6->3, no bias); its input transform applies BN_8 + ReLU.
    z, _ = _conv_layer(z, _prep_weight(params['w'][DEPTH - 1]),
                       in_scale, in_shift, mask, relu_in=True,
                       act_dtype=act_dtype, Cout=IMG_CH, Wp=Wp)

    out = z.reshape(N, IMG_CH, H + 2, W + 2)[:, :, 1:H + 1, 1:W + 1]
    return x_nchw - out.astype(jnp.float32)                  # y - dncnn(x)


# ----------------------------------------------------------------------------
# Pure-JAX reference (for correctness check)
# ----------------------------------------------------------------------------
def _conv_ref(x_nchw, w, b=None):
    out = jax.lax.conv_general_dilated(
        x_nchw, w, window_strides=(1, 1), padding='SAME',
        dimension_numbers=('NCHW', 'OIHW', 'NCHW'),
        precision=jax.lax.Precision.HIGHEST)
    if b is not None:
        out = out + b[None, :, None, None]
    return out


def _bn_train_ref(x, gamma, beta, eps):
    mean = jnp.mean(x, axis=(0, 2, 3), keepdims=True)
    var = jnp.mean((x - mean) ** 2, axis=(0, 2, 3), keepdims=True)
    xn = (x - mean) / jnp.sqrt(var + eps)
    return xn * gamma[None, :, None, None] + beta[None, :, None, None]


def dncnn_ref(x, params):
    h = jax.nn.relu(_conv_ref(x, params['w'][0], params['b0']))
    for i in range(1, DEPTH - 1):
        h = jax.nn.relu(_bn_train_ref(_conv_ref(h, params['w'][i]),
                                      params['gamma'][i], params['beta'][i],
                                      EPS))
    out = _conv_ref(h, params['w'][DEPTH - 1])
    return x - out


# ----------------------------------------------------------------------------
# Deterministic parameter init (shapes from the module's __init__)
# ----------------------------------------------------------------------------
def init_params(key):
    ks = iter(jax.random.split(key, 64))
    p = {'w': [], 'b0': None, 'gamma': {}, 'beta': {}}
    # layer 0: Conv(3 -> 6, bias=True)
    p['w'].append(0.3 * jax.random.normal(next(ks), (NCH, IMG_CH, 3, 3),
                                          jnp.float32) / jnp.sqrt(9.0 * IMG_CH))
    p['b0'] = 0.05 * jax.random.normal(next(ks), (NCH,), jnp.float32)
    # layers 1..8: Conv(6 -> 6, no bias) + BN(6)
    for i in range(1, DEPTH - 1):
        p['w'].append(0.3 * jax.random.normal(next(ks), (NCH, NCH, 3, 3),
                                              jnp.float32) / jnp.sqrt(9.0 * NCH))
        p['gamma'][i] = 1.0 + 0.1 * jax.random.normal(next(ks), (NCH,),
                                                      jnp.float32)
        p['beta'][i] = 0.1 * jax.random.normal(next(ks), (NCH,), jnp.float32)
    # layer 9: Conv(6 -> 3, no bias)
    p['w'].append(0.3 * jax.random.normal(next(ks), (IMG_CH, NCH, 3, 3),
                                          jnp.float32) / jnp.sqrt(9.0 * NCH))
    return p


if __name__ == "__main__":
    key = jax.random.PRNGKey(0)
    kx, kp = jax.random.split(key)
    x = jax.random.normal(kx, (2, IMG_CH, 16, 16), jnp.float32)   # NCHW
    params = init_params(kp)

    y_ref = jax.block_until_ready(dncnn_ref(x, params))

    fwd = jax.jit(dncnn_pallas, static_argnames=("act_dtype",))

    # f32 activation storage.
    y32 = jax.block_until_ready(fwd(x, params, act_dtype=jnp.float32))
    err32 = float(jnp.max(jnp.abs(y32 - y_ref)))

    # bf16 activation storage (halved inter-layer HBM traffic); loose check.
    y16 = jax.block_until_ready(fwd(x, params, act_dtype=jnp.bfloat16))
    err16 = float(jnp.max(jnp.abs(y16 - y_ref)))

    ok = (y32.shape == x.shape and y32.dtype == x.dtype
          and err32 < 5e-2 and err16 < 5e-1
          and bool(jnp.all(jnp.isfinite(y32)))
          and bool(jnp.all(jnp.isfinite(y16))))
    if ok:
        print("KERNEL_OK")
    else:
        print(f"MISMATCH err_f32={err32} err_bf16={err16}")
</pallas_src>

<mosaic_0001>
module attributes {stable_mosaic.version = 11 : i64} {
  func.func @_dncnn_layer_kernel(%arg0: i32, %arg1: memref<1x3x324xf32, #tpu.memory_space<vmem>>, %arg2: memref<9x8x3xf32, #tpu.memory_space<vmem>>, %arg3: memref<3x1xf32, #tpu.memory_space<vmem>>, %arg4: memref<3x1xf32, #tpu.memory_space<vmem>>, %arg5: memref<1x324xf32, #tpu.memory_space<vmem>>, %arg6: memref<1x6x324xf32, #tpu.memory_space<vmem>>, %arg7: memref<1x6x2xf32, #tpu.memory_space<vmem>>) attributes {dimension_semantics = [#tpu.dimension_semantics<parallel>], iteration_bounds = array<i64: 2>, scalar_prefetch = 0 : i64, scratch_operands = 0 : i64, tpu.core_type = #tpu.core_type<tc>, window_params = [{transform_indices = @transform_0, window_bounds = array<i64: 1, 3, 324>}, {pipeline_mode = #tpu.pipeline_mode<synchronous>, transform_indices = @transform_1, window_bounds = array<i64: 9, 8, 3>}, {pipeline_mode = #tpu.pipeline_mode<synchronous>, transform_indices = @transform_2, window_bounds = array<i64: 3, 1>}, {pipeline_mode = #tpu.pipeline_mode<synchronous>, transform_indices = @transform_3, window_bounds = array<i64: 3, 1>}, {pipeline_mode = #tpu.pipeline_mode<synchronous>, transform_indices = @transform_4, window_bounds = array<i64: 1, 324>}, {transform_indices = @transform_5, window_bounds = array<i64: 1, 6, 324>}, {transform_indices = @transform_6, window_bounds = array<i64: 1, 6, 2>}]} {
    %c0 = arith.constant 0 : index
    %c0_0 = arith.constant 0 : index
    %0 = vector.load %arg5[%c0, %c0_0] : memref<1x324xf32, #tpu.memory_space<vmem>>, vector<1x324xf32>
    %c0_1 = arith.constant 0 : index
    %c0_2 = arith.constant 0 : index
    %c0_3 = arith.constant 0 : index
    %1 = vector.load %arg1[%c0_1, %c0_2, %c0_3] : memref<1x3x324xf32, #tpu.memory_space<vmem>>, vector<1x3x324xf32>
    %2 = vector.shape_cast %1 : vector<1x3x324xf32> to vector<3x324xf32>
    %c0_4 = arith.constant 0 : index
    %c0_5 = arith.constant 0 : index
    %3 = vector.load %arg3[%c0_4, %c0_5] : memref<3x1xf32, #tpu.memory_space<vmem>>, vector<3x1xf32>
    %4 = vector.broadcast %3 : vector<3x1xf32> to vector<3x324xf32>
    %5 = arith.mulf %2, %4 : vector<3x324xf32>
    %c0_6 = arith.constant 0 : index
    %c0_7 = arith.constant 0 : index
    %6 = vector.load %arg4[%c0_6, %c0_7] : memref<3x1xf32, #tpu.memory_space<vmem>>, vector<3x1xf32>
    %7 = vector.broadcast %6 : vector<3x1xf32> to vector<3x324xf32>
    %8 = arith.addf %5, %7 : vector<3x324xf32>
    %9 = vector.broadcast %0 : vector<1x324xf32> to vector<3x324xf32>
    %10 = arith.mulf %8, %9 : vector<3x324xf32>
    %11 = vector.extract_strided_slice %10 {offsets = [0, 323], sizes = [3, 1], strides = [1, 1]} : vector<3x324xf32> to vector<3x1xf32>
    %12 = vector.extract_strided_slice %10 {offsets = [0, 0], sizes = [3, 323], strides = [1, 1]} : vector<3x324xf32> to vector<3x323xf32>
    %13 = tpu.concatenate %11, %12 in 1 : vector<3x1xf32>, vector<3x323xf32> -> vector<3x324xf32>
    %14 = vector.extract_strided_slice %10 {offsets = [0, 1], sizes = [3, 323], strides = [1, 1]} : vector<3x324xf32> to vector<3x323xf32>
    %15 = vector.extract_strided_slice %10 {offsets = [0, 0], sizes = [3, 1], strides = [1, 1]} : vector<3x324xf32> to vector<3x1xf32>
    %16 = tpu.concatenate %14, %15 in 1 : vector<3x323xf32>, vector<3x1xf32> -> vector<3x324xf32>
    %cst = arith.constant 0.000000e+00 : f32
    %17 = vector.broadcast %cst : f32 to vector<8x324xf32>
    %cst_8 = arith.constant 0.000000e+00 : f32
    %18 = vector.broadcast %cst_8 : f32 to vector<8x324xf32>
    %c0_9 = arith.constant 0 : index
    %c0_10 = arith.constant 0 : index
    %c0_11 = arith.constant 0 : index
    %19 = vector.load %arg2[%c0_9, %c0_10, %c0_11] : memref<9x8x3xf32, #tpu.memory_space<vmem>>, vector<1x8x3xf32>
    %20 = vector.shape_cast %19 : vector<1x8x3xf32> to vector<8x3xf32>
    %cst_12 = arith.constant dense<0.000000e+00> : vector<8x324xf32>
    %21 = tpu.matmul %20, %13, %cst_12 {dimension_numbers = #tpu.dot_dimension_numbers<[1], [0], [0], [1], [0, 0, 1, 1], [], []>} : vector<8x3xf32>, vector<3x324xf32>, vector<8x324xf32> -> vector<8x324xf32>
    %22 = arith.addf %18, %21 : vector<8x324xf32>
    %c1 = arith.constant 1 : index
    %c0_13 = arith.constant 0 : index
    %c0_14 = arith.constant 0 : index
    %23 = vector.load %arg2[%c1, %c0_13, %c0_14] : memref<9x8x3xf32, #tpu.memory_space<vmem>>, vector<1x8x3xf32>
    %24 = vector.shape_cast %23 : vector<1x8x3xf32> to vector<8x3xf32>
    %cst_15 = arith.constant dense<0.000000e+00> : vector<8x324xf32>
    %25 = tpu.matmul %24, %10, %cst_15 {dimension_numbers = #tpu.dot_dimension_numbers<[1], [0], [0], [1], [0, 0, 1, 1], [], []>} : vector<8x3xf32>, vector<3x324xf32>, vector<8x324xf32> -> vector<8x324xf32>
    %26 = arith.addf %22, %25 : vector<8x324xf32>
    %c2 = arith.constant 2 : index
    %c0_16 = arith.constant 0 : index
    %c0_17 = arith.constant 0 : index
    %27 = vector.load %arg2[%c2, %c0_16, %c0_17] : memref<9x8x3xf32, #tpu.memory_space<vmem>>, vector<1x8x3xf32>
    %28 = vector.shape_cast %27 : vector<1x8x3xf32> to vector<8x3xf32>
    %cst_18 = arith.constant dense<0.000000e+00> : vector<8x324xf32>
    %29 = tpu.matmul %28, %16, %cst_18 {dimension_numbers = #tpu.dot_dimension_numbers<[1], [0], [0], [1], [0, 0, 1, 1], [], []>} : vector<8x3xf32>, vector<3x324xf32>, vector<8x324xf32> -> vector<8x324xf32>
    %30 = arith.addf %26, %29 : vector<8x324xf32>
    %31 = vector.extract_strided_slice %30 {offsets = [0, 306], sizes = [8, 18], strides = [1, 1]} : vector<8x324xf32> to vector<8x18xf32>
    %32 = vector.extract_strided_slice %30 {offsets = [0, 0], sizes = [8, 306], strides = [1, 1]} : vector<8x324xf32> to vector<8x306xf32>
    %33 = tpu.concatenate %31, %32 in 1 : vector<8x18xf32>, vector<8x306xf32> -> vector<8x324xf32>
    %34 = arith.addf %17, %33 : vector<8x324xf32>
    %cst_19 = arith.constant 0.000000e+00 : f32
    %35 = vector.broadcast %cst_19 : f32 to vector<8x324xf32>
    %c3 = arith.constant 3 : index
    %c0_20 = arith.constant 0 : index
    %c0_21 = arith.constant 0 : index
    %36 = vector.load %arg2[%c3, %c0_20, %c0_21] : memref<9x8x3xf32, #tpu.memory_space<vmem>>, vector<1x8x3xf32>
    %37 = vector.shape_cast %36 : vector<1x8x3xf32> to vector<8x3xf32>
    %cst_22 = arith.constant dense<0.000000e+00> : vector<8x324xf32>
    %38 = tpu.matmul %37, %13, %cst_22 {dimension_numbers = #tpu.dot_dimension_numbers<[1], [0], [0], [1], [0, 0, 1, 1], [], []>} : vector<8x3xf32>, vector<3x324xf32>, vector<8x324xf32> -> vector<8x324xf32>
    %39 = arith.addf %35, %38 : vector<8x324xf32>
    %c4 = arith.constant 4 : index
    %c0_23 = arith.constant 0 : index
    %c0_24 = arith.constant 0 : index
    %40 = vector.load %arg2[%c4, %c0_23, %c0_24] : memref<9x8x3xf32, #tpu.memory_space<vmem>>, vector<1x8x3xf32>
    %41 = vector.shape_cast %40 : vector<1x8x3xf32> to vector<8x3xf32>
    %cst_25 = arith.constant dense<0.000000e+00> : vector<8x324xf32>
    %42 = tpu.matmul %41, %10, %cst_25 {dimension_numbers = #tpu.dot_dimension_numbers<[1], [0], [0], [1], [0, 0, 1, 1], [], []>} : vector<8x3xf32>, vector<3x324xf32>, vector<8x324xf32> -> vector<8x324xf32>
    %43 = arith.addf %39, %42 : vector<8x324xf32>
    %c5 = arith.constant 5 : index
    %c0_26 = arith.constant 0 : index
    %c0_27 = arith.constant 0 : index
    %44 = vector.load %arg2[%c5, %c0_26, %c0_27] : memref<9x8x3xf32, #tpu.memory_space<vmem>>, vector<1x8x3xf32>
    %45 = vector.shape_cast %44 : vector<1x8x3xf32> to vector<8x3xf32>
    %cst_28 = arith.constant dense<0.000000e+00> : vector<8x324xf32>
    %46 = tpu.matmul %45, %16, %cst_28 {dimension_numbers = #tpu.dot_dimension_numbers<[1], [0], [0], [1], [0, 0, 1, 1], [], []>} : vector<8x3xf32>, vector<3x324xf32>, vector<8x324xf32> -> vector<8x324xf32>
    %47 = arith.addf %43, %46 : vector<8x324xf32>
    %48 = arith.addf %34, %47 : vector<8x324xf32>
    %cst_29 = arith.constant 0.000000e+00 : f32
    %49 = vector.broadcast %cst_29 : f32 to vector<8x324xf32>
    %c6 = arith.constant 6 : index
    %c0_30 = arith.constant 0 : index
    %c0_31 = arith.constant 0 : index
    %50 = vector.load %arg2[%c6, %c0_30, %c0_31] : memref<9x8x3xf32, #tpu.memory_space<vmem>>, vector<1x8x3xf32>
    %51 = vector.shape_cast %50 : vector<1x8x3xf32> to vector<8x3xf32>
    %cst_32 = arith.constant dense<0.000000e+00> : vector<8x324xf32>
    %52 = tpu.matmul %51, %13, %cst_32 {dimension_numbers = #tpu.dot_dimension_numbers<[1], [0], [0], [1], [0, 0, 1, 1], [], []>} : vector<8x3xf32>, vector<3x324xf32>, vector<8x324xf32> -> vector<8x324xf32>
    %53 = arith.addf %49, %52 : vector<8x324xf32>
    %c7 = arith.constant 7 : index
    %c0_33 = arith.constant 0 : index
    %c0_34 = arith.constant 0 : index
    %54 = vector.load %arg2[%c7, %c0_33, %c0_34] : memref<9x8x3xf32, #tpu.memory_space<vmem>>, vector<1x8x3xf32>
    %55 = vector.shape_cast %54 : vector<1x8x3xf32> to vector<8x3xf32>
    %cst_35 = arith.constant dense<0.000000e+00> : vector<8x324xf32>
    %56 = tpu.matmul %55, %10, %cst_35 {dimension_numbers = #tpu.dot_dimension_numbers<[1], [0], [0], [1], [0, 0, 1, 1], [], []>} : vector<8x3xf32>, vector<3x324xf32>, vector<8x324xf32> -> vector<8x324xf32>
    %57 = arith.addf %53, %56 : vector<8x324xf32>
    %c8 = arith.constant 8 : index
    %c0_36 = arith.constant 0 : index
    %c0_37 = arith.constant 0 : index
    %58 = vector.load %arg2[%c8, %c0_36, %c0_37] : memref<9x8x3xf32, #tpu.memory_space<vmem>>, vector<1x8x3xf32>
    %59 = vector.shape_cast %58 : vector<1x8x3xf32> to vector<8x3xf32>
    %cst_38 = arith.constant dense<0.000000e+00> : vector<8x324xf32>
    %60 = tpu.matmul %59, %16, %cst_38 {dimension_numbers = #tpu.dot_dimension_numbers<[1], [0], [0], [1], [0, 0, 1, 1], [], []>} : vector<8x3xf32>, vector<3x324xf32>, vector<8x324xf32> -> vector<8x324xf32>
    %61 = arith.addf %57, %60 : vector<8x324xf32>
    %62 = vector.extract_strided_slice %61 {offsets = [0, 18], sizes = [8, 306], strides = [1, 1]} : vector<8x324xf32> to vector<8x306xf32>
    %63 = vector.extract_strided_slice %61 {offsets = [0, 0], sizes = [8, 18], strides = [1, 1]} : vector<8x324xf32> to vector<8x18xf32>
    %64 = tpu.concatenate %62, %63 in 1 : vector<8x306xf32>, vector<8x18xf32> -> vector<8x324xf32>
    %65 = arith.addf %48, %64 : vector<8x324xf32>
    %66 = vector.broadcast %0 : vector<1x324xf32> to vector<8x324xf32>
    %67 = arith.mulf %65, %66 : vector<8x324xf32>
    %68 = vector.extract_strided_slice %67 {offsets = [0, 0], sizes = [6, 324], strides = [1, 1]} : vector<8x324xf32> to vector<6x324xf32>
    %cst_39 = arith.constant dense<0.000000e+00> : vector<6xf32>
    %69 = vector.multi_reduction <add>, %68, %cst_39 [1] : vector<6x324xf32> to vector<6xf32>
    %70 = vector.shape_cast %69 : vector<6xf32> to vector<6x1xf32>
    %71 = arith.mulf %68, %68 : vector<6x324xf32>
    %cst_40 = arith.constant dense<0.000000e+00> : vector<6xf32>
    %72 = vector.multi_reduction <add>, %71, %cst_40 [1] : vector<6x324xf32> to vector<6xf32>
    %73 = vector.shape_cast %72 : vector<6xf32> to vector<6x1xf32>
    %74 = tpu.iota {dimensions = array<i32: 1>} : vector<6x2xi32>
    %c0_i32 = arith.constant 0 : i32
    %75 = vector.broadcast %c0_i32 : i32 to vector<6x2xi32>
    %76 = arith.cmpi eq, %74, %75 : vector<6x2xi32>
    %77 = vector.shape_cast %70 : vector<6x1xf32> to vector<6x1xf32>
    %78 = vector.broadcast %77 : vector<6x1xf32> to vector<6x2xf32>
    %79 = vector.shape_cast %73 : vector<6x1xf32> to vector<6x1xf32>
    %80 = vector.broadcast %79 : vector<6x1xf32> to vector<6x2xf32>
    %81 = arith.select %76, %78, %80 : vector<6x2xi1>, vector<6x2xf32>
    %c0_41 = arith.constant 0 : index
    %c0_42 = arith.constant 0 : index
    %c0_43 = arith.constant 0 : index
    %82 = vector.load %arg7[%c0_41, %c0_42, %c0_43] : memref<1x6x2xf32, #tpu.memory_space<vmem>>, vector<1x6x2xf32>
    %83 = vector.shape_cast %82 : vector<1x6x2xf32> to vector<6x2xf32>
    %84 = vector.shape_cast %81 : vector<6x2xf32> to vector<1x6x2xf32>
    tpu.vector_store %arg7[%c0_41, %c0_42, %c0_43], %84 {strides = array<i32>} : memref<1x6x2xf32, #tpu.memory_space<vmem>>, vector<1x6x2xf32>,
    %c0_44 = arith.constant 0 : index
    %c0_45 = arith.constant 0 : index
    %c0_46 = arith.constant 0 : index
    %85 = vector.load %arg6[%c0_44, %c0_45, %c0_46] : memref<1x6x324xf32, #tpu.memory_space<vmem>>, vector<1x6x324xf32>
    %86 = vector.shape_cast %85 : vector<1x6x324xf32> to vector<6x324xf32>
    %87 = vector.shape_cast %68 : vector<6x324xf32> to vector<1x6x324xf32>
    tpu.vector_store %arg6[%c0_44, %c0_45, %c0_46], %87 {strides = array<i32>} : memref<1x6x324xf32, #tpu.memory_space<vmem>>, vector<1x6x324xf32>,
    return
  }
  func.func @transform_0(%arg0: i32) -> (i32, i32, i32) {
    %c0_i32 = arith.constant 0 : i32
    %c0_i32_0 = arith.constant 0 : i32
    %c0_i32_1 = arith.constant 0 : i32
    return %arg0, %c0_i32, %c0_i32_0 : i32, i32, i32
  }
  func.func @transform_1(%arg0: i32) -> (i32, i32, i32) {
    %c0_i32 = arith.constant 0 : i32
    %c0_i32_0 = arith.constant 0 : i32
    %c0_i32_1 = arith.constant 0 : i32
    %c0_i32_2 = arith.constant 0 : i32
    return %c0_i32, %c0_i32_0, %c0_i32_1 : i32, i32, i32
  }
  func.func @transform_2(%arg0: i32) -> (i32, i32) {
    %c0_i32 = arith.constant 0 : i32
    %c0_i32_0 = arith.constant 0 : i32
    %c0_i32_1 = arith.constant 0 : i32
    return %c0_i32, %c0_i32_0 : i32, i32
  }
  func.func @transform_3(%arg0: i32) -> (i32, i32) {
    %c0_i32 = arith.constant 0 : i32
    %c0_i32_0 = arith.constant 0 : i32
    %c0_i32_1 = arith.constant 0 : i32
    return %c0_i32, %c0_i32_0 : i32, i32
  }
  func.func @transform_4(%arg0: i32) -> (i32, i32) {
    %c0_i32 = arith.constant 0 : i32
    %c0_i32_0 = arith.constant 0 : i32
    %c0_i32_1 = arith.constant 0 : i32
    return %c0_i32, %c0_i32_0 : i32, i32
  }
  func.func @transform_5(%arg0: i32) -> (i32, i32, i32) {
    %c0_i32 = arith.constant 0 : i32
    %c0_i32_0 = arith.constant 0 : i32
    %c0_i32_1 = arith.constant 0 : i32
    return %arg0, %c0_i32, %c0_i32_0 : i32, i32, i32
  }
  func.func @transform_6(%arg0: i32) -> (i32, i32, i32) {
    %c0_i32 = arith.constant 0 : i32
    %c0_i32_0 = arith.constant 0 : i32
    %c0_i32_1 = arith.constant 0 : i32
    return %arg0, %c0_i32, %c0_i32_0 : i32, i32, i32
  }
}

module attributes {stable_mosaic.version = 11 : i64} {
  func.func @_dncnn_layer_kernel(%arg0: i32, %arg1: memref<1x6x324xf32, #tpu.memory_space<vmem>>, %arg2: memref<9x8x6xf32, #tpu.memory_space<vmem>>, %arg3: memref<6x1xf32, #tpu.memory_space<vmem>>, %arg4: memref<6x1xf32, #tpu.memory_space<vmem>>, %arg5: memref<1x324xf32, #tpu.memory_space<vmem>>, %arg6: memref<1x6x324xf32, #tpu.memory_space<vmem>>, %arg7: memref<1x6x2xf32, #tpu.memory_space<vmem>>) attributes {dimension_semantics = [#tpu.dimension_semantics<parallel>], iteration_bounds = array<i64: 2>, scalar_prefetch = 0 : i64, scratch_operands = 0 : i64, tpu.core_type = #tpu.core_type<tc>, window_params = [{transform_indices = @transform_0, window_bounds = array<i64: 1, 6, 324>}, {pipeline_mode = #tpu.pipeline_mode<synchronous>, transform_indices = @transform_1, window_bounds = array<i64: 9, 8, 6>}, {pipeline_mode = #tpu.pipeline_mode<synchronous>, transform_indices = @transform_2, window_bounds = array<i64: 6, 1>}, {pipeline_mode = #tpu.pipeline_mode<synchronous>, transform_indices = @transform_3, window_bounds = array<i64: 6, 1>}, {pipeline_mode = #tpu.pipeline_mode<synchronous>, transform_indices = @transform_4, window_bounds = array<i64: 1, 324>}, {transform_indices = @transform_5, window_bounds = array<i64: 1, 6, 324>}, {transform_indices = @transform_6, window_bounds = array<i64: 1, 6, 2>}]} {
    %c0 = arith.constant 0 : index
    %c0_0 = arith.constant 0 : index
    %0 = vector.load %arg5[%c0, %c0_0] : memref<1x324xf32, #tpu.memory_space<vmem>>, vector<1x324xf32>
    %c0_1 = arith.constant 0 : index
    %c0_2 = arith.constant 0 : index
    %c0_3 = arith.constant 0 : index
    %1 = vector.load %arg1[%c0_1, %c0_2, %c0_3] : memref<1x6x324xf32, #tpu.memory_space<vmem>>, vector<1x6x324xf32>
    %2 = vector.shape_cast %1 : vector<1x6x324xf32> to vector<6x324xf32>
    %c0_4 = arith.constant 0 : index
    %c0_5 = arith.constant 0 : index
    %3 = vector.load %arg3[%c0_4, %c0_5] : memref<6x1xf32, #tpu.memory_space<vmem>>, vector<6x1xf32>
    %4 = vector.broadcast %3 : vector<6x1xf32> to vector<6x324xf32>
    %5 = arith.mulf %2, %4 : vector<6x324xf32>
    %c0_6 = arith.constant 0 : index
    %c0_7 = arith.constant 0 : index
    %6 = vector.load %arg4[%c0_6, %c0_7] : memref<6x1xf32, #tpu.memory_space<vmem>>, vector<6x1xf32>
    %7 = vector.broadcast %6 : vector<6x1xf32> to vector<6x324xf32>
    %8 = arith.addf %5, %7 : vector<6x324xf32>
    %cst = arith.constant 0.000000e+00 : f32
    %9 = vector.broadcast %cst : f32 to vector<6x324xf32>
    %10 = arith.maximumf %8, %9 : vector<6x324xf32>
    %11 = vector.broadcast %0 : vector<1x324xf32> to vector<6x324xf32>
    %12 = arith.mulf %10, %11 : vector<6x324xf32>
    %13 = vector.extract_strided_slice %12 {offsets = [0, 323], sizes = [6, 1], strides = [1, 1]} : vector<6x324xf32> to vector<6x1xf32>
    %14 = vector.extract_strided_slice %12 {offsets = [0, 0], sizes = [6, 323], strides = [1, 1]} : vector<6x324xf32> to vector<6x323xf32>
    %15 = tpu.concatenate %13, %14 in 1 : vector<6x1xf32>, vector<6x323xf32> -> vector<6x324xf32>
    %16 = vector.extract_strided_slice %12 {offsets = [0, 1], sizes = [6, 323], strides = [1, 1]} : vector<6x324xf32> to vector<6x323xf32>
    %17 = vector.extract_strided_slice %12 {offsets = [0, 0], sizes = [6, 1], strides = [1, 1]} : vector<6x324xf32> to vector<6x1xf32>
    %18 = tpu.concatenate %16, %17 in 1 : vector<6x323xf32>, vector<6x1xf32> -> vector<6x324xf32>
    %cst_8 = arith.constant 0.000000e+00 : f32
    %19 = vector.broadcast %cst_8 : f32 to vector<8x324xf32>
    %cst_9 = arith.constant 0.000000e+00 : f32
    %20 = vector.broadcast %cst_9 : f32 to vector<8x324xf32>
    %c0_10 = arith.constant 0 : index
    %c0_11 = arith.constant 0 : index
    %c0_12 = arith.constant 0 : index
    %21 = vector.load %arg2[%c0_10, %c0_11, %c0_12] : memref<9x8x6xf32, #tpu.memory_space<vmem>>, vector<1x8x6xf32>
    %22 = vector.shape_cast %21 : vector<1x8x6xf32> to vector<8x6xf32>
    %cst_13 = arith.constant dense<0.000000e+00> : vector<8x324xf32>
    %23 = tpu.matmul %22, %15, %cst_13 {dimension_numbers = #tpu.dot_dimension_numbers<[1], [0], [0], [1], [0, 0, 1, 1], [], []>} : vector<8x6xf32>, vector<6x324xf32>, vector<8x324xf32> -> vector<8x324xf32>
    %24 = arith.addf %20, %23 : vector<8x324xf32>
    %c1 = arith.constant 1 : index
    %c0_14 = arith.constant 0 : index
    %c0_15 = arith.constant 0 : index
    %25 = vector.load %arg2[%c1, %c0_14, %c0_15] : memref<9x8x6xf32, #tpu.memory_space<vmem>>, vector<1x8x6xf32>
    %26 = vector.shape_cast %25 : vector<1x8x6xf32> to vector<8x6xf32>
    %cst_16 = arith.constant dense<0.000000e+00> : vector<8x324xf32>
    %27 = tpu.matmul %26, %12, %cst_16 {dimension_numbers = #tpu.dot_dimension_numbers<[1], [0], [0], [1], [0, 0, 1, 1], [], []>} : vector<8x6xf32>, vector<6x324xf32>, vector<8x324xf32> -> vector<8x324xf32>
    %28 = arith.addf %24, %27 : vector<8x324xf32>
    %c2 = arith.constant 2 : index
    %c0_17 = arith.constant 0 : index
    %c0_18 = arith.constant 0 : index
    %29 = vector.load %arg2[%c2, %c0_17, %c0_18] : memref<9x8x6xf32, #tpu.memory_space<vmem>>, vector<1x8x6xf32>
    %30 = vector.shape_cast %29 : vector<1x8x6xf32> to vector<8x6xf32>
    %cst_19 = arith.constant dense<0.000000e+00> : vector<8x324xf32>
    %31 = tpu.matmul %30, %18, %cst_19 {dimension_numbers = #tpu.dot_dimension_numbers<[1], [0], [0], [1], [0, 0, 1, 1], [], []>} : vector<8x6xf32>, vector<6x324xf32>, vector<8x324xf32> -> vector<8x324xf32>
    %32 = arith.addf %28, %31 : vector<8x324xf32>
    %33 = vector.extract_strided_slice %32 {offsets = [0, 306], sizes = [8, 18], strides = [1, 1]} : vector<8x324xf32> to vector<8x18xf32>
    %34 = vector.extract_strided_slice %32 {offsets = [0, 0], sizes = [8, 306], strides = [1, 1]} : vector<8x324xf32> to vector<8x306xf32>
    %35 = tpu.concatenate %33, %34 in 1 : vector<8x18xf32>, vector<8x306xf32> -> vector<8x324xf32>
    %36 = arith.addf %19, %35 : vector<8x324xf32>
    %cst_20 = arith.constant 0.000000e+00 : f32
    %37 = vector.broadcast %cst_20 : f32 to vector<8x324xf32>
    %c3 = arith.constant 3 : index
    %c0_21 = arith.constant 0 : index
    %c0_22 = arith.constant 0 : index
    %38 = vector.load %arg2[%c3, %c0_21, %c0_22] : memref<9x8x6xf32, #tpu.memory_space<vmem>>, vector<1x8x6xf32>
    %39 = vector.shape_cast %38 : vector<1x8x6xf32> to vector<8x6xf32>
    %cst_23 = arith.constant dense<0.000000e+00> : vector<8x324xf32>
    %40 = tpu.matmul %39, %15, %cst_23 {dimension_numbers = #tpu.dot_dimension_numbers<[1], [0], [0], [1], [0, 0, 1, 1], [], []>} : vector<8x6xf32>, vector<6x324xf32>, vector<8x324xf32> -> vector<8x324xf32>
    %41 = arith.addf %37, %40 : vector<8x324xf32>
    %c4 = arith.constant 4 : index
    %c0_24 = arith.constant 0 : index
    %c0_25 = arith.constant 0 : index
    %42 = vector.load %arg2[%c4, %c0_24, %c0_25] : memref<9x8x6xf32, #tpu.memory_space<vmem>>, vector<1x8x6xf32>
    %43 = vector.shape_cast %42 : vector<1x8x6xf32> to vector<8x6xf32>
    %cst_26 = arith.constant dense<0.000000e+00> : vector<8x324xf32>
    %44 = tpu.matmul %43, %12, %cst_26 {dimension_numbers = #tpu.dot_dimension_numbers<[1], [0], [0], [1], [0, 0, 1, 1], [], []>} : vector<8x6xf32>, vector<6x324xf32>, vector<8x324xf32> -> vector<8x324xf32>
    %45 = arith.addf %41, %44 : vector<8x324xf32>
    %c5 = arith.constant 5 : index
    %c0_27 = arith.constant 0 : index
    %c0_28 = arith.constant 0 : index
    %46 = vector.load %arg2[%c5, %c0_27, %c0_28] : memref<9x8x6xf32, #tpu.memory_space<vmem>>, vector<1x8x6xf32>
    %47 = vector.shape_cast %46 : vector<1x8x6xf32> to vector<8x6xf32>
    %cst_29 = arith.constant dense<0.000000e+00> : vector<8x324xf32>
    %48 = tpu.matmul %47, %18, %cst_29 {dimension_numbers = #tpu.dot_dimension_numbers<[1], [0], [0], [1], [0, 0, 1, 1], [], []>} : vector<8x6xf32>, vector<6x324xf32>, vector<8x324xf32> -> vector<8x324xf32>
    %49 = arith.addf %45, %48 : vector<8x324xf32>
    %50 = arith.addf %36, %49 : vector<8x324xf32>
    %cst_30 = arith.constant 0.000000e+00 : f32
    %51 = vector.broadcast %cst_30 : f32 to vector<8x324xf32>
    %c6 = arith.constant 6 : index
    %c0_31 = arith.constant 0 : index
    %c0_32 = arith.constant 0 : index
    %52 = vector.load %arg2[%c6, %c0_31, %c0_32] : memref<9x8x6xf32, #tpu.memory_space<vmem>>, vector<1x8x6xf32>
    %53 = vector.shape_cast %52 : vector<1x8x6xf32> to vector<8x6xf32>
    %cst_33 = arith.constant dense<0.000000e+00> : vector<8x324xf32>
    %54 = tpu.matmul %53, %15, %cst_33 {dimension_numbers = #tpu.dot_dimension_numbers<[1], [0], [0], [1], [0, 0, 1, 1], [], []>} : vector<8x6xf32>, vector<6x324xf32>, vector<8x324xf32> -> vector<8x324xf32>
    %55 = arith.addf %51, %54 : vector<8x324xf32>
    %c7 = arith.constant 7 : index
    %c0_34 = arith.constant 0 : index
    %c0_35 = arith.constant 0 : index
    %56 = vector.load %arg2[%c7, %c0_34, %c0_35] : memref<9x8x6xf32, #tpu.memory_space<vmem>>, vector<1x8x6xf32>
    %57 = vector.shape_cast %56 : vector<1x8x6xf32> to vector<8x6xf32>
    %cst_36 = arith.constant dense<0.000000e+00> : vector<8x324xf32>
    %58 = tpu.matmul %57, %12, %cst_36 {dimension_numbers = #tpu.dot_dimension_numbers<[1], [0], [0], [1], [0, 0, 1, 1], [], []>} : vector<8x6xf32>, vector<6x324xf32>, vector<8x324xf32> -> vector<8x324xf32>
    %59 = arith.addf %55, %58 : vector<8x324xf32>
    %c8 = arith.constant 8 : index
    %c0_37 = arith.constant 0 : index
    %c0_38 = arith.constant 0 : index
    %60 = vector.load %arg2[%c8, %c0_37, %c0_38] : memref<9x8x6xf32, #tpu.memory_space<vmem>>, vector<1x8x6xf32>
    %61 = vector.shape_cast %60 : vector<1x8x6xf32> to vector<8x6xf32>
    %cst_39 = arith.constant dense<0.000000e+00> : vector<8x324xf32>
    %62 = tpu.matmul %61, %18, %cst_39 {dimension_numbers = #tpu.dot_dimension_numbers<[1], [0], [0], [1], [0, 0, 1, 1], [], []>} : vector<8x6xf32>, vector<6x324xf32>, vector<8x324xf32> -> vector<8x324xf32>
    %63 = arith.addf %59, %62 : vector<8x324xf32>
    %64 = vector.extract_strided_slice %63 {offsets = [0, 18], sizes = [8, 306], strides = [1, 1]} : vector<8x324xf32> to vector<8x306xf32>
    %65 = vector.extract_strided_slice %63 {offsets = [0, 0], sizes = [8, 18], strides = [1, 1]} : vector<8x324xf32> to vector<8x18xf32>
    %66 = tpu.concatenate %64, %65 in 1 : vector<8x306xf32>, vector<8x18xf32> -> vector<8x324xf32>
    %67 = arith.addf %50, %66 : vector<8x324xf32>
    %68 = vector.broadcast %0 : vector<1x324xf32> to vector<8x324xf32>
    %69 = arith.mulf %67, %68 : vector<8x324xf32>
    %70 = vector.extract_strided_slice %69 {offsets = [0, 0], sizes = [6, 324], strides = [1, 1]} : vector<8x324xf32> to vector<6x324xf32>
    %cst_40 = arith.constant dense<0.000000e+00> : vector<6xf32>
    %71 = vector.multi_reduction <add>, %70, %cst_40 [1] : vector<6x324xf32> to vector<6xf32>
    %72 = vector.shape_cast %71 : vector<6xf32> to vector<6x1xf32>
    %73 = arith.mulf %70, %70 : vector<6x324xf32>
    %cst_41 = arith.constant dense<0.000000e+00> : vector<6xf32>
    %74 = vector.multi_reduction <add>, %73, %cst_41 [1] : vector<6x324xf32> to vector<6xf32>
    %75 = vector.shape_cast %74 : vector<6xf32> to vector<6x1xf32>
    %76 = tpu.iota {dimensions = array<i32: 1>} : vector<6x2xi32>
    %c0_i32 = arith.constant 0 : i32
    %77 = vector.broadcast %c0_i32 : i32 to vector<6x2xi32>
    %78 = arith.cmpi eq, %76, %77 : vector<6x2xi32>
    %79 = vector.shape_cast %72 : vector<6x1xf32> to vector<6x1xf32>
    %80 = vector.broadcast %79 : vector<6x1xf32> to vector<6x2xf32>
    %81 = vector.shape_cast %75 : vector<6x1xf32> to vector<6x1xf32>
    %82 = vector.broadcast %81 : vector<6x1xf32> to vector<6x2xf32>
    %83 = arith.select %78, %80, %82 : vector<6x2xi1>, vector<6x2xf32>
    %c0_42 = arith.constant 0 : index
    %c0_43 = arith.constant 0 : index
    %c0_44 = arith.constant 0 : index
    %84 = vector.load %arg7[%c0_42, %c0_43, %c0_44] : memref<1x6x2xf32, #tpu.memory_space<vmem>>, vector<1x6x2xf32>
    %85 = vector.shape_cast %84 : vector<1x6x2xf32> to vector<6x2xf32>
    %86 = vector.shape_cast %83 : vector<6x2xf32> to vector<1x6x2xf32>
    tpu.vector_store %arg7[%c0_42, %c0_43, %c0_44], %86 {strides = array<i32>} : memref<1x6x2xf32, #tpu.memory_space<vmem>>, vector<1x6x2xf32>,
    %c0_45 = arith.constant 0 : index
    %c0_46 = arith.constant 0 : index
    %c0_47 = arith.constant 0 : index
    %87 = vector.load %arg6[%c0_45, %c0_46, %c0_47] : memref<1x6x324xf32, #tpu.memory_space<vmem>>, vector<1x6x324xf32>
    %88 = vector.shape_cast %87 : vector<1x6x324xf32> to vector<6x324xf32>
    %89 = vector.shape_cast %70 : vector<6x324xf32> to vector<1x6x324xf32>
    tpu.vector_store %arg6[%c0_45, %c0_46, %c0_47], %89 {strides = array<i32>} : memref<1x6x324xf32, #tpu.memory_space<vmem>>, vector<1x6x324xf32>,
    return
  }
  func.func @transform_0(%arg0: i32) -> (i32, i32, i32) {
    %c0_i32 = arith.constant 0 : i32
    %c0_i32_0 = arith.constant 0 : i32
    %c0_i32_1 = arith.constant 0 : i32
    return %arg0, %c0_i32, %c0_i32_0 : i32, i32, i32
  }
  func.func @transform_1(%arg0: i32) -> (i32, i32, i32) {
    %c0_i32 = arith.constant 0 : i32
    %c0_i32_0 = arith.constant 0 : i32
    %c0_i32_1 = arith.constant 0 : i32
    %c0_i32_2 = arith.constant 0 : i32
    return %c0_i32, %c0_i32_0, %c0_i32_1 : i32, i32, i32
  }
  func.func @transform_2(%arg0: i32) -> (i32, i32) {
    %c0_i32 = arith.constant 0 : i32
    %c0_i32_0 = arith.constant 0 : i32
    %c0_i32_1 = arith.constant 0 : i32
    return %c0_i32, %c0_i32_0 : i32, i32
  }
  func.func @transform_3(%arg0: i32) -> (i32, i32) {
    %c0_i32 = arith.constant 0 : i32
    %c0_i32_0 = arith.constant 0 : i32
    %c0_i32_1 = arith.constant 0 : i32
    return %c0_i32, %c0_i32_0 : i32, i32
  }
  func.func @transform_4(%arg0: i32) -> (i32, i32) {
    %c0_i32 = arith.constant 0 : i32
    %c0_i32_0 = arith.constant 0 : i32
    %c0_i32_1 = arith.constant 0 : i32
    return %c0_i32, %c0_i32_0 : i32, i32
  }
  func.func @transform_5(%arg0: i32) -> (i32, i32, i32) {
    %c0_i32 = arith.constant 0 : i32
    %c0_i32_0 = arith.constant 0 : i32
    %c0_i32_1 = arith.constant 0 : i32
    return %arg0, %c0_i32, %c0_i32_0 : i32, i32, i32
  }
  func.func @transform_6(%arg0: i32) -> (i32, i32, i32) {
    %c0_i32 = arith.constant 0 : i32
    %c0_i32_0 = arith.constant 0 : i32
    %c0_i32_1 = arith.constant 0 : i32
    return %arg0, %c0_i32, %c0_i32_0 : i32, i32, i32
  }
}

module attributes {stable_mosaic.version = 11 : i64} {
  func.func @_dncnn_layer_kernel(%arg0: i32, %arg1: memref<1x6x324xf32, #tpu.memory_space<vmem>>, %arg2: memref<9x8x6xf32, #tpu.memory_space<vmem>>, %arg3: memref<6x1xf32, #tpu.memory_space<vmem>>, %arg4: memref<6x1xf32, #tpu.memory_space<vmem>>, %arg5: memref<1x324xf32, #tpu.memory_space<vmem>>, %arg6: memref<1x3x324xf32, #tpu.memory_space<vmem>>, %arg7: memref<1x3x2xf32, #tpu.memory_space<vmem>>) attributes {dimension_semantics = [#tpu.dimension_semantics<parallel>], iteration_bounds = array<i64: 2>, scalar_prefetch = 0 : i64, scratch_operands = 0 : i64, tpu.core_type = #tpu.core_type<tc>, window_params = [{transform_indices = @transform_0, window_bounds = array<i64: 1, 6, 324>}, {pipeline_mode = #tpu.pipeline_mode<synchronous>, transform_indices = @transform_1, window_bounds = array<i64: 9, 8, 6>}, {pipeline_mode = #tpu.pipeline_mode<synchronous>, transform_indices = @transform_2, window_bounds = array<i64: 6, 1>}, {pipeline_mode = #tpu.pipeline_mode<synchronous>, transform_indices = @transform_3, window_bounds = array<i64: 6, 1>}, {pipeline_mode = #tpu.pipeline_mode<synchronous>, transform_indices = @transform_4, window_bounds = array<i64: 1, 324>}, {transform_indices = @transform_5, window_bounds = array<i64: 1, 3, 324>}, {transform_indices = @transform_6, window_bounds = array<i64: 1, 3, 2>}]} {
    %c0 = arith.constant 0 : index
    %c0_0 = arith.constant 0 : index
    %0 = vector.load %arg5[%c0, %c0_0] : memref<1x324xf32, #tpu.memory_space<vmem>>, vector<1x324xf32>
    %c0_1 = arith.constant 0 : index
    %c0_2 = arith.constant 0 : index
    %c0_3 = arith.constant 0 : index
    %1 = vector.load %arg1[%c0_1, %c0_2, %c0_3] : memref<1x6x324xf32, #tpu.memory_space<vmem>>, vector<1x6x324xf32>
    %2 = vector.shape_cast %1 : vector<1x6x324xf32> to vector<6x324xf32>
    %c0_4 = arith.constant 0 : index
    %c0_5 = arith.constant 0 : index
    %3 = vector.load %arg3[%c0_4, %c0_5] : memref<6x1xf32, #tpu.memory_space<vmem>>, vector<6x1xf32>
    %4 = vector.broadcast %3 : vector<6x1xf32> to vector<6x324xf32>
    %5 = arith.mulf %2, %4 : vector<6x324xf32>
    %c0_6 = arith.constant 0 : index
    %c0_7 = arith.constant 0 : index
    %6 = vector.load %arg4[%c0_6, %c0_7] : memref<6x1xf32, #tpu.memory_space<vmem>>, vector<6x1xf32>
    %7 = vector.broadcast %6 : vector<6x1xf32> to vector<6x324xf32>
    %8 = arith.addf %5, %7 : vector<6x324xf32>
    %cst = arith.constant 0.000000e+00 : f32
    %9 = vector.broadcast %cst : f32 to vector<6x324xf32>
    %10 = arith.maximumf %8, %9 : vector<6x324xf32>
    %11 = vector.broadcast %0 : vector<1x324xf32> to vector<6x324xf32>
    %12 = arith.mulf %10, %11 : vector<6x324xf32>
    %13 = vector.extract_strided_slice %12 {offsets = [0, 323], sizes = [6, 1], strides = [1, 1]} : vector<6x324xf32> to vector<6x1xf32>
    %14 = vector.extract_strided_slice %12 {offsets = [0, 0], sizes = [6, 323], strides = [1, 1]} : vector<6x324xf32> to vector<6x323xf32>
    %15 = tpu.concatenate %13, %14 in 1 : vector<6x1xf32>, vector<6x323xf32> -> vector<6x324xf32>
    %16 = vector.extract_strided_slice %12 {offsets = [0, 1], sizes = [6, 323], strides = [1, 1]} : vector<6x324xf32> to vector<6x323xf32>
    %17 = vector.extract_strided_slice %12 {offsets = [0, 0], sizes = [6, 1], strides = [1, 1]} : vector<6x324xf32> to vector<6x1xf32>
    %18 = tpu.concatenate %16, %17 in 1 : vector<6x323xf32>, vector<6x1xf32> -> vector<6x324xf32>
    %cst_8 = arith.constant 0.000000e+00 : f32
    %19 = vector.broadcast %cst_8 : f32 to vector<8x324xf32>
    %cst_9 = arith.constant 0.000000e+00 : f32
    %20 = vector.broadcast %cst_9 : f32 to vector<8x324xf32>
    %c0_10 = arith.constant 0 : index
    %c0_11 = arith.constant 0 : index
    %c0_12 = arith.constant 0 : index
    %21 = vector.load %arg2[%c0_10, %c0_11, %c0_12] : memref<9x8x6xf32, #tpu.memory_space<vmem>>, vector<1x8x6xf32>
    %22 = vector.shape_cast %21 : vector<1x8x6xf32> to vector<8x6xf32>
    %cst_13 = arith.constant dense<0.000000e+00> : vector<8x324xf32>
    %23 = tpu.matmul %22, %15, %cst_13 {dimension_numbers = #tpu.dot_dimension_numbers<[1], [0], [0], [1], [0, 0, 1, 1], [], []>} : vector<8x6xf32>, vector<6x324xf32>, vector<8x324xf32> -> vector<8x324xf32>
    %24 = arith.addf %20, %23 : vector<8x324xf32>
    %c1 = arith.constant 1 : index
    %c0_14 = arith.constant 0 : index
    %c0_15 = arith.constant 0 : index
    %25 = vector.load %arg2[%c1, %c0_14, %c0_15] : memref<9x8x6xf32, #tpu.memory_space<vmem>>, vector<1x8x6xf32>
    %26 = vector.shape_cast %25 : vector<1x8x6xf32> to vector<8x6xf32>
    %cst_16 = arith.constant dense<0.000000e+00> : vector<8x324xf32>
    %27 = tpu.matmul %26, %12, %cst_16 {dimension_numbers = #tpu.dot_dimension_numbers<[1], [0], [0], [1], [0, 0, 1, 1], [], []>} : vector<8x6xf32>, vector<6x324xf32>, vector<8x324xf32> -> vector<8x324xf32>
    %28 = arith.addf %24, %27 : vector<8x324xf32>
    %c2 = arith.constant 2 : index
    %c0_17 = arith.constant 0 : index
    %c0_18 = arith.constant 0 : index
    %29 = vector.load %arg2[%c2, %c0_17, %c0_18] : memref<9x8x6xf32, #tpu.memory_space<vmem>>, vector<1x8x6xf32>
    %30 = vector.shape_cast %29 : vector<1x8x6xf32> to vector<8x6xf32>
    %cst_19 = arith.constant dense<0.000000e+00> : vector<8x324xf32>
    %31 = tpu.matmul %30, %18, %cst_19 {dimension_numbers = #tpu.dot_dimension_numbers<[1], [0], [0], [1], [0, 0, 1, 1], [], []>} : vector<8x6xf32>, vector<6x324xf32>, vector<8x324xf32> -> vector<8x324xf32>
    %32 = arith.addf %28, %31 : vector<8x324xf32>
    %33 = vector.extract_strided_slice %32 {offsets = [0, 306], sizes = [8, 18], strides = [1, 1]} : vector<8x324xf32> to vector<8x18xf32>
    %34 = vector.extract_strided_slice %32 {offsets = [0, 0], sizes = [8, 306], strides = [1, 1]} : vector<8x324xf32> to vector<8x306xf32>
    %35 = tpu.concatenate %33, %34 in 1 : vector<8x18xf32>, vector<8x306xf32> -> vector<8x324xf32>
    %36 = arith.addf %19, %35 : vector<8x324xf32>
    %cst_20 = arith.constant 0.000000e+00 : f32
    %37 = vector.broadcast %cst_20 : f32 to vector<8x324xf32>
    %c3 = arith.constant 3 : index
    %c0_21 = arith.constant 0 : index
    %c0_22 = arith.constant 0 : index
    %38 = vector.load %arg2[%c3, %c0_21, %c0_22] : memref<9x8x6xf32, #tpu.memory_space<vmem>>, vector<1x8x6xf32>
    %39 = vector.shape_cast %38 : vector<1x8x6xf32> to vector<8x6xf32>
    %cst_23 = arith.constant dense<0.000000e+00> : vector<8x324xf32>
    %40 = tpu.matmul %39, %15, %cst_23 {dimension_numbers = #tpu.dot_dimension_numbers<[1], [0], [0], [1], [0, 0, 1, 1], [], []>} : vector<8x6xf32>, vector<6x324xf32>, vector<8x324xf32> -> vector<8x324xf32>
    %41 = arith.addf %37, %40 : vector<8x324xf32>
    %c4 = arith.constant 4 : index
    %c0_24 = arith.constant 0 : index
    %c0_25 = arith.constant 0 : index
    %42 = vector.load %arg2[%c4, %c0_24, %c0_25] : memref<9x8x6xf32, #tpu.memory_space<vmem>>, vector<1x8x6xf32>
    %43 = vector.shape_cast %42 : vector<1x8x6xf32> to vector<8x6xf32>
    %cst_26 = arith.constant dense<0.000000e+00> : vector<8x324xf32>
    %44 = tpu.matmul %43, %12, %cst_26 {dimension_numbers = #tpu.dot_dimension_numbers<[1], [0], [0], [1], [0, 0, 1, 1], [], []>} : vector<8x6xf32>, vector<6x324xf32>, vector<8x324xf32> -> vector<8x324xf32>
    %45 = arith.addf %41, %44 : vector<8x324xf32>
    %c5 = arith.constant 5 : index
    %c0_27 = arith.constant 0 : index
    %c0_28 = arith.constant 0 : index
    %46 = vector.load %arg2[%c5, %c0_27, %c0_28] : memref<9x8x6xf32, #tpu.memory_space<vmem>>, vector<1x8x6xf32>
    %47 = vector.shape_cast %46 : vector<1x8x6xf32> to vector<8x6xf32>
    %cst_29 = arith.constant dense<0.000000e+00> : vector<8x324xf32>
    %48 = tpu.matmul %47, %18, %cst_29 {dimension_numbers = #tpu.dot_dimension_numbers<[1], [0], [0], [1], [0, 0, 1, 1], [], []>} : vector<8x6xf32>, vector<6x324xf32>, vector<8x324xf32> -> vector<8x324xf32>
    %49 = arith.addf %45, %48 : vector<8x324xf32>
    %50 = arith.addf %36, %49 : vector<8x324xf32>
    %cst_30 = arith.constant 0.000000e+00 : f32
    %51 = vector.broadcast %cst_30 : f32 to vector<8x324xf32>
    %c6 = arith.constant 6 : index
    %c0_31 = arith.constant 0 : index
    %c0_32 = arith.constant 0 : index
    %52 = vector.load %arg2[%c6, %c0_31, %c0_32] : memref<9x8x6xf32, #tpu.memory_space<vmem>>, vector<1x8x6xf32>
    %53 = vector.shape_cast %52 : vector<1x8x6xf32> to vector<8x6xf32>
    %cst_33 = arith.constant dense<0.000000e+00> : vector<8x324xf32>
    %54 = tpu.matmul %53, %15, %cst_33 {dimension_numbers = #tpu.dot_dimension_numbers<[1], [0], [0], [1], [0, 0, 1, 1], [], []>} : vector<8x6xf32>, vector<6x324xf32>, vector<8x324xf32> -> vector<8x324xf32>
    %55 = arith.addf %51, %54 : vector<8x324xf32>
    %c7 = arith.constant 7 : index
    %c0_34 = arith.constant 0 : index
    %c0_35 = arith.constant 0 : index
    %56 = vector.load %arg2[%c7, %c0_34, %c0_35] : memref<9x8x6xf32, #tpu.memory_space<vmem>>, vector<1x8x6xf32>
    %57 = vector.shape_cast %56 : vector<1x8x6xf32> to vector<8x6xf32>
    %cst_36 = arith.constant dense<0.000000e+00> : vector<8x324xf32>
    %58 = tpu.matmul %57, %12, %cst_36 {dimension_numbers = #tpu.dot_dimension_numbers<[1], [0], [0], [1], [0, 0, 1, 1], [], []>} : vector<8x6xf32>, vector<6x324xf32>, vector<8x324xf32> -> vector<8x324xf32>
    %59 = arith.addf %55, %58 : vector<8x324xf32>
    %c8 = arith.constant 8 : index
    %c0_37 = arith.constant 0 : index
    %c0_38 = arith.constant 0 : index
    %60 = vector.load %arg2[%c8, %c0_37, %c0_38] : memref<9x8x6xf32, #tpu.memory_space<vmem>>, vector<1x8x6xf32>
    %61 = vector.shape_cast %60 : vector<1x8x6xf32> to vector<8x6xf32>
    %cst_39 = arith.constant dense<0.000000e+00> : vector<8x324xf32>
    %62 = tpu.matmul %61, %18, %cst_39 {dimension_numbers = #tpu.dot_dimension_numbers<[1], [0], [0], [1], [0, 0, 1, 1], [], []>} : vector<8x6xf32>, vector<6x324xf32>, vector<8x324xf32> -> vector<8x324xf32>
    %63 = arith.addf %59, %62 : vector<8x324xf32>
    %64 = vector.extract_strided_slice %63 {offsets = [0, 18], sizes = [8, 306], strides = [1, 1]} : vector<8x324xf32> to vector<8x306xf32>
    %65 = vector.extract_strided_slice %63 {offsets = [0, 0], sizes = [8, 18], strides = [1, 1]} : vector<8x324xf32> to vector<8x18xf32>
    %66 = tpu.concatenate %64, %65 in 1 : vector<8x306xf32>, vector<8x18xf32> -> vector<8x324xf32>
    %67 = arith.addf %50, %66 : vector<8x324xf32>
    %68 = vector.broadcast %0 : vector<1x324xf32> to vector<8x324xf32>
    %69 = arith.mulf %67, %68 : vector<8x324xf32>
    %70 = vector.extract_strided_slice %69 {offsets = [0, 0], sizes = [3, 324], strides = [1, 1]} : vector<8x324xf32> to vector<3x324xf32>
    %cst_40 = arith.constant dense<0.000000e+00> : vector<3xf32>
    %71 = vector.multi_reduction <add>, %70, %cst_40 [1] : vector<3x324xf32> to vector<3xf32>
    %72 = vector.shape_cast %71 : vector<3xf32> to vector<3x1xf32>
    %73 = arith.mulf %70, %70 : vector<3x324xf32>
    %cst_41 = arith.constant dense<0.000000e+00> : vector<3xf32>
    %74 = vector.multi_reduction <add>, %73, %cst_41 [1] : vector<3x324xf32> to vector<3xf32>
    %75 = vector.shape_cast %74 : vector<3xf32> to vector<3x1xf32>
    %76 = tpu.iota {dimensions = array<i32: 1>} : vector<3x2xi32>
    %c0_i32 = arith.constant 0 : i32
    %77 = vector.broadcast %c0_i32 : i32 to vector<3x2xi32>
    %78 = arith.cmpi eq, %76, %77 : vector<3x2xi32>
    %79 = vector.shape_cast %72 : vector<3x1xf32> to vector<3x1xf32>
    %80 = vector.broadcast %79 : vector<3x1xf32> to vector<3x2xf32>
    %81 = vector.shape_cast %75 : vector<3x1xf32> to vector<3x1xf32>
    %82 = vector.broadcast %81 : vector<3x1xf32> to vector<3x2xf32>
    %83 = arith.select %78, %80, %82 : vector<3x2xi1>, vector<3x2xf32>
    %c0_42 = arith.constant 0 : index
    %c0_43 = arith.constant 0 : index
    %c0_44 = arith.constant 0 : index
    %84 = vector.load %arg7[%c0_42, %c0_43, %c0_44] : memref<1x3x2xf32, #tpu.memory_space<vmem>>, vector<1x3x2xf32>
    %85 = vector.shape_cast %84 : vector<1x3x2xf32> to vector<3x2xf32>
    %86 = vector.shape_cast %83 : vector<3x2xf32> to vector<1x3x2xf32>
    tpu.vector_store %arg7[%c0_42, %c0_43, %c0_44], %86 {strides = array<i32>} : memref<1x3x2xf32, #tpu.memory_space<vmem>>, vector<1x3x2xf32>,
    %c0_45 = arith.constant 0 : index
    %c0_46 = arith.constant 0 : index
    %c0_47 = arith.constant 0 : index
    %87 = vector.load %arg6[%c0_45, %c0_46, %c0_47] : memref<1x3x324xf32, #tpu.memory_space<vmem>>, vector<1x3x324xf32>
    %88 = vector.shape_cast %87 : vector<1x3x324xf32> to vector<3x324xf32>
    %89 = vector.shape_cast %70 : vector<3x324xf32> to vector<1x3x324xf32>
    tpu.vector_store %arg6[%c0_45, %c0_46, %c0_47], %89 {strides = array<i32>} : memref<1x3x324xf32, #tpu.memory_space<vmem>>, vector<1x3x324xf32>,
    return
  }
  func.func @transform_0(%arg0: i32) -> (i32, i32, i32) {
    %c0_i32 = arith.constant 0 : i32
    %c0_i32_0 = arith.constant 0 : i32
    %c0_i32_1 = arith.constant 0 : i32
    return %arg0, %c0_i32, %c0_i32_0 : i32, i32, i32
  }
  func.func @transform_1(%arg0: i32) -> (i32, i32, i32) {
    %c0_i32 = arith.constant 0 : i32
    %c0_i32_0 = arith.constant 0 : i32
    %c0_i32_1 = arith.constant 0 : i32
    %c0_i32_2 = arith.constant 0 : i32
    return %c0_i32, %c0_i32_0, %c0_i32_1 : i32, i32, i32
  }
  func.func @transform_2(%arg0: i32) -> (i32, i32) {
    %c0_i32 = arith.constant 0 : i32
    %c0_i32_0 = arith.constant 0 : i32
    %c0_i32_1 = arith.constant 0 : i32
    return %c0_i32, %c0_i32_0 : i32, i32
  }
  func.func @transform_3(%arg0: i32) -> (i32, i32) {
    %c0_i32 = arith.constant 0 : i32
    %c0_i32_0 = arith.constant 0 : i32
    %c0_i32_1 = arith.constant 0 : i32
    return %c0_i32, %c0_i32_0 : i32, i32
  }
  func.func @transform_4(%arg0: i32) -> (i32, i32) {
    %c0_i32 = arith.constant 0 : i32
    %c0_i32_0 = arith.constant 0 : i32
    %c0_i32_1 = arith.constant 0 : i32
    return %c0_i32, %c0_i32_0 : i32, i32
  }
  func.func @transform_5(%arg0: i32) -> (i32, i32, i32) {
    %c0_i32 = arith.constant 0 : i32
    %c0_i32_0 = arith.constant 0 : i32
    %c0_i32_1 = arith.constant 0 : i32
    return %arg0, %c0_i32, %c0_i32_0 : i32, i32, i32
  }
  func.func @transform_6(%arg0: i32) -> (i32, i32, i32) {
    %c0_i32 = arith.constant 0 : i32
    %c0_i32_0 = arith.constant 0 : i32
    %c0_i32_1 = arith.constant 0 : i32
    return %arg0, %c0_i32, %c0_i32_0 : i32, i32, i32
  }
}

</mosaic_0001>

<llo_original>
// kernel: dncnn_pallas.10
$region0: #{dncnn_pallas.10}
  #allocation0 [shape = 'u32[]', space=smem, size = 0x4, offset = 0x4, fixed_abs, tag = 'smem constant byte address 0x4 - core index']
  #allocation1 [shape = 'u32[144,128]{1,0:T(1,128)}', space=vmem, size = 0x12000, scoped, tag = 'internal scratch']
  %s0 = inlined_call_operand.vmem [shape: f32[2,3,324], index: 0, kind: input, shape index: {}]
  %s1 = inlined_call_operand.vmem [shape: f32[9,8,3], index: 1, kind: input, shape index: {}]
  %s2 = inlined_call_operand.vmem [shape: f32[3,1], index: 2, kind: input, shape index: {}]
  %s3 = inlined_call_operand.vmem [shape: f32[3,1], index: 3, kind: input, shape index: {}]
  %s4 = inlined_call_operand.vmem [shape: f32[1,324], index: 4, kind: input, shape index: {}]
  %s5 = inlined_call_operand.vmem [shape: f32[2,6,324], index: 5, kind: output, shape index: {0}]
  %s6 = inlined_call_operand.hbm [shape: f32[2,6,2], index: 6, kind: output, shape index: {1}]
  %7 = xla_tuple %s5, %s6
  %s8 = sld [smem:[#allocation0]]
  $region61: #{dncnn_pallas.10} parent=0
    _
  %s10 = ssub.s32 1, %s8
  %s11 = scalar_select 0, %s10, %s8
  $region1: #{dncnn_pallas.10} parent=0
    #allocation2 [shape = 'u8[8192]{0}', space=vmem, size = 0x2000, scoped, tag = 'output window, operand 1']
    #allocation3 [shape = 's32[2]{0}', space=sflag, size = 0x8, scoped, tag = 'scoped memory for dncnn_pallas.10']
    %12 = vsyncpa [#allocation3], 0
    %s13 = scalar_lea.sflag [#allocation3], 1
    %14 = vsyncpa %s13, 0
    loop: start=0, step=1, limit=4
    $region2: #{dncnn_pallas.10} parent=1 // loop_pre_header
      _
    $region3: #{dncnn_pallas.10} parent=1 // loop_header
      %s16 = sphi 0, %s20
      %p17 = scmp.ge.s32.totalorder %s16, 4
      %s26 = sphi 0, %s28
      %s29 = sphi 0, %s26
      %s30 = sphi 0, %s29
      %s46 = sphi 0, %s30
      %s50 = sphi 0, %s50
      %s52 = sphi 0, %s50
      %s53 = sphi 0, %s52
      %s67 = sphi 0, %s53
      %s71 = sphi 0, %s71
      %s73 = sphi 0, %s71
      %s74 = sphi 0, %s73
      %s88 = sphi 0, %s74
      %s92 = sphi 0, %s92
      %s94 = sphi 0, %s92
      %s95 = sphi 0, %s94
      %s109 = sphi 0, %s95
      %s113 = sphi 0, %s113
      %s115 = sphi 0, %s113
      %s116 = sphi 0, %s115
      %s130 = sphi 0, %s116
      %s136 = sphi 0, %s138
      %s139 = sphi 0, %s136
      %s140 = sphi 0, %s139
      %s156 = sphi 0, %s140
      %s162 = sphi 0, %s164
      %s165 = sphi 0, %s162
      %s166 = sphi 0, %s165
      %s182 = sphi 0, %s166
    $region4: #{dncnn_pallas.10} parent=1 // loop_header_branch
      %19 = sbr.rel (%p17) target = $region8
    $region5: #{dncnn_pallas.10} parent=1 // loop_body
      %s21 = ssub.s32 %s16, 1
      %s22 = ssub.s32 %s16, 2
      %s23 = sadd.s32 %s16, 1
      %s24 = ssub.s32 %s16, %s23
      %p25 = scmp.eq.s32.totalorder %s24, 0
      %s27 = sadd.s32 %s26, 1
      %s28 = scalar_select %p25, %s26, %s27
      %p31 = pneg %p25
      %p32 = scmp.eq.s32.totalorder %s16, 1
      %p33 = por %p31, %p32
      %p34 = scmp.ne.s32.totalorder %s26, %s29
      %p35 = scmp.eq.s32.totalorder %s16, 0
      %p36 = por %p34, %p35
      %p37 = scmp.ne.s32.totalorder %s26, %s29
      %p38 = scmp.eq.s32.totalorder %s21, 1
      %p39 = por %p37, %p38
      %p40 = scmp.ne.s32.totalorder %s29, %s30
      %p41 = scmp.eq.s32.totalorder %s21, 0
      %p42 = por %p40, %p41
      %p43 = scmp.ne.s32.totalorder %s29, %s30
      %p44 = scmp.eq.s32.totalorder %s22, 1
      %p45 = por %p43, %p44
      %p47 = scmp.ne.s32.totalorder %s30, %s46
      %p48 = scmp.eq.s32.totalorder %s22, 0
      %p49 = por %p47, %p48
      %s51 = sadd.s32 %s50, 1
      %p54 = scmp.eq.s32.totalorder %s16, 1
      %p55 = scmp.ne.s32.totalorder %s50, %s52
      %p56 = scmp.eq.s32.totalorder %s16, 0
      %p57 = por %p55, %p56
      %p58 = scmp.ne.s32.totalorder %s50, %s52
      %p59 = scmp.eq.s32.totalorder %s21, 1
      %p60 = por %p58, %p59
      %p61 = scmp.ne.s32.totalorder %s52, %s53
      %p62 = scmp.eq.s32.totalorder %s21, 0
      %p63 = por %p61, %p62
      %p64 = scmp.ne.s32.totalorder %s52, %s53
      %p65 = scmp.eq.s32.totalorder %s22, 1
      %p66 = por %p64, %p65
      %p68 = scmp.ne.s32.totalorder %s53, %s67
      %p69 = scmp.eq.s32.totalorder %s22, 0
      %p70 = por %p68, %p69
      %s72 = sadd.s32 %s71, 1
      %p75 = scmp.eq.s32.totalorder %s16, 1
      %p76 = scmp.ne.s32.totalorder %s71, %s73
      %p77 = scmp.eq.s32.totalorder %s16, 0
      %p78 = por %p76, %p77
      %p79 = scmp.ne.s32.totalorder %s71, %s73
      %p80 = scmp.eq.s32.totalorder %s21, 1
      %p81 = por %p79, %p80
      %p82 = scmp.ne.s32.totalorder %s73, %s74
      %p83 = scmp.eq.s32.totalorder %s21, 0
      %p84 = por %p82, %p83
      %p85 = scmp.ne.s32.totalorder %s73, %s74
      %p86 = scmp.eq.s32.totalorder %s22, 1
      %p87 = por %p85, %p86
      %p89 = scmp.ne.s32.totalorder %s74, %s88
      %p90 = scmp.eq.s32.totalorder %s22, 0
      %p91 = por %p89, %p90
      %s93 = sadd.s32 %s92, 1
      %p96 = scmp.eq.s32.totalorder %s16, 1
      %p97 = scmp.ne.s32.totalorder %s92, %s94
      %p98 = scmp.eq.s32.totalorder %s16, 0
      %p99 = por %p97, %p98
      %p100 = scmp.ne.s32.totalorder %s92, %s94
      %p101 = scmp.eq.s32.totalorder %s21, 1
      %p102 = por %p100, %p101
      %p103 = scmp.ne.s32.totalorder %s94, %s95
      %p104 = scmp.eq.s32.totalorder %s21, 0
      %p105 = por %p103, %p104
      %p106 = scmp.ne.s32.totalorder %s94, %s95
      %p107 = scmp.eq.s32.totalorder %s22, 1
      %p108 = por %p106, %p107
      %p110 = scmp.ne.s32.totalorder %s95, %s109
      %p111 = scmp.eq.s32.totalorder %s22, 0
      %p112 = por %p110, %p111
      %s114 = sadd.s32 %s113, 1
      %p117 = scmp.eq.s32.totalorder %s16, 1
      %p118 = scmp.ne.s32.totalorder %s113, %s115
      %p119 = scmp.eq.s32.totalorder %s16, 0
      %p120 = por %p118, %p119
      %p121 = scmp.ne.s32.totalorder %s113, %s115
      %p122 = scmp.eq.s32.totalorder %s21, 1
      %p123 = por %p121, %p122
      %p124 = scmp.ne.s32.totalorder %s115, %s116
      %p125 = scmp.eq.s32.totalorder %s21, 0
      %p126 = por %p124, %p125
      %p127 = scmp.ne.s32.totalorder %s115, %s116
      %p128 = scmp.eq.s32.totalorder %s22, 1
      %p129 = por %p127, %p128
      %p131 = scmp.ne.s32.totalorder %s116, %s130
      %p132 = scmp.eq.s32.totalorder %s22, 0
      %p133 = por %p131, %p132
      %s134 = ssub.s32 %s16, %s23
      %p135 = scmp.eq.s32.totalorder %s134, 0
      %s137 = sadd.s32 %s136, 1
      %s138 = scalar_select %p135, %s136, %s137
      %p141 = pneg %p135
      %p142 = scmp.eq.s32.totalorder %s16, 1
      %p143 = por %p141, %p142
      %p144 = scmp.ne.s32.totalorder %s136, %s139
      %p145 = scmp.eq.s32.totalorder %s16, 0
      %p146 = por %p144, %p145
      %p147 = scmp.ne.s32.totalorder %s136, %s139
      %p148 = scmp.eq.s32.totalorder %s21, 1
      %p149 = por %p147, %p148
      %p150 = scmp.ne.s32.totalorder %s139, %s140
      %p151 = scmp.eq.s32.totalorder %s21, 0
      %p152 = por %p150, %p151
      %p153 = scmp.ne.s32.totalorder %s139, %s140
      %p154 = scmp.eq.s32.totalorder %s22, 1
      %p155 = por %p153, %p154
      %p157 = scmp.ne.s32.totalorder %s140, %s156
      %p158 = scmp.eq.s32.totalorder %s22, 0
      %p159 = por %p157, %p158
      %s160 = ssub.s32 %s16, %s23
      %p161 = scmp.eq.s32.totalorder %s160, 0
      %s163 = sadd.s32 %s162, 1
      %s164 = scalar_select %p161, %s162, %s163
      %p167 = pneg %p161
      %p168 = scmp.eq.s32.totalorder %s16, 1
      %p169 = por %p167, %p168
      %p170 = scmp.ne.s32.totalorder %s162, %s165
      %p171 = scmp.eq.s32.totalorder %s16, 0
      %p172 = por %p170, %p171
      %p173 = scmp.ne.s32.totalorder %s162, %s165
      %p174 = scmp.eq.s32.totalorder %s21, 1
      %p175 = por %p173, %p174
      %p176 = scmp.ne.s32.totalorder %s165, %s166
      %p177 = scmp.eq.s32.totalorder %s21, 0
      %p178 = por %p176, %p177
      %p179 = scmp.ne.s32.totalorder %s165, %s166
      %p180 = scmp.eq.s32.totalorder %s22, 1
      %p181 = por %p179, %p180
      %p183 = scmp.ne.s32.totalorder %s166, %s182
      %p184 = scmp.eq.s32.totalorder %s22, 0
      %p185 = por %p183, %p184
      %p186 = scmp.le.s32.totalorder 1, %s16
      %p187 = scmp.lt.s32.totalorder %s16, 3
      %p188 = pnand %p186, %p187
      %p189 = pneg %p188
      // Predicated region
      $region9: #{dncnn_pallas.10} parent=5 // pred_check
        _
      $region10: #{dncnn_pallas.10} parent=5 // pred_check_branch
        %191 = sbr.rel (%p188) target = $region12
      $region11: #{dncnn_pallas.10} parent=5 // pred_region
        %s192 = ssub.s32 %s16, 1
        // Predicated region
        $region13: #{dncnn_pallas.10} parent=11 // pred_check
          %p193 = pneg %p63
        $region14: #{dncnn_pallas.10} parent=11 // pred_check_branch
          %195 = sbr.rel (%p193) target = $region16
        $region15: #{dncnn_pallas.10} parent=11 // pred_region
          _
        $region16: #{dncnn_pallas.10} parent=11 // pred_fallthru
          _
        // Predicated region
        $region17: #{dncnn_pallas.10} parent=11 // pred_check
          %p196 = pneg %p84
        $region18: #{dncnn_pallas.10} parent=11 // pred_check_branch
          %198 = sbr.rel (%p196) target = $region20
        $region19: #{dncnn_pallas.10} parent=11 // pred_region
          _
        $region20: #{dncnn_pallas.10} parent=11 // pred_fallthru
          _
        // Predicated region
        $region21: #{dncnn_pallas.10} parent=11 // pred_check
          %p199 = pneg %p105
        $region22: #{dncnn_pallas.10} parent=11 // pred_check_branch
          %201 = sbr.rel (%p199) target = $region24
        $region23: #{dncnn_pallas.10} parent=11 // pred_region
          _
        $region24: #{dncnn_pallas.10} parent=11 // pred_fallthru
          _
        // Predicated region
        $region25: #{dncnn_pallas.10} parent=11 // pred_check
          %p202 = pneg %p126
        $region26: #{dncnn_pallas.10} parent=11 // pred_check_branch
          %204 = sbr.rel (%p202) target = $region28
        $region27: #{dncnn_pallas.10} parent=11 // pred_region
          _
        $region28: #{dncnn_pallas.10} parent=11 // pred_fallthru
          _
      $region12: #{dncnn_pallas.10} parent=5 // pred_fallthru
        _
      %p205 = scmp.lt.s32.totalorder %s16, 2
      // Predicated region
      $region29: #{dncnn_pallas.10} parent=5 // pred_check
        %p206 = pneg %p205
      $region30: #{dncnn_pallas.10} parent=5 // pred_check_branch
        %208 = sbr.rel (%p206) target = $region32
      $region31: #{dncnn_pallas.10} parent=5 // pred_region
        // Predicated region
        $region33: #{dncnn_pallas.10} parent=31 // pred_check
          %p209 = pneg %p36
        $region34: #{dncnn_pallas.10} parent=31 // pred_check_branch
          %211 = sbr.rel (%p209) target = $region36
        $region35: #{dncnn_pallas.10} parent=31 // pred_region
          %p212 = scmp.lt.s32.totalorder %s16, 1
          %s213 = scalar_select %p212, %s16, 1
          %s214 = smul.addr %s213, 3
          %s215 = smul.addr %s214, 4
          %s216 = scalar_lea.vmem %s0, %s215
        $region36: #{dncnn_pallas.10} parent=31 // pred_fallthru
          _
      $region32: #{dncnn_pallas.10} parent=5 // pred_fallthru
        _
      %p217 = scmp.le.s32.totalorder 1, %s16
      %p218 = scmp.lt.s32.totalorder %s16, 3
      %p219 = pnand %p217, %p218
      %p220 = pneg %p219
      // Predicated region
      $region37: #{dncnn_pallas.10} parent=5 // pred_check
        _
      $region38: #{dncnn_pallas.10} parent=5 // pred_check_branch
        %222 = sbr.rel (%p219) target = $region40
      $region39: #{dncnn_pallas.10} parent=5 // pred_region
        %s223 = ssub.s32 %s16, 1
        %p224 = scmp.lt.s32.totalorder %s21, 1
        %s225 = scalar_select %p224, %s21, 1
        %s226 = smul.addr %s225, 3
        %s227 = smul.addr %s226, 4
        %s228 = scalar_lea.vmem %s0, %s227
        %p229 = pneg %p42
        %p230 = pneg %p39
        %p231 = pneg %p63
        %p232 = pneg %p60
        %p233 = pneg %p84
        %p234 = pneg %p81
        %p235 = pneg %p105
        %p236 = pneg %p102
        %p237 = pneg %p126
        %p238 = pneg %p123
        %p239 = pneg %p152
        %p240 = pneg %p149
        %p241 = scmp.lt.s32.totalorder %s21, 1
        %s242 = scalar_select %p241, %s21, 1
        %s243 = smul.addr %s242, 3
        %s244 = smul.addr %s243, 8
        %s245 = scalar_lea.vmem %s5, %s244
        %p246 = pneg %p178
        %p247 = pneg %p175
        %s248 = sand.u32 %s165, 1
        %s249 = scalar_lea.sflag [#allocation3], %s248
        %s250 = sand.u32 %s165, 1
        %s251 = smul.addr %s250, 8
        %s252 = scalar_lea.vmem [#allocation2], %s251
        %p253 = scmp.lt.s32.totalorder %s21, 1
        %s254 = scalar_select %p253, %s21, 1
        %s255 = smul.addr %s254, 3
        %s256 = smul.addr %s255, 4
        %s257 = scalar_lea.vmem %s0, %s256
        %p258 = scmp.lt.s32.totalorder %s21, 1
        %s259 = scalar_select %p258, %s21, 1
        %s260 = smul.addr %s259, 3
        %s261 = smul.addr %s260, 8
        %s262 = scalar_lea.vmem %s5, %s261
        %v263 = vld [vmem:[%s4] sm:$0x7]
        %v264 = vld [vmem:[%s257] sm:$0x77]
        %v265 = vld [vmem:[%s257 + $0x8] sm:$0x7]
        %v266 = vld [vmem:[%s2] sm:$0x7]
        %268 = vset.pattern.permute.xlu0 0
        %269 = vperm.xlu0 %268, %v266
        %v270 = vpop.permute.xlu0 %269
        %v272 = vunpack.c.l.s4 839922192
        %v273 = vunpack.c.0.s8 %v272
        %v274 = vlaneseq
        %v275 = vshrl.u32 %v274, 7
        %v276 = vsub.s32 %v273, %v275
        %v277 = vrot.slane %v270, %v276
        %v279 = vmul.f32 %v264, %v277
        %v280 = vmul.f32 %v265, %v277
        %v281 = vld [vmem:[%s3] sm:$0x7]
        %283 = vset.pattern.permute.xlu0 0
        %284 = vperm.xlu0 %283, %v281
        %v285 = vpop.permute.xlu0 %284
        %v287 = vunpack.c.l.s4 839922192
        %v288 = vunpack.c.0.s8 %v287
        %v289 = vlaneseq
        %v290 = vshrl.u32 %v289, 7
        %v291 = vsub.s32 %v288, %v290
        %v292 = vrot.slane %v285, %v291
        %v294 = vadd.f32 %v279, %v292
        %v295 = vadd.f32 %v280, %v292
        %v297 = vlaneseq
        %v298 = vshrl.u32 %v297, 7
        %v299 = vsub.s32 0, %v298
        %v300 = vrot.slane %v263, %v299
        %v301 = vlaneseq
        %v302 = vshrl.u32 %v301, 7
        %v303 = vsub.s32 1, %v302
        %v304 = vrot.slane %v263, %v303
        %v305 = vlaneseq
        %v306 = vshrl.u32 %v305, 7
        %v307 = vsub.s32 2, %v306
        %v308 = vrot.slane %v263, %v307
        %v310 = vcombine.low %v300, %v304
        %v312 = vmul.f32 %v294, %v310
        %v313 = vmul.f32 %v295, %v308
        %315 = vrot.lane.b32.xlu0 %v313, 61
        %v316 = vpop.permute.xlu0 %315
        %v319 = vcombine.high %v312, %v312
        %320 = vrot.lane.b32.xlu0 %v312, 1
        %v321 = vpop.permute.xlu0 %320
        %322 = vrot.lane.b32.xlu0 %v319, 1
        %v323 = vpop.permute.xlu0 %322
        %324 = vrot.lane.b32.xlu0 %v313, 1
        %v325 = vpop.permute.xlu0 %324
        %vm326 = vcmask 7168
        %v327 = vsel %vm326, %v321, %v323
        %v328 = vsel %vm326, %v323, %v325
        %v330 = vsel %vm326, %v316, %v321
        %331 = vrot.lane.b32.xlu0 %v312, 127
        %v332 = vpop.permute.xlu0 %331
        %333 = vrot.lane.b32.xlu0 %v319, 127
        %v334 = vpop.permute.xlu0 %333
        %335 = vrot.lane.b32.xlu0 %v313, 127
        %v336 = vpop.permute.xlu0 %335
        %vm337 = vcmask 1039360
        %v338 = vsel %vm337, %v332, %v334
        %v339 = vsel %vm337, %v334, %v336
        %341 = vrot.lane.b32.xlu0 %v312, 67
        %v342 = vpop.permute.xlu0 %341
        %vm344 = vcmask 547840
        %v345 = vsel %vm344, %v336, %v342
        %v346 = vld [vmem:[%s1] sm:$0xff]
        %s347 = scalar_lea.vmem %s1, 8
        %v348 = vld [vmem:[%s347] sm:$0xff]
        %vm349 = vcmask 23552
        %v351 = vsel %vm349, %v348, 0
        %vm353 = vcmask 1042432
        %v354 = vsel %vm353, %v312, 0
        %v356 = vsel %vm353, %v319, 0
        %v358 = vsel %vm353, %v313, 0
        %360 = vmatprep.subr.mxu0 %v356
        %361 = vmatpush1.msra.mxu0 %v354
        %362 = vmatprep.subr.mxu0 0.0
        %363 = vmatpush1.msra.mxu0 0.0
        %364 = vmatprep.subr.mxu0 0.0
        %365 = vmatpush1.msra.mxu0 0.0
        %366 = vmatprep.subr.mxu0 0.0
        %367 = vmatpush1.msra.mxu0 0.0
        %368 = vmatprep.subr.mxu0 0.0
        %369 = vmatpush1.msra.mxu0 0.0
        %370 = vmatprep.subr.mxu0 0.0
        %371 = vmatpush1.msra.mxu0 0.0
        %372 = vmatprep.subr.mxu0 0.0
        %373 = vmatpush1.msra.mxu0 0.0
        %374 = vmatprep.subr.mxu0 0.0
        %375 = vmatpush1.msra.mxu0 0.0
        %376 = vmatprep.subr.mxu0 0.0
        %377 = vmatpush1.msra.mxu0 0.0
        %378 = vmatprep.subr.mxu0 0.0
        %379 = vmatpush1.msra.mxu0 0.0
        %380 = vmatprep.subr.mxu0 0.0
        %381 = vmatpush1.msra.mxu0 0.0
        %382 = vmatprep.subr.mxu0 0.0
        %383 = vmatpush1.msra.mxu0 0.0
        %384 = vmatprep.subr.mxu0 0.0
        %385 = vmatpush1.msra.mxu0 0.0
        %386 = vmatprep.subr.mxu0 0.0
        %387 = vmatpush1.msra.mxu0 0.0
        %388 = vmatprep.subr.mxu0 0.0
        %389 = vmatpush1.msra.mxu0 0.0
        %390 = vmatprep.subr.mxu0 0.0
        %391 = vmatpush1.msra.mxu0 0.0
        %392 = vmatprep.subr.mxu0 0.0
        %393 = vmatpush1.msra.mxu0 0.0
        %394 = vmatprep.subr.mxu0 0.0
        %395 = vmatpush1.msra.mxu0 0.0
        %396 = vmatprep.subr.mxu0 0.0
        %397 = vmatpush1.msra.mxu0 0.0
        %398 = vmatprep.subr.mxu0 0.0
        %399 = vmatpush1.msra.mxu0 0.0
        %400 = vmatprep.subr.mxu0 0.0
        %401 = vmatpush1.msra.mxu0 0.0
        %402 = vmatprep.subr.mxu0 0.0
        %403 = vmatpush1.msra.mxu0 0.0
        %404 = vmatprep.subr.mxu0 0.0
        %405 = vmatpush1.msra.mxu0 0.0
        %406 = vmatprep.subr.mxu0 0.0
        %407 = vmatpush1.msra.mxu0 0.0
        %408 = vmatprep.subr.mxu0 0.0
        %409 = vmatpush1.msra.mxu0 0.0
        %410 = vmatprep.subr.mxu0 0.0
        %411 = vmatpush1.msra.mxu0 0.0
        %412 = vmatprep.subr.mxu0 0.0
        %413 = vmatpush1.msra.mxu0 0.0
        %414 = vmatprep.subr.mxu0 0.0
        %415 = vmatpush1.msra.mxu0 0.0
        %416 = vmatprep.subr.mxu0 0.0
        %417 = vmatpush1.msra.mxu0 0.0
        %418 = vmatprep.subr.mxu0 0.0
        %419 = vmatpush1.msra.mxu0 0.0
        %420 = vmatprep.subr.mxu0 0.0
        %421 = vmatpush1.msra.mxu0 0.0
        %422 = vmatprep.subr.mxu0 0.0
        %423 = vmatpush1.msra.mxu0 0.0
        %424 = vmatprep.mubr.f32.mxu0 0.0
        %425 = vmatmul.mubr.f32.gmra.mrb[0].mxu0 %v351
        %v426 = vpop.f32.mrb[0].mxu0
        %v427 = vadd.f32 0.0, %v426
        %v428 = vpop.f32.mrb[0].mxu0
        %v429 = vadd.f32 0.0, %v428
        %430 = vdwg.mxu0
        %431 = vmatprep.subr.mxu0 0.0
        %432 = vmatpush1.msra.mxu0 %v358
        %433 = vmatprep.subr.mxu0 0.0
        %434 = vmatpush1.msra.mxu0 0.0
        %435 = vmatprep.subr.mxu0 0.0
        %436 = vmatpush1.msra.mxu0 0.0
        %437 = vmatprep.subr.mxu0 0.0
        %438 = vmatpush1.msra.mxu0 0.0
        %439 = vmatprep.subr.mxu0 0.0
        %440 = vmatpush1.msra.mxu0 0.0
        %441 = vmatprep.subr.mxu0 0.0
        %442 = vmatpush1.msra.mxu0 0.0
        %443 = vmatprep.subr.mxu0 0.0
        %444 = vmatpush1.msra.mxu0 0.0
        %445 = vmatprep.subr.mxu0 0.0
        %446 = vmatpush1.msra.mxu0 0.0
        %447 = vmatprep.subr.mxu0 0.0
        %448 = vmatpush1.msra.mxu0 0.0
        %449 = vmatprep.subr.mxu0 0.0
        %450 = vmatpush1.msra.mxu0 0.0
        %451 = vmatprep.subr.mxu0 0.0
        %452 = vmatpush1.msra.mxu0 0.0
        %453 = vmatprep.subr.mxu0 0.0
        %454 = vmatpush1.msra.mxu0 0.0
        %455 = vmatprep.subr.mxu0 0.0
        %456 = vmatpush1.msra.mxu0 0.0
        %457 = vmatprep.subr.mxu0 0.0
        %458 = vmatpush1.msra.mxu0 0.0
        %459 = vmatprep.subr.mxu0 0.0
        %460 = vmatpush1.msra.mxu0 0.0
        %461 = vmatprep.subr.mxu0 0.0
        %462 = vmatpush1.msra.mxu0 0.0
        %463 = vmatprep.subr.mxu0 0.0
        %464 = vmatpush1.msra.mxu0 0.0
        %465 = vmatprep.subr.mxu0 0.0
        %466 = vmatpush1.msra.mxu0 0.0
        %467 = vmatprep.subr.mxu0 0.0
        %468 = vmatpush1.msra.mxu0 0.0
        %469 = vmatprep.subr.mxu0 0.0
        %470 = vmatpush1.msra.mxu0 0.0
        %471 = vmatprep.subr.mxu0 0.0
        %472 = vmatpush1.msra.mxu0 0.0
        %473 = vmatprep.subr.mxu0 0.0
        %474 = vmatpush1.msra.mxu0 0.0
        %475 = vmatprep.subr.mxu0 0.0
        %476 = vmatpush1.msra.mxu0 0.0
        %477 = vmatprep.subr.mxu0 0.0
        %478 = vmatpush1.msra.mxu0 0.0
        %479 = vmatprep.subr.mxu0 0.0
        %480 = vmatpush1.msra.mxu0 0.0
        %481 = vmatprep.subr.mxu0 0.0
        %482 = vmatpush1.msra.mxu0 0.0
        %483 = vmatprep.subr.mxu0 0.0
        %484 = vmatpush1.msra.mxu0 0.0
        %485 = vmatprep.subr.mxu0 0.0
        %486 = vmatpush1.msra.mxu0 0.0
        %487 = vmatprep.subr.mxu0 0.0
        %488 = vmatpush1.msra.mxu0 0.0
        %489 = vmatprep.subr.mxu0 0.0
        %490 = vmatpush1.msra.mxu0 0.0
        %491 = vmatprep.subr.mxu0 0.0
        %492 = vmatpush1.msra.mxu0 0.0
        %493 = vmatprep.subr.mxu0 0.0
        %494 = vmatpush1.msra.mxu0 0.0
        %495 = vmatprep.mubr.f32.mxu0 0.0
        %496 = vmatmul.mubr.f32.gmra.mrb[0].mxu0 %v351
        %v497 = vpop.f32.mrb[0].mxu0
        %v498 = vadd.f32 0.0, %v497
        %v499 = vpop.f32.mrb[0].mxu0
        %500 = vdwg.mxu0
        %v502 = vsel %vm349, %v346, 0
        %v505 = vsel %vm353, %v330, 0
        %v507 = vsel %vm353, %v327, 0
        %v509 = vsel %vm353, %v328, 0
        %511 = vmatprep.subr.mxu0 %v507
        %512 = vmatpush1.msra.mxu0 %v505
        %513 = vmatprep.subr.mxu0 0.0
        %514 = vmatpush1.msra.mxu0 0.0
        %515 = vmatprep.subr.mxu0 0.0
        %516 = vmatpush1.msra.mxu0 0.0
        %517 = vmatprep.subr.mxu0 0.0
        %518 = vmatpush1.msra.mxu0 0.0
        %519 = vmatprep.subr.mxu0 0.0
        %520 = vmatpush1.msra.mxu0 0.0
        %521 = vmatprep.subr.mxu0 0.0
        %522 = vmatpush1.msra.mxu0 0.0
        %523 = vmatprep.subr.mxu0 0.0
        %524 = vmatpush1.msra.mxu0 0.0
        %525 = vmatprep.subr.mxu0 0.0
        %526 = vmatpush1.msra.mxu0 0.0
        %527 = vmatprep.subr.mxu0 0.0
        %528 = vmatpush1.msra.mxu0 0.0
        %529 = vmatprep.subr.mxu0 0.0
        %530 = vmatpush1.msra.mxu0 0.0
        %531 = vmatprep.subr.mxu0 0.0
        %532 = vmatpush1.msra.mxu0 0.0
        %533 = vmatprep.subr.mxu0 0.0
        %534 = vmatpush1.msra.mxu0 0.0
        %535 = vmatprep.subr.mxu0 0.0
        %536 = vmatpush1.msra.mxu0 0.0
        %537 = vmatprep.subr.mxu0 0.0
        %538 = vmatpush1.msra.mxu0 0.0
        %539 = vmatprep.subr.mxu0 0.0
        %540 = vmatpush1.msra.mxu0 0.0
        %541 = vmatprep.subr.mxu0 0.0
        %542 = vmatpush1.msra.mxu0 0.0
        %543 = vmatprep.subr.mxu0 0.0
        %544 = vmatpush1.msra.mxu0 0.0
        %545 = vmatprep.subr.mxu0 0.0
        %546 = vmatpush1.msra.mxu0 0.0
        %547 = vmatprep.subr.mxu0 0.0
        %548 = vmatpush1.msra.mxu0 0.0
        %549 = vmatprep.subr.mxu0 0.0
        %550 = vmatpush1.msra.mxu0 0.0
        %551 = vmatprep.subr.mxu0 0.0
        %552 = vmatpush1.msra.mxu0 0.0
        %553 = vmatprep.subr.mxu0 0.0
        %554 = vmatpush1.msra.mxu0 0.0
        %555 = vmatprep.subr.mxu0 0.0
        %556 = vmatpush1.msra.mxu0 0.0
        %557 = vmatprep.subr.mxu0 0.0
        %558 = vmatpush1.msra.mxu0 0.0
        %559 = vmatprep.subr.mxu0 0.0
        %560 = vmatpush1.msra.mxu0 0.0
        %561 = vmatprep.subr.mxu0 0.0
        %562 = vmatpush1.msra.mxu0 0.0
        %563 = vmatprep.subr.mxu0 0.0
        %564 = vmatpush1.msra.mxu0 0.0
        %565 = vmatprep.subr.mxu0 0.0
        %566 = vmatpush1.msra.mxu0 0.0
        %567 = vmatprep.subr.mxu0 0.0
        %568 = vmatpush1.msra.mxu0 0.0
        %569 = vmatprep.subr.mxu0 0.0
        %570 = vmatpush1.msra.mxu0 0.0
        %571 = vmatprep.subr.mxu0 0.0
        %572 = vmatpush1.msra.mxu0 0.0
        %573 = vmatprep.subr.mxu0 0.0
        %574 = vmatpush1.msra.mxu0 0.0
        %575 = vmatprep.mubr.f32.mxu0 0.0
        %576 = vmatmul.mubr.f32.gmra.mrb[0].mxu0 %v502
        %v577 = vpop.f32.mrb[0].mxu0
        %v578 = vadd.f32 %v427, %v577
        %v579 = vpop.f32.mrb[0].mxu0
        %v580 = vadd.f32 %v429, %v579
        %581 = vdwg.mxu0
        %582 = vmatprep.subr.mxu0 0.0
        %583 = vmatpush1.msra.mxu0 %v509
        %584 = vmatprep.subr.mxu0 0.0
        %585 = vmatpush1.msra.mxu0 0.0
        %586 = vmatprep.subr.mxu0 0.0
        %587 = vmatpush1.msra.mxu0 0.0
        %588 = vmatprep.subr.mxu0 0.0
        %589 = vmatpush1.msra.mxu0 0.0
        %590 = vmatprep.subr.mxu0 0.0
        %591 = vmatpush1.msra.mxu0 0.0
        %592 = vmatprep.subr.mxu0 0.0
        %593 = vmatpush1.msra.mxu0 0.0
        %594 = vmatprep.subr.mxu0 0.0
        %595 = vmatpush1.msra.mxu0 0.0
        %596 = vmatprep.subr.mxu0 0.0
        %597 = vmatpush1.msra.mxu0 0.0
        %598 = vmatprep.subr.mxu0 0.0
        %599 = vmatpush1.msra.mxu0 0.0
        %600 = vmatprep.subr.mxu0 0.0
        %601 = vmatpush1.msra.mxu0 0.0
        %602 = vmatprep.subr.mxu0 0.0
        %603 = vmatpush1.msra.mxu0 0.0
        %604 = vmatprep.subr.mxu0 0.0
        %605 = vmatpush1.msra.mxu0 0.0
        %606 = vmatprep.subr.mxu0 0.0
        %607 = vmatpush1.msra.mxu0 0.0
        %608 = vmatprep.subr.mxu0 0.0
        %609 = vmatpush1.msra.mxu0 0.0
        %610 = vmatprep.subr.mxu0 0.0
        %611 = vmatpush1.msra.mxu0 0.0
        %612 = vmatprep.subr.mxu0 0.0
        %613 = vmatpush1.msra.mxu0 0.0
        %614 = vmatprep.subr.mxu0 0.0
        %615 = vmatpush1.msra.mxu0 0.0
        %616 = vmatprep.subr.mxu0 0.0
        %617 = vmatpush1.msra.mxu0 0.0
        %618 = vmatprep.subr.mxu0 0.0
        %619 = vmatpush1.msra.mxu0 0.0
        %620 = vmatprep.subr.mxu0 0.0
        %621 = vmatpush1.msra.mxu0 0.0
        %622 = vmatprep.subr.mxu0 0.0
        %623 = vmatpush1.msra.mxu0 0.0
        %624 = vmatprep.subr.mxu0 0.0
        %625 = vmatpush1.msra.mxu0 0.0
        %626 = vmatprep.subr.mxu0 0.0
        %627 = vmatpush1.msra.mxu0 0.0
        %628 = vmatprep.subr.mxu0 0.0
        %629 = vmatpush1.msra.mxu0 0.0
        %630 = vmatprep.subr.mxu0 0.0
        %631 = vmatpush1.msra.mxu0 0.0
        %632 = vmatprep.subr.mxu0 0.0
        %633 = vmatpush1.msra.mxu0 0.0
        %634 = vmatprep.subr.mxu0 0.0
        %635 = vmatpush1.msra.mxu0 0.0
        %636 = vmatprep.subr.mxu0 0.0
        %637 = vmatpush1.msra.mxu0 0.0
        %638 = vmatprep.subr.mxu0 0.0
        %639 = vmatpush1.msra.mxu0 0.0
        %640 = vmatprep.subr.mxu0 0.0
        %641 = vmatpush1.msra.mxu0 0.0
        %642 = vmatprep.subr.mxu0 0.0
        %643 = vmatpush1.msra.mxu0 0.0
        %644 = vmatprep.subr.mxu0 0.0
        %645 = vmatpush1.msra.mxu0 0.0
        %646 = vmatprep.mubr.f32.mxu0 0.0
        %647 = vmatmul.mubr.f32.gmra.mrb[0].mxu0 %v502
        %v648 = vpop.f32.mrb[0].mxu0
        %v649 = vadd.f32 %v498, %v648
        %v650 = vpop.f32.mrb[0].mxu0
        %651 = vdwg.mxu0
        %s652 = scalar_lea.vmem %s1, 16
        %v653 = vld [vmem:[%s652] sm:$0xff]
        %v655 = vsel %vm349, %v653, 0
        %v657 = vsel %vm353, %v338, 0
        %v659 = vsel %vm353, %v339, 0
        %v662 = vsel %vm353, %v345, 0
        %664 = vmatprep.subr.mxu0 %v659
        %665 = vmatpush1.msra.mxu0 %v657
        %666 = vmatprep.subr.mxu0 0.0
        %667 = vmatpush1.msra.mxu0 0.0
        %668 = vmatprep.subr.mxu0 0.0
        %669 = vmatpush1.msra.mxu0 0.0
        %670 = vmatprep.subr.mxu0 0.0
        %671 = vmatpush1.msra.mxu0 0.0
        %672 = vmatprep.subr.mxu0 0.0
        %673 = vmatpush1.msra.mxu0 0.0
        %674 = vmatprep.subr.mxu0 0.0
        %675 = vmatpush1.msra.mxu0 0.0
        %676 = vmatprep.subr.mxu0 0.0
        %677 = vmatpush1.msra.mxu0 0.0
        %678 = vmatprep.subr.mxu0 0.0
        %679 = vmatpush1.msra.mxu0 0.0
        %680 = vmatprep.subr.mxu0 0.0
        %681 = vmatpush1.msra.mxu0 0.0
        %682 = vmatprep.subr.mxu0 0.0
        %683 = vmatpush1.msra.mxu0 0.0
        %684 = vmatprep.subr.mxu0 0.0
        %685 = vmatpush1.msra.mxu0 0.0
        %686 = vmatprep.subr.mxu0 0.0
        %687 = vmatpush1.msra.mxu0 0.0
        %688 = vmatprep.subr.mxu0 0.0
        %689 = vmatpush1.msra.mxu0 0.0
        %690 = vmatprep.subr.mxu0 0.0
        %691 = vmatpush1.msra.mxu0 0.0
        %692 = vmatprep.subr.mxu0 0.0
        %693 = vmatpush1.msra.mxu0 0.0
        %694 = vmatprep.subr.mxu0 0.0
        %695 = vmatpush1.msra.mxu0 0.0
        %696 = vmatprep.subr.mxu0 0.0
        %697 = vmatpush1.msra.mxu0 0.0
        %698 = vmatprep.subr.mxu0 0.0
        %699 = vmatpush1.msra.mxu0 0.0
        %700 = vmatprep.subr.mxu0 0.0
        %701 = vmatpush1.msra.mxu0 0.0
        %702 = vmatprep.subr.mxu0 0.0
        %703 = vmatpush1.msra.mxu0 0.0
        %704 = vmatprep.subr.mxu0 0.0
        %705 = vmatpush1.msra.mxu0 0.0
        %706 = vmatprep.subr.mxu0 0.0
        %707 = vmatpush1.msra.mxu0 0.0
        %708 = vmatprep.subr.mxu0 0.0
        %709 = vmatpush1.msra.mxu0 0.0
        %710 = vmatprep.subr.mxu0 0.0
        %711 = vmatpush1.msra.mxu0 0.0
        %712 = vmatprep.subr.mxu0 0.0
        %713 = vmatpush1.msra.mxu0 0.0
        %714 = vmatprep.subr.mxu0 0.0
        %715 = vmatpush1.msra.mxu0 0.0
        %716 = vmatprep.subr.mxu0 0.0
        %717 = vmatpush1.msra.mxu0 0.0
        %718 = vmatprep.subr.mxu0 0.0
        %719 = vmatpush1.msra.mxu0 0.0
        %720 = vmatprep.subr.mxu0 0.0
        %721 = vmatpush1.msra.mxu0 0.0
        %722 = vmatprep.subr.mxu0 0.0
        %723 = vmatpush1.msra.mxu0 0.0
        %724 = vmatprep.subr.mxu0 0.0
        %725 = vmatpush1.msra.mxu0 0.0
        %726 = vmatprep.subr.mxu0 0.0
        %727 = vmatpush1.msra.mxu0 0.0
        %728 = vmatprep.mubr.f32.mxu0 0.0
        %729 = vmatmul.mubr.f32.gmra.mrb[0].mxu0 %v655
        %v730 = vpop.f32.mrb[0].mxu0
        %v731 = vadd.f32 0.0, %v730
        %v732 = vpop.f32.mrb[0].mxu0
        %v733 = vadd.f32 0.0, %v732
        %734 = vdwg.mxu0
        %735 = vmatprep.subr.mxu0 0.0
        %736 = vmatpush1.msra.mxu0 %v662
        %737 = vmatprep.subr.mxu0 0.0
        %738 = vmatpush1.msra.mxu0 0.0
        %739 = vmatprep.subr.mxu0 0.0
        %740 = vmatpush1.msra.mxu0 0.0
        %741 = vmatprep.subr.mxu0 0.0
        %742 = vmatpush1.msra.mxu0 0.0
        %743 = vmatprep.subr.mxu0 0.0
        %744 = vmatpush1.msra.mxu0 0.0
        %745 = vmatprep.subr.mxu0 0.0
        %746 = vmatpush1.msra.mxu0 0.0
        %747 = vmatprep.subr.mxu0 0.0
        %748 = vmatpush1.msra.mxu0 0.0
        %749 = vmatprep.subr.mxu0 0.0
        %750 = vmatpush1.msra.mxu0 0.0
        %751 = vmatprep.subr.mxu0 0.0
        %752 = vmatpush1.msra.mxu0 0.0
        %753 = vmatprep.subr.mxu0 0.0
        %754 = vmatpush1.msra.mxu0 0.0
        %755 = vmatprep.subr.mxu0 0.0
        %756 = vmatpush1.msra.mxu0 0.0
        %757 = vmatprep.subr.mxu0 0.0
        %758 = vmatpush1.msra.mxu0 0.0
        %759 = vmatprep.subr.mxu0 0.0
        %760 = vmatpush1.msra.mxu0 0.0
        %761 = vmatprep.subr.mxu0 0.0
        %762 = vmatpush1.msra.mxu0 0.0
        %763 = vmatprep.subr.mxu0 0.0
        %764 = vmatpush1.msra.mxu0 0.0
        %765 = vmatprep.subr.mxu0 0.0
        %766 = vmatpush1.msra.mxu0 0.0
        %767 = vmatprep.subr.mxu0 0.0
        %768 = vmatpush1.msra.mxu0 0.0
        %769 = vmatprep.subr.mxu0 0.0
        %770 = vmatpush1.msra.mxu0 0.0
        %771 = vmatprep.subr.mxu0 0.0
        %772 = vmatpush1.msra.mxu0 0.0
        %773 = vmatprep.subr.mxu0 0.0
        %774 = vmatpush1.msra.mxu0 0.0
        %775 = vmatprep.subr.mxu0 0.0
        %776 = vmatpush1.msra.mxu0 0.0
        %777 = vmatprep.subr.mxu0 0.0
        %778 = vmatpush1.msra.mxu0 0.0
        %779 = vmatprep.subr.mxu0 0.0
        %780 = vmatpush1.msra.mxu0 0.0
        %781 = vmatprep.subr.mxu0 0.0
        %782 = vmatpush1.msra.mxu0 0.0
        %783 = vmatprep.subr.mxu0 0.0
        %784 = vmatpush1.msra.mxu0 0.0
        %785 = vmatprep.subr.mxu0 0.0
        %786 = vmatpush1.msra.mxu0 0.0
        %787 = vmatprep.subr.mxu0 0.0
        %788 = vmatpush1.msra.mxu0 0.0
        %789 = vmatprep.subr.mxu0 0.0
        %790 = vmatpush1.msra.mxu0 0.0
        %791 = vmatprep.subr.mxu0 0.0
        %792 = vmatpush1.msra.mxu0 0.0
        %793 = vmatprep.subr.mxu0 0.0
        %794 = vmatpush1.msra.mxu0 0.0
        %795 = vmatprep.subr.mxu0 0.0
        %796 = vmatpush1.msra.mxu0 0.0
        %797 = vmatprep.subr.mxu0 0.0
        %798 = vmatpush1.msra.mxu0 0.0
        %799 = vmatprep.mubr.f32.mxu0 0.0
        %800 = vmatmul.mubr.f32.gmra.mrb[0].mxu0 %v655
        %v801 = vpop.f32.mrb[0].mxu0
        %v802 = vadd.f32 0.0, %v801
        %v803 = vpop.f32.mrb[0].mxu0
        %804 = vdwg.mxu0
        %v805 = vadd.f32 %v578, %v731
        %v806 = vadd.f32 %v580, %v733
        %v807 = vadd.f32 %v649, %v802
        %809 = vrot.lane.b32.xlu0 %v807, 78
        %v810 = vpop.permute.xlu0 %809
        %814 = vrot.lane.b32.xlu0 %v805, 18
        %v815 = vpop.permute.xlu0 %814
        %816 = vrot.lane.b32.xlu0 %v806, 18
        %v817 = vpop.permute.xlu0 %816
        %818 = vrot.lane.b32.xlu0 %v807, 18
        %v819 = vpop.permute.xlu0 %818
        %vm820 = vcmask 146432
        %v821 = vsel %vm820, %v815, %v817
        %v822 = vsel %vm820, %v817, %v819
        %v826 = vsel %vm820, %v810, %v815
        %v827 = vadd.f32 %v826, 0.0
        %v828 = vadd.f32 %v821, 0.0
        %v829 = vadd.f32 %v822, 0.0
        %s830 = scalar_lea.vmem %s1, 24
        %v831 = vld [vmem:[%s830] sm:$0xff]
        %s832 = scalar_lea.vmem %s1, 32
        %v833 = vld [vmem:[%s832] sm:$0xff]
        %v835 = vsel %vm349, %v833, 0
        %837 = vmatprep.subr.mxu0 %v356
        %838 = vmatpush1.msra.mxu0 %v354
        %839 = vmatprep.subr.mxu0 0.0
        %840 = vmatpush1.msra.mxu0 0.0
        %841 = vmatprep.subr.mxu0 0.0
        %842 = vmatpush1.msra.mxu0 0.0
        %843 = vmatprep.subr.mxu0 0.0
        %844 = vmatpush1.msra.mxu0 0.0
        %845 = vmatprep.subr.mxu0 0.0
        %846 = vmatpush1.msra.mxu0 0.0
        %847 = vmatprep.subr.mxu0 0.0
        %848 = vmatpush1.msra.mxu0 0.0
        %849 = vmatprep.subr.mxu0 0.0
        %850 = vmatpush1.msra.mxu0 0.0
        %851 = vmatprep.subr.mxu0 0.0
        %852 = vmatpush1.msra.mxu0 0.0
        %853 = vmatprep.subr.mxu0 0.0
        %854 = vmatpush1.msra.mxu0 0.0
        %855 = vmatprep.subr.mxu0 0.0
        %856 = vmatpush1.msra.mxu0 0.0
        %857 = vmatprep.subr.mxu0 0.0
        %858 = vmatpush1.msra.mxu0 0.0
        %859 = vmatprep.subr.mxu0 0.0
        %860 = vmatpush1.msra.mxu0 0.0
        %861 = vmatprep.subr.mxu0 0.0
        %862 = vmatpush1.msra.mxu0 0.0
        %863 = vmatprep.subr.mxu0 0.0
        %864 = vmatpush1.msra.mxu0 0.0
        %865 = vmatprep.subr.mxu0 0.0
        %866 = vmatpush1.msra.mxu0 0.0
        %867 = vmatprep.subr.mxu0 0.0
        %868 = vmatpush1.msra.mxu0 0.0
        %869 = vmatprep.subr.mxu0 0.0
        %870 = vmatpush1.msra.mxu0 0.0
        %871 = vmatprep.subr.mxu0 0.0
        %872 = vmatpush1.msra.mxu0 0.0
        %873 = vmatprep.subr.mxu0 0.0
        %874 = vmatpush1.msra.mxu0 0.0
        %875 = vmatprep.subr.mxu0 0.0
        %876 = vmatpush1.msra.mxu0 0.0
        %877 = vmatprep.subr.mxu0 0.0
        %878 = vmatpush1.msra.mxu0 0.0
        %879 = vmatprep.subr.mxu0 0.0
        %880 = vmatpush1.msra.mxu0 0.0
        %881 = vmatprep.subr.mxu0 0.0
        %882 = vmatpush1.msra.mxu0 0.0
        %883 = vmatprep.subr.mxu0 0.0
        %884 = vmatpush1.msra.mxu0 0.0
        %885 = vmatprep.subr.mxu0 0.0
        %886 = vmatpush1.msra.mxu0 0.0
        %887 = vmatprep.subr.mxu0 0.0
        %888 = vmatpush1.msra.mxu0 0.0
        %889 = vmatprep.subr.mxu0 0.0
        %890 = vmatpush1.msra.mxu0 0.0
        %891 = vmatprep.subr.mxu0 0.0
        %892 = vmatpush1.msra.mxu0 0.0
        %893 = vmatprep.subr.mxu0 0.0
        %894 = vmatpush1.msra.mxu0 0.0
        %895 = vmatprep.subr.mxu0 0.0
        %896 = vmatpush1.msra.mxu0 0.0
        %897 = vmatprep.subr.mxu0 0.0
        %898 = vmatpush1.msra.mxu0 0.0
        %899 = vmatprep.subr.mxu0 0.0
        %900 = vmatpush1.msra.mxu0 0.0
        %901 = vmatprep.mubr.f32.mxu0 0.0
        %902 = vmatmul.mubr.f32.gmra.mrb[0].mxu0 %v835
        %v903 = vpop.f32.mrb[0].mxu0
        %v904 = vadd.f32 0.0, %v903
        %v905 = vpop.f32.mrb[0].mxu0
        %v906 = vadd.f32 0.0, %v905
        %907 = vdwg.mxu0
        %908 = vmatprep.subr.mxu0 0.0
        %909 = vmatpush1.msra.mxu0 %v358
        %910 = vmatprep.subr.mxu0 0.0
        %911 = vmatpush1.msra.mxu0 0.0
        %912 = vmatprep.subr.mxu0 0.0
        %913 = vmatpush1.msra.mxu0 0.0
        %914 = vmatprep.subr.mxu0 0.0
        %915 = vmatpush1.msra.mxu0 0.0
        %916 = vmatprep.subr.mxu0 0.0
        %917 = vmatpush1.msra.mxu0 0.0
        %918 = vmatprep.subr.mxu0 0.0
        %919 = vmatpush1.msra.mxu0 0.0
        %920 = vmatprep.subr.mxu0 0.0
        %921 = vmatpush1.msra.mxu0 0.0
        %922 = vmatprep.subr.mxu0 0.0
        %923 = vmatpush1.msra.mxu0 0.0
        %924 = vmatprep.subr.mxu0 0.0
        %925 = vmatpush1.msra.mxu0 0.0
        %926 = vmatprep.subr.mxu0 0.0
        %927 = vmatpush1.msra.mxu0 0.0
        %928 = vmatprep.subr.mxu0 0.0
        %929 = vmatpush1.msra.mxu0 0.0
        %930 = vmatprep.subr.mxu0 0.0
        %931 = vmatpush1.msra.mxu0 0.0
        %932 = vmatprep.subr.mxu0 0.0
        %933 = vmatpush1.msra.mxu0 0.0
        %934 = vmatprep.subr.mxu0 0.0
        %935 = vmatpush1.msra.mxu0 0.0
        %936 = vmatprep.subr.mxu0 0.0
        %937 = vmatpush1.msra.mxu0 0.0
        %938 = vmatprep.subr.mxu0 0.0
        %939 = vmatpush1.msra.mxu0 0.0
        %940 = vmatprep.subr.mxu0 0.0
        %941 = vmatpush1.msra.mxu0 0.0
        %942 = vmatprep.subr.mxu0 0.0
        %943 = vmatpush1.msra.mxu0 0.0
        %944 = vmatprep.subr.mxu0 0.0
        %945 = vmatpush1.msra.mxu0 0.0
        %946 = vmatprep.subr.mxu0 0.0
        %947 = vmatpush1.msra.mxu0 0.0
        %948 = vmatprep.subr.mxu0 0.0
        %949 = vmatpush1.msra.mxu0 0.0
        %950 = vmatprep.subr.mxu0 0.0
        %951 = vmatpush1.msra.mxu0 0.0
        %952 = vmatprep.subr.mxu0 0.0
        %953 = vmatpush1.msra.mxu0 0.0
        %954 = vmatprep.subr.mxu0 0.0
        %955 = vmatpush1.msra.mxu0 0.0
        %956 = vmatprep.subr.mxu0 0.0
        %957 = vmatpush1.msra.mxu0 0.0
        %958 = vmatprep.subr.mxu0 0.0
        %959 = vmatpush1.msra.mxu0 0.0
        %960 = vmatprep.subr.mxu0 0.0
        %961 = vmatpush1.msra.mxu0 0.0
        %962 = vmatprep.subr.mxu0 0.0
        %963 = vmatpush1.msra.mxu0 0.0
        %964 = vmatprep.subr.mxu0 0.0
        %965 = vmatpush1.msra.mxu0 0.0
        %966 = vmatprep.subr.mxu0 0.0
        %967 = vmatpush1.msra.mxu0 0.0
        %968 = vmatprep.subr.mxu0 0.0
        %969 = vmatpush1.msra.mxu0 0.0
        %970 = vmatprep.subr.mxu0 0.0
        %971 = vmatpush1.msra.mxu0 0.0
        %972 = vmatprep.mubr.f32.mxu0 0.0
        %973 = vmatmul.mubr.f32.gmra.mrb[0].mxu0 %v835
        %v974 = vpop.f32.mrb[0].mxu0
        %v975 = vadd.f32 0.0, %v974
        %v976 = vpop.f32.mrb[0].mxu0
        %977 = vdwg.mxu0
        %v979 = vsel %vm349, %v831, 0
        %981 = vmatprep.subr.mxu0 %v507
        %982 = vmatpush1.msra.mxu0 %v505
        %983 = vmatprep.subr.mxu0 0.0
        %984 = vmatpush1.msra.mxu0 0.0
        %985 = vmatprep.subr.mxu0 0.0
        %986 = vmatpush1.msra.mxu0 0.0
        %987 = vmatprep.subr.mxu0 0.0
        %988 = vmatpush1.msra.mxu0 0.0
        %989 = vmatprep.subr.mxu0 0.0
        %990 = vmatpush1.msra.mxu0 0.0
        %991 = vmatprep.subr.mxu0 0.0
        %992 = vmatpush1.msra.mxu0 0.0
        %993 = vmatprep.subr.mxu0 0.0
        %994 = vmatpush1.msra.mxu0 0.0
        %995 = vmatprep.subr.mxu0 0.0
        %996 = vmatpush1.msra.mxu0 0.0
        %997 = vmatprep.subr.mxu0 0.0
        %998 = vmatpush1.msra.mxu0 0.0
        %999 = vmatprep.subr.mxu0 0.0
        %1000 = vmatpush1.msra.mxu0 0.0
        %1001 = vmatprep.subr.mxu0 0.0
        %1002 = vmatpush1.msra.mxu0 0.0
        %1003 = vmatprep.subr.mxu0 0.0
        %1004 = vmatpush1.msra.mxu0 0.0
        %1005 = vmatprep.subr.mxu0 0.0
        %1006 = vmatpush1.msra.mxu0 0.0
        %1007 = vmatprep.subr.mxu0 0.0
        %1008 = vmatpush1.msra.mxu0 0.0
        %1009 = vmatprep.subr.mxu0 0.0
        %1010 = vmatpush1.msra.mxu0 0.0
        %1011 = vmatprep.subr.mxu0 0.0
        %1012 = vmatpush1.msra.mxu0 0.0
        %1013 = vmatprep.subr.mxu0 0.0
        %1014 = vmatpush1.msra.mxu0 0.0
        %1015 = vmatprep.subr.mxu0 0.0
        %1016 = vmatpush1.msra.mxu0 0.0
        %1017 = vmatprep.subr.mxu0 0.0
        %1018 = vmatpush1.msra.mxu0 0.0
        %1019 = vmatprep.subr.mxu0 0.0
        %1020 = vmatpush1.msra.mxu0 0.0
        %1021 = vmatprep.subr.mxu0 0.0
        %1022 = vmatpush1.msra.mxu0 0.0
        %1023 = vmatprep.subr.mxu0 0.0
        %1024 = vmatpush1.msra.mxu0 0.0
        %1025 = vmatprep.subr.mxu0 0.0
        %1026 = vmatpush1.msra.mxu0 0.0
        %1027 = vmatprep.subr.mxu0 0.0
        %1028 = vmatpush1.msra.mxu0 0.0
        %1029 = vmatprep.subr.mxu0 0.0
        %1030 = vmatpush1.msra.mxu0 0.0
        %1031 = vmatprep.subr.mxu0 0.0
        %1032 = vmatpush1.msra.mxu0 0.0
        %1033 = vmatprep.subr.mxu0 0.0
        %1034 = vmatpush1.msra.mxu0 0.0
        %1035 = vmatprep.subr.mxu0 0.0
        %1036 = vmatpush1.msra.mxu0 0.0
        %1037 = vmatprep.subr.mxu0 0.0
        %1038 = vmatpush1.msra.mxu0 0.0
        %1039 = vmatprep.subr.mxu0 0.0
        %1040 = vmatpush1.msra.mxu0 0.0
        %1041 = vmatprep.subr.mxu0 0.0
        %1042 = vmatpush1.msra.mxu0 0.0
        %1043 = vmatprep.subr.mxu0 0.0
        %1044 = vmatpush1.msra.mxu0 0.0
        %1045 = vmatprep.mubr.f32.mxu0 0.0
        %1046 = vmatmul.mubr.f32.gmra.mrb[0].mxu0 %v979
        %v1047 = vpop.f32.mrb[0].mxu0
        %v1048 = vadd.f32 %v904, %v1047
        %v1049 = vpop.f32.mrb[0].mxu0
        %v1050 = vadd.f32 %v906, %v1049
        %1051 = vdwg.mxu0
        %1052 = vmatprep.subr.mxu0 0.0
        %1053 = vmatpush1.msra.mxu0 %v509
        %1054 = vmatprep.subr.mxu0 0.0
        %1055 = vmatpush1.msra.mxu0 0.0
        %1056 = vmatprep.subr.mxu0 0.0
        %1057 = vmatpush1.msra.mxu0 0.0
        %1058 = vmatprep.subr.mxu0 0.0
        %1059 = vmatpush1.msra.mxu0 0.0
        %1060 = vmatprep.subr.mxu0 0.0
        %1061 = vmatpush1.msra.mxu0 0.0
        %1062 = vmatprep.subr.mxu0 0.0
        %1063 = vmatpush1.msra.mxu0 0.0
        %1064 = vmatprep.subr.mxu0 0.0
        %1065 = vmatpush1.msra.mxu0 0.0
        %1066 = vmatprep.subr.mxu0 0.0
        %1067 = vmatpush1.msra.mxu0 0.0
        %1068 = vmatprep.subr.mxu0 0.0
        %1069 = vmatpush1.msra.mxu0 0.0
        %1070 = vmatprep.subr.mxu0 0.0
        %1071 = vmatpush1.msra.mxu0 0.0
        %1072 = vmatprep.subr.mxu0 0.0
        %1073 = vmatpush1.msra.mxu0 0.0
        %1074 = vmatprep.subr.mxu0 0.0
        %1075 = vmatpush1.msra.mxu0 0.0
        %1076 = vmatprep.subr.mxu0 0.0
        %1077 = vmatpush1.msra.mxu0 0.0
        %1078 = vmatprep.subr.mxu0 0.0
        %1079 = vmatpush1.msra.mxu0 0.0
        %1080 = vmatprep.subr.mxu0 0.0
        %1081 = vmatpush1.msra.mxu0 0.0
        %1082 = vmatprep.subr.mxu0 0.0
        %1083 = vmatpush1.msra.mxu0 0.0
        %1084 = vmatprep.subr.mxu0 0.0
        %1085 = vmatpush1.msra.mxu0 0.0
        %1086 = vmatprep.subr.mxu0 0.0
        %1087 = vmatpush1.msra.mxu0 0.0
        %1088 = vmatprep.subr.mxu0 0.0
        %1089 = vmatpush1.msra.mxu0 0.0
        %1090 = vmatprep.subr.mxu0 0.0
        %1091 = vmatpush1.msra.mxu0 0.0
        %1092 = vmatprep.subr.mxu0 0.0
        %1093 = vmatpush1.msra.mxu0 0.0
        %1094 = vmatprep.subr.mxu0 0.0
        %1095 = vmatpush1.msra.mxu0 0.0
        %1096 = vmatprep.subr.mxu0 0.0
        %1097 = vmatpush1.msra.mxu0 0.0
        %1098 = vmatprep.subr.mxu0 0.0
        %1099 = vmatpush1.msra.mxu0 0.0
        %1100 = vmatprep.subr.mxu0 0.0
        %1101 = vmatpush1.msra.mxu0 0.0
        %1102 = vmatprep.subr.mxu0 0.0
        %1103 = vmatpush1.msra.mxu0 0.0
        %1104 = vmatprep.subr.mxu0 0.0
        %1105 = vmatpush1.msra.mxu0 0.0
        %1106 = vmatprep.subr.mxu0 0.0
        %1107 = vmatpush1.msra.mxu0 0.0
        %1108 = vmatprep.subr.mxu0 0.0
        %1109 = vmatpush1.msra.mxu0 0.0
        %1110 = vmatprep.subr.mxu0 0.0
        %1111 = vmatpush1.msra.mxu0 0.0
        %1112 = vmatprep.subr.mxu0 0.0
        %1113 = vmatpush1.msra.mxu0 0.0
        %1114 = vmatprep.subr.mxu0 0.0
        %1115 = vmatpush1.msra.mxu0 0.0
        %1116 = vmatprep.mubr.f32.mxu0 0.0
        %1117 = vmatmul.mubr.f32.gmra.mrb[0].mxu0 %v979
        %v1118 = vpop.f32.mrb[0].mxu0
        %v1119 = vadd.f32 %v975, %v1118
        %v1120 = vpop.f32.mrb[0].mxu0
        %1121 = vdwg.mxu0
        %s1122 = scalar_lea.vmem %s1, 40
        %v1123 = vld [vmem:[%s1122] sm:$0xff]
        %v1125 = vsel %vm349, %v1123, 0
        %1127 = vmatprep.subr.mxu0 %v659
        %1128 = vmatpush1.msra.mxu0 %v657
        %1129 = vmatprep.subr.mxu0 0.0
        %1130 = vmatpush1.msra.mxu0 0.0
        %1131 = vmatprep.subr.mxu0 0.0
        %1132 = vmatpush1.msra.mxu0 0.0
        %1133 = vmatprep.subr.mxu0 0.0
        %1134 = vmatpush1.msra.mxu0 0.0
        %1135 = vmatprep.subr.mxu0 0.0
        %1136 = vmatpush1.msra.mxu0 0.0
        %1137 = vmatprep.subr.mxu0 0.0
        %1138 = vmatpush1.msra.mxu0 0.0
        %1139 = vmatprep.subr.mxu0 0.0
        %1140 = vmatpush1.msra.mxu0 0.0
        %1141 = vmatprep.subr.mxu0 0.0
        %1142 = vmatpush1.msra.mxu0 0.0
        %1143 = vmatprep.subr.mxu0 0.0
        %1144 = vmatpush1.msra.mxu0 0.0
        %1145 = vmatprep.subr.mxu0 0.0
        %1146 = vmatpush1.msra.mxu0 0.0
        %1147 = vmatprep.subr.mxu0 0.0
        %1148 = vmatpush1.msra.mxu0 0.0
        %1149 = vmatprep.subr.mxu0 0.0
        %1150 = vmatpush1.msra.mxu0 0.0
        %1151 = vmatprep.subr.mxu0 0.0
        %1152 = vmatpush1.msra.mxu0 0.0
        %1153 = vmatprep.subr.mxu0 0.0
        %1154 = vmatpush1.msra.mxu0 0.0
        %1155 = vmatprep.subr.mxu0 0.0
        %1156 = vmatpush1.msra.mxu0 0.0
        %1157 = vmatprep.subr.mxu0 0.0
        %1158 = vmatpush1.msra.mxu0 0.0
        %1159 = vmatprep.subr.mxu0 0.0
        %1160 = vmatpush1.msra.mxu0 0.0
        %1161 = vmatprep.subr.mxu0 0.0
        %1162 = vmatpush1.msra.mxu0 0.0
        %1163 = vmatprep.subr.mxu0 0.0
        %1164 = vmatpush1.msra.mxu0 0.0
        %1165 = vmatprep.subr.mxu0 0.0
        %1166 = vmatpush1.msra.mxu0 0.0
        %1167 = vmatprep.subr.mxu0 0.0
        %1168 = vmatpush1.msra.mxu0 0.0
        %1169 = vmatprep.subr.mxu0 0.0
        %1170 = vmatpush1.msra.mxu0 0.0
        %1171 = vmatprep.subr.mxu0 0.0
        %1172 = vmatpush1.msra.mxu0 0.0
        %1173 = vmatprep.subr.mxu0 0.0
        %1174 = vmatpush1.msra.mxu0 0.0
        %1175 = vmatprep.subr.mxu0 0.0
        %1176 = vmatpush1.msra.mxu0 0.0
        %1177 = vmatprep.subr.mxu0 0.0
        %1178 = vmatpush1.msra.mxu0 0.0
        %1179 = vmatprep.subr.mxu0 0.0
        %1180 = vmatpush1.msra.mxu0 0.0
        %1181 = vmatprep.subr.mxu0 0.0
        %1182 = vmatpush1.msra.mxu0 0.0
        %1183 = vmatprep.subr.mxu0 0.0
        %1184 = vmatpush1.msra.mxu0 0.0
        %1185 = vmatprep.subr.mxu0 0.0
        %1186 = vmatpush1.msra.mxu0 0.0
        %1187 = vmatprep.subr.mxu0 0.0
        %1188 = vmatpush1.msra.mxu0 0.0
        %1189 = vmatprep.subr.mxu0 0.0
        %1190 = vmatpush1.msra.mxu0 0.0
        %1191 = vmatprep.mubr.f32.mxu0 0.0
        %1192 = vmatmul.mubr.f32.gmra.mrb[0].mxu0 %v1125
        %v1193 = vpop.f32.mrb[0].mxu0
        %v1194 = vadd.f32 0.0, %v1193
        %v1195 = vpop.f32.mrb[0].mxu0
        %v1196 = vadd.f32 0.0, %v1195
        %1197 = vdwg.mxu0
        %1198 = vmatprep.subr.mxu0 0.0
        %1199 = vmatpush1.msra.mxu0 %v662
        %1200 = vmatprep.subr.mxu0 0.0
        %1201 = vmatpush1.msra.mxu0 0.0
        %1202 = vmatprep.subr.mxu0 0.0
        %1203 = vmatpush1.msra.mxu0 0.0
        %1204 = vmatprep.subr.mxu0 0.0
        %1205 = vmatpush1.msra.mxu0 0.0
        %1206 = vmatprep.subr.mxu0 0.0
        %1207 = vmatpush1.msra.mxu0 0.0
        %1208 = vmatprep.subr.mxu0 0.0
        %1209 = vmatpush1.msra.mxu0 0.0
        %1210 = vmatprep.subr.mxu0 0.0
        %1211 = vmatpush1.msra.mxu0 0.0
        %1212 = vmatprep.subr.mxu0 0.0
        %1213 = vmatpush1.msra.mxu0 0.0
        %1214 = vmatprep.subr.mxu0 0.0
        %1215 = vmatpush1.msra.mxu0 0.0
        %1216 = vmatprep.subr.mxu0 0.0
        %1217 = vmatpush1.msra.mxu0 0.0
        %1218 = vmatprep.subr.mxu0 0.0
        %1219 = vmatpush1.msra.mxu0 0.0
        %1220 = vmatprep.subr.mxu0 0.0
        %1221 = vmatpush1.msra.mxu0 0.0
        %1222 = vmatprep.subr.mxu0 0.0
        %1223 = vmatpush1.msra.mxu0 0.0
        %1224 = vmatprep.subr.mxu0 0.0
        %1225 = vmatpush1.msra.mxu0 0.0
        %1226 = vmatprep.subr.mxu0 0.0
        %1227 = vmatpush1.msra.mxu0 0.0
        %1228 = vmatprep.subr.mxu0 0.0
        %1229 = vmatpush1.msra.mxu0 0.0
        %1230 = vmatprep.subr.mxu0 0.0
        %1231 = vmatpush1.msra.mxu0 0.0
        %1232 = vmatprep.subr.mxu0 0.0
        %1233 = vmatpush1.msra.mxu0 0.0
        %1234 = vmatprep.subr.mxu0 0.0
        %1235 = vmatpush1.msra.mxu0 0.0
        %1236 = vmatprep.subr.mxu0 0.0
        %1237 = vmatpush1.msra.mxu0 0.0
        %1238 = vmatprep.subr.mxu0 0.0
        %1239 = vmatpush1.msra.mxu0 0.0
        %1240 = vmatprep.subr.mxu0 0.0
        %1241 = vmatpush1.msra.mxu0 0.0
        %1242 = vmatprep.subr.mxu0 0.0
        %1243 = vmatpush1.msra.mxu0 0.0
        %1244 = vmatprep.subr.mxu0 0.0
        %1245 = vmatpush1.msra.mxu0 0.0
        %1246 = vmatprep.subr.mxu0 0.0
        %1247 = vmatpush1.msra.mxu0 0.0
        %1248 = vmatprep.subr.mxu0 0.0
        %1249 = vmatpush1.msra.mxu0 0.0
        %1250 = vmatprep.subr.mxu0 0.0
        %1251 = vmatpush1.msra.mxu0 0.0
        %1252 = vmatprep.subr.mxu0 0.0
        %1253 = vmatpush1.msra.mxu0 0.0
        %1254 = vmatprep.subr.mxu0 0.0
        %1255 = vmatpush1.msra.mxu0 0.0
        %1256 = vmatprep.subr.mxu0 0.0
        %1257 = vmatpush1.msra.mxu0 0.0
        %1258 = vmatprep.subr.mxu0 0.0
        %1259 = vmatpush1.msra.mxu0 0.0
        %1260 = vmatprep.subr.mxu0 0.0
        %1261 = vmatpush1.msra.mxu0 0.0
        %1262 = vmatprep.mubr.f32.mxu0 0.0
        %1263 = vmatmul.mubr.f32.gmra.mrb[0].mxu0 %v1125
        %v1264 = vpop.f32.mrb[0].mxu0
        %v1265 = vadd.f32 0.0, %v1264
        %v1266 = vpop.f32.mrb[0].mxu0
        %1267 = vdwg.mxu0
        %v1268 = vadd.f32 %v1048, %v1194
        %v1269 = vadd.f32 %v1050, %v1196
        %v1270 = vadd.f32 %v1119, %v1265
        %v1271 = vadd.f32 %v827, %v1268
        %v1272 = vadd.f32 %v828, %v1269
        %v1273 = vadd.f32 %v829, %v1270
        %s1274 = scalar_lea.vmem %s1, 48
        %v1275 = vld [vmem:[%s1274] sm:$0xff]
        %s1276 = scalar_lea.vmem %s1, 56
        %v1277 = vld [vmem:[%s1276] sm:$0xff]
        %v1279 = vsel %vm349, %v1277, 0
        %1281 = vmatprep.subr.mxu0 %v356
        %1282 = vmatpush1.msra.mxu0 %v354
        %1283 = vmatprep.subr.mxu0 0.0
        %1284 = vmatpush1.msra.mxu0 0.0
        %1285 = vmatprep.subr.mxu0 0.0
        %1286 = vmatpush1.msra.mxu0 0.0
        %1287 = vmatprep.subr.mxu0 0.0
        %1288 = vmatpush1.msra.mxu0 0.0
        %1289 = vmatprep.subr.mxu0 0.0
        %1290 = vmatpush1.msra.mxu0 0.0
        %1291 = vmatprep.subr.mxu0 0.0
        %1292 = vmatpush1.msra.mxu0 0.0
        %1293 = vmatprep.subr.mxu0 0.0
        %1294 = vmatpush1.msra.mxu0 0.0
        %1295 = vmatprep.subr.mxu0 0.0
        %1296 = vmatpush1.msra.mxu0 0.0
        %1297 = vmatprep.subr.mxu0 0.0
        %1298 = vmatpush1.msra.mxu0 0.0
        %1299 = vmatprep.subr.mxu0 0.0
        %1300 = vmatpush1.msra.mxu0 0.0
        %1301 = vmatprep.subr.mxu0 0.0
        %1302 = vmatpush1.msra.mxu0 0.0
        %1303 = vmatprep.subr.mxu0 0.0
        %1304 = vmatpush1.msra.mxu0 0.0
        %1305 = vmatprep.subr.mxu0 0.0
        %1306 = vmatpush1.msra.mxu0 0.0
        %1307 = vmatprep.subr.mxu0 0.0
        %1308 = vmatpush1.msra.mxu0 0.0
        %1309 = vmatprep.subr.mxu0 0.0
        %1310 = vmatpush1.msra.mxu0 0.0
        %1311 = vmatprep.subr.mxu0 0.0
        %1312 = vmatpush1.msra.mxu0 0.0
        %1313 = vmatprep.subr.mxu0 0.0
        %1314 = vmatpush1.msra.mxu0 0.0
        %1315 = vmatprep.subr.mxu0 0.0
        %1316 = vmatpush1.msra.mxu0 0.0
        %1317 = vmatprep.subr.mxu0 0.0
        %1318 = vmatpush1.msra.mxu0 0.0
        %1319 = vmatprep.subr.mxu0 0.0
        %1320 = vmatpush1.msra.mxu0 0.0
        %1321 = vmatprep.subr.mxu0 0.0
        %1322 = vmatpush1.msra.mxu0 0.0
        %1323 = vmatprep.subr.mxu0 0.0
        %1324 = vmatpush1.msra.mxu0 0.0
        %1325 = vmatprep.subr.mxu0 0.0
        %1326 = vmatpush1.msra.mxu0 0.0
        %1327 = vmatprep.subr.mxu0 0.0
        %1328 = vmatpush1.msra.mxu0 0.0
        %1329 = vmatprep.subr.mxu0 0.0
        %1330 = vmatpush1.msra.mxu0 0.0
        %1331 = vmatprep.subr.mxu0 0.0
        %1332 = vmatpush1.msra.mxu0 0.0
        %1333 = vmatprep.subr.mxu0 0.0
        %1334 = vmatpush1.msra.mxu0 0.0
        %1335 = vmatprep.subr.mxu0 0.0
        %1336 = vmatpush1.msra.mxu0 0.0
        %1337 = vmatprep.subr.mxu0 0.0
        %1338 = vmatpush1.msra.mxu0 0.0
        %1339 = vmatprep.subr.mxu0 0.0
        %1340 = vmatpush1.msra.mxu0 0.0
        %1341 = vmatprep.subr.mxu0 0.0
        %1342 = vmatpush1.msra.mxu0 0.0
        %1343 = vmatprep.subr.mxu0 0.0
        %1344 = vmatpush1.msra.mxu0 0.0
        %1345 = vmatprep.mubr.f32.mxu0 0.0
        %1346 = vmatmul.mubr.f32.gmra.mrb[0].mxu0 %v1279
        %v1347 = vpop.f32.mrb[0].mxu0
        %v1348 = vadd.f32 0.0, %v1347
        %v1349 = vpop.f32.mrb[0].mxu0
        %v1350 = vadd.f32 0.0, %v1349
        %1351 = vdwg.mxu0
        %1352 = vmatprep.subr.mxu0 0.0
        %1353 = vmatpush1.msra.mxu0 %v358
        %1354 = vmatprep.subr.mxu0 0.0
        %1355 = vmatpush1.msra.mxu0 0.0
        %1356 = vmatprep.subr.mxu0 0.0
        %1357 = vmatpush1.msra.mxu0 0.0
        %1358 = vmatprep.subr.mxu0 0.0
        %1359 = vmatpush1.msra.mxu0 0.0
        %1360 = vmatprep.subr.mxu0 0.0
        %1361 = vmatpush1.msra.mxu0 0.0
        %1362 = vmatprep.subr.mxu0 0.0
        %1363 = vmatpush1.msra.mxu0 0.0
        %1364 = vmatprep.subr.mxu0 0.0
        %1365 = vmatpush1.msra.mxu0 0.0
        %1366 = vmatprep.subr.mxu0 0.0
        %1367 = vmatpush1.msra.mxu0 0.0
        %1368 = vmatprep.subr.mxu0 0.0
        %1369 = vmatpush1.msra.mxu0 0.0
        %1370 = vmatprep.subr.mxu0 0.0
        %1371 = vmatpush1.msra.mxu0 0.0
        %1372 = vmatprep.subr.mxu0 0.0
        %1373 = vmatpush1.msra.mxu0 0.0
        %1374 = vmatprep.subr.mxu0 0.0
        %1375 = vmatpush1.msra.mxu0 0.0
        %1376 = vmatprep.subr.mxu0 0.0
        %1377 = vmatpush1.msra.mxu0 0.0
        %1378 = vmatprep.subr.mxu0 0.0
        %1379 = vmatpush1.msra.mxu0 0.0
        %1380 = vmatprep.subr.mxu0 0.0
        %1381 = vmatpush1.msra.mxu0 0.0
        %1382 = vmatprep.subr.mxu0 0.0
        %1383 = vmatpush1.msra.mxu0 0.0
        %1384 = vmatprep.subr.mxu0 0.0
        %1385 = vmatpush1.msra.mxu0 0.0
        %1386 = vmatprep.subr.mxu0 0.0
        %1387 = vmatpush1.msra.mxu0 0.0
        %1388 = vmatprep.subr.mxu0 0.0
        %1389 = vmatpush1.msra.mxu0 0.0
        %1390 = vmatprep.subr.mxu0 0.0
        %1391 = vmatpush1.msra.mxu0 0.0
        %1392 = vmatprep.subr.mxu0 0.0
        %1393 = vmatpush1.msra.mxu0 0.0
        %1394 = vmatprep.subr.mxu0 0.0
        %1395 = vmatpush1.msra.mxu0 0.0
        %1396 = vmatprep.subr.mxu0 0.0
        %1397 = vmatpush1.msra.mxu0 0.0
        %1398 = vmatprep.subr.mxu0 0.0
        %1399 = vmatpush1.msra.mxu0 0.0
        %1400 = vmatprep.subr.mxu0 0.0
        %1401 = vmatpush1.msra.mxu0 0.0
        %1402 = vmatprep.subr.mxu0 0.0
        %1403 = vmatpush1.msra.mxu0 0.0
        %1404 = vmatprep.subr.mxu0 0.0
        %1405 = vmatpush1.msra.mxu0 0.0
        %1406 = vmatprep.subr.mxu0 0.0
        %1407 = vmatpush1.msra.mxu0 0.0
        %1408 = vmatprep.subr.mxu0 0.0
        %1409 = vmatpush1.msra.mxu0 0.0
        %1410 = vmatprep.subr.mxu0 0.0
        %1411 = vmatpush1.msra.mxu0 0.0
        %1412 = vmatprep.subr.mxu0 0.0
        %1413 = vmatpush1.msra.mxu0 0.0
        %1414 = vmatprep.subr.mxu0 0.0
        %1415 = vmatpush1.msra.mxu0 0.0
        %1416 = vmatprep.mubr.f32.mxu0 0.0
        %1417 = vmatmul.mubr.f32.gmra.mrb[0].mxu0 %v1279
        %v1418 = vpop.f32.mrb[0].mxu0
        %v1419 = vadd.f32 0.0, %v1418
        %v1420 = vpop.f32.mrb[0].mxu0
        %1421 = vdwg.mxu0
        %v1423 = vsel %vm349, %v1275, 0
        %1425 = vmatprep.subr.mxu0 %v507
        %1426 = vmatpush1.msra.mxu0 %v505
        %1427 = vmatprep.subr.mxu0 0.0
        %1428 = vmatpush1.msra.mxu0 0.0
        %1429 = vmatprep.subr.mxu0 0.0
        %1430 = vmatpush1.msra.mxu0 0.0
        %1431 = vmatprep.subr.mxu0 0.0
        %1432 = vmatpush1.msra.mxu0 0.0
        %1433 = vmatprep.subr.mxu0 0.0
        %1434 = vmatpush1.msra.mxu0 0.0
        %1435 = vmatprep.subr.mxu0 0.0
        %1436 = vmatpush1.msra.mxu0 0.0
        %1437 = vmatprep.subr.mxu0 0.0
        %1438 = vmatpush1.msra.mxu0 0.0
        %1439 = vmatprep.subr.mxu0 0.0
        %1440 = vmatpush1.msra.mxu0 0.0
        %1441 = vmatprep.subr.mxu0 0.0
        %1442 = vmatpush1.msra.mxu0 0.0
        %1443 = vmatprep.subr.mxu0 0.0
        %1444 = vmatpush1.msra.mxu0 0.0
        %1445 = vmatprep.subr.mxu0 0.0
        %1446 = vmatpush1.msra.mxu0 0.0
        %1447 = vmatprep.subr.mxu0 0.0
        %1448 = vmatpush1.msra.mxu0 0.0
        %1449 = vmatprep.subr.mxu0 0.0
        %1450 = vmatpush1.msra.mxu0 0.0
        %1451 = vmatprep.subr.mxu0 0.0
        %1452 = vmatpush1.msra.mxu0 0.0
        %1453 = vmatprep.subr.mxu0 0.0
        %1454 = vmatpush1.msra.mxu0 0.0
        %1455 = vmatprep.subr.mxu0 0.0
        %1456 = vmatpush1.msra.mxu0 0.0
        %1457 = vmatprep.subr.mxu0 0.0
        %1458 = vmatpush1.msra.mxu0 0.0
        %1459 = vmatprep.subr.mxu0 0.0
        %1460 = vmatpush1.msra.mxu0 0.0
        %1461 = vmatprep.subr.mxu0 0.0
        %1462 = vmatpush1.msra.mxu0 0.0
        %1463 = vmatprep.subr.mxu0 0.0
        %1464 = vmatpush1.msra.mxu0 0.0
        %1465 = vmatprep.subr.mxu0 0.0
        %1466 = vmatpush1.msra.mxu0 0.0
        %1467 = vmatprep.subr.mxu0 0.0
        %1468 = vmatpush1.msra.mxu0 0.0
        %1469 = vmatprep.subr.mxu0 0.0
        %1470 = vmatpush1.msra.mxu0 0.0
        %1471 = vmatprep.subr.mxu0 0.0
        %1472 = vmatpush1.msra.mxu0 0.0
        %1473 = vmatprep.subr.mxu0 0.0
        %1474 = vmatpush1.msra.mxu0 0.0
        %1475 = vmatprep.subr.mxu0 0.0
        %1476 = vmatpush1.msra.mxu0 0.0
        %1477 = vmatprep.subr.mxu0 0.0
        %1478 = vmatpush1.msra.mxu0 0.0
        %1479 = vmatprep.subr.mxu0 0.0
        %1480 = vmatpush1.msra.mxu0 0.0
        %1481 = vmatprep.subr.mxu0 0.0
        %1482 = vmatpush1.msra.mxu0 0.0
        %1483 = vmatprep.subr.mxu0 0.0
        %1484 = vmatpush1.msra.mxu0 0.0
        %1485 = vmatprep.subr.mxu0 0.0
        %1486 = vmatpush1.msra.mxu0 0.0
        %1487 = vmatprep.subr.mxu0 0.0
        %1488 = vmatpush1.msra.mxu0 0.0
        %1489 = vmatprep.mubr.f32.mxu0 0.0
        %1490 = vmatmul.mubr.f32.gmra.mrb[0].mxu0 %v1423
        %v1491 = vpop.f32.mrb[0].mxu0
        %v1492 = vadd.f32 %v1348, %v1491
        %v1493 = vpop.f32.mrb[0].mxu0
        %v1494 = vadd.f32 %v1350, %v1493
        %1495 = vdwg.mxu0
        %1496 = vmatprep.subr.mxu0 0.0
        %1497 = vmatpush1.msra.mxu0 %v509
        %1498 = vmatprep.subr.mxu0 0.0
        %1499 = vmatpush1.msra.mxu0 0.0
        %1500 = vmatprep.subr.mxu0 0.0
        %1501 = vmatpush1.msra.mxu0 0.0
        %1502 = vmatprep.subr.mxu0 0.0
        %1503 = vmatpush1.msra.mxu0 0.0
        %1504 = vmatprep.subr.mxu0 0.0
        %1505 = vmatpush1.msra.mxu0 0.0
        %1506 = vmatprep.subr.mxu0 0.0
        %1507 = vmatpush1.msra.mxu0 0.0
        %1508 = vmatprep.subr.mxu0 0.0
        %1509 = vmatpush1.msra.mxu0 0.0
        %1510 = vmatprep.subr.mxu0 0.0
        %1511 = vmatpush1.msra.mxu0 0.0
        %1512 = vmatprep.subr.mxu0 0.0
        %1513 = vmatpush1.msra.mxu0 0.0
        %1514 = vmatprep.subr.mxu0 0.0
        %1515 = vmatpush1.msra.mxu0 0.0
        %1516 = vmatprep.subr.mxu0 0.0
        %1517 = vmatpush1.msra.mxu0 0.0
        %1518 = vmatprep.subr.mxu0 0.0
        %1519 = vmatpush1.msra.mxu0 0.0
        %1520 = vmatprep.subr.mxu0 0.0
        %1521 = vmatpush1.msra.mxu0 0.0
        %1522 = vmatprep.subr.mxu0 0.0
        %1523 = vmatpush1.msra.mxu0 0.0
        %1524 = vmatprep.subr.mxu0 0.0
        %1525 = vmatpush1.msra.mxu0 0.0
        %1526 = vmatprep.subr.mxu0 0.0
        %1527 = vmatpush1.msra.mxu0 0.0
        %1528 = vmatprep.subr.mxu0 0.0
        %1529 = vmatpush1.msra.mxu0 0.0
        %1530 = vmatprep.subr.mxu0 0.0
        %1531 = vmatpush1.msra.mxu0 0.0
        %1532 = vmatprep.subr.mxu0 0.0
        %1533 = vmatpush1.msra.mxu0 0.0
        %1534 = vmatprep.subr.mxu0 0.0
        %1535 = vmatpush1.msra.mxu0 0.0
        %1536 = vmatprep.subr.mxu0 0.0
        %1537 = vmatpush1.msra.mxu0 0.0
        %1538 = vmatprep.subr.mxu0 0.0
        %1539 = vmatpush1.msra.mxu0 0.0
        %1540 = vmatprep.subr.mxu0 0.0
        %1541 = vmatpush1.msra.mxu0 0.0
        %1542 = vmatprep.subr.mxu0 0.0
        %1543 = vmatpush1.msra.mxu0 0.0
        %1544 = vmatprep.subr.mxu0 0.0
        %1545 = vmatpush1.msra.mxu0 0.0
        %1546 = vmatprep.subr.mxu0 0.0
        %1547 = vmatpush1.msra.mxu0 0.0
        %1548 = vmatprep.subr.mxu0 0.0
        %1549 = vmatpush1.msra.mxu0 0.0
        %1550 = vmatprep.subr.mxu0 0.0
        %1551 = vmatpush1.msra.mxu0 0.0
        %1552 = vmatprep.subr.mxu0 0.0
        %1553 = vmatpush1.msra.mxu0 0.0
        %1554 = vmatprep.subr.mxu0 0.0
        %1555 = vmatpush1.msra.mxu0 0.0
        %1556 = vmatprep.subr.mxu0 0.0
        %1557 = vmatpush1.msra.mxu0 0.0
        %1558 = vmatprep.subr.mxu0 0.0
        %1559 = vmatpush1.msra.mxu0 0.0
        %1560 = vmatprep.mubr.f32.mxu0 0.0
        %1561 = vmatmul.mubr.f32.gmra.mrb[0].mxu0 %v1423
        %v1562 = vpop.f32.mrb[0].mxu0
        %v1563 = vadd.f32 %v1419, %v1562
        %v1564 = vpop.f32.mrb[0].mxu0
        %1565 = vdwg.mxu0
        %s1566 = scalar_lea.vmem %s1, 64
        %v1567 = vld [vmem:[%s1566] sm:$0xff]
        %v1569 = vsel %vm349, %v1567, 0
        %1571 = vmatprep.subr.mxu0 %v659
        %1572 = vmatpush1.msra.mxu0 %v657
        %1573 = vmatprep.subr.mxu0 0.0
        %1574 = vmatpush1.msra.mxu0 0.0
        %1575 = vmatprep.subr.mxu0 0.0
        %1576 = vmatpush1.msra.mxu0 0.0
        %1577 = vmatprep.subr.mxu0 0.0
        %1578 = vmatpush1.msra.mxu0 0.0
        %1579 = vmatprep.subr.mxu0 0.0
        %1580 = vmatpush1.msra.mxu0 0.0
        %1581 = vmatprep.subr.mxu0 0.0
        %1582 = vmatpush1.msra.mxu0 0.0
        %1583 = vmatprep.subr.mxu0 0.0
        %1584 = vmatpush1.msra.mxu0 0.0
        %1585 = vmatprep.subr.mxu0 0.0
        %1586 = vmatpush1.msra.mxu0 0.0
        %1587 = vmatprep.subr.mxu0 0.0
        %1588 = vmatpush1.msra.mxu0 0.0
        %1589 = vmatprep.subr.mxu0 0.0
        %1590 = vmatpush1.msra.mxu0 0.0
        %1591 = vmatprep.subr.mxu0 0.0
        %1592 = vmatpush1.msra.mxu0 0.0
        %1593 = vmatprep.subr.mxu0 0.0
        %1594 = vmatpush1.msra.mxu0 0.0
        %1595 = vmatprep.subr.mxu0 0.0
        %1596 = vmatpush1.msra.mxu0 0.0
        %1597 = vmatprep.subr.mxu0 0.0
        %1598 = vmatpush1.msra.mxu0 0.0
        %1599 = vmatprep.subr.mxu0 0.0
        %1600 = vmatpush1.msra.mxu0 0.0
        %1601 = vmatprep.subr.mxu0 0.0
        %1602 = vmatpush1.msra.mxu0 0.0
        %1603 = vmatprep.subr.mxu0 0.0
        %1604 = vmatpush1.msra.mxu0 0.0
        %1605 = vmatprep.subr.mxu0 0.0
        %1606 = vmatpush1.msra.mxu0 0.0
        %1607 = vmatprep.subr.mxu0 0.0
        %1608 = vmatpush1.msra.mxu0 0.0
        %1609 = vmatprep.subr.mxu0 0.0
        %1610 = vmatpush1.msra.mxu0 0.0
        %1611 = vmatprep.subr.mxu0 0.0
        %1612 = vmatpush1.msra.mxu0 0.0
        %1613 = vmatprep.subr.mxu0 0.0
        %1614 = vmatpush1.msra.mxu0 0.0
        %1615 = vmatprep.subr.mxu0 0.0
        %1616 = vmatpush1.msra.mxu0 0.0
        %1617 = vmatprep.subr.mxu0 0.0
        %1618 = vmatpush1.msra.mxu0 0.0
        %1619 = vmatprep.subr.mxu0 0.0
        %1620 = vmatpush1.msra.mxu0 0.0
        %1621 = vmatprep.subr.mxu0 0.0
        %1622 = vmatpush1.msra.mxu0 0.0
        %1623 = vmatprep.subr.mxu0 0.0
        %1624 = vmatpush1.msra.mxu0 0.0
        %1625 = vmatprep.subr.mxu0 0.0
        %1626 = vmatpush1.msra.mxu0 0.0
        %1627 = vmatprep.subr.mxu0 0.0
        %1628 = vmatpush1.msra.mxu0 0.0
        %1629 = vmatprep.subr.mxu0 0.0
        %1630 = vmatpush1.msra.mxu0 0.0
        %1631 = vmatprep.subr.mxu0 0.0
        %1632 = vmatpush1.msra.mxu0 0.0
        %1633 = vmatprep.subr.mxu0 0.0
        %1634 = vmatpush1.msra.mxu0 0.0
        %1635 = vmatprep.mubr.f32.mxu0 0.0
        %1636 = vmatmul.mubr.f32.gmra.mrb[0].mxu0 %v1569
        %v1637 = vpop.f32.mrb[0].mxu0
        %v1638 = vadd.f32 0.0, %v1637
        %v1639 = vpop.f32.mrb[0].mxu0
        %v1640 = vadd.f32 0.0, %v1639
        %1641 = vdwg.mxu0
        %1642 = vmatprep.subr.mxu0 0.0
        %1643 = vmatpush1.msra.mxu0 %v662
        %1644 = vmatprep.subr.mxu0 0.0
        %1645 = vmatpush1.msra.mxu0 0.0
        %1646 = vmatprep.subr.mxu0 0.0
        %1647 = vmatpush1.msra.mxu0 0.0
        %1648 = vmatprep.subr.mxu0 0.0
        %1649 = vmatpush1.msra.mxu0 0.0
        %1650 = vmatprep.subr.mxu0 0.0
        %1651 = vmatpush1.msra.mxu0 0.0
        %1652 = vmatprep.subr.mxu0 0.0
        %1653 = vmatpush1.msra.mxu0 0.0
        %1654 = vmatprep.subr.mxu0 0.0
        %1655 = vmatpush1.msra.mxu0 0.0
        %1656 = vmatprep.subr.mxu0 0.0
        %1657 = vmatpush1.msra.mxu0 0.0
        %1658 = vmatprep.subr.mxu0 0.0
        %1659 = vmatpush1.msra.mxu0 0.0
        %1660 = vmatprep.subr.mxu0 0.0
        %1661 = vmatpush1.msra.mxu0 0.0
        %1662 = vmatprep.subr.mxu0 0.0
        %1663 = vmatpush1.msra.mxu0 0.0
        %1664 = vmatprep.subr.mxu0 0.0
        %1665 = vmatpush1.msra.mxu0 0.0
        %1666 = vmatprep.subr.mxu0 0.0
        %1667 = vmatpush1.msra.mxu0 0.0
        %1668 = vmatprep.subr.mxu0 0.0
        %1669 = vmatpush1.msra.mxu0 0.0
        %1670 = vmatprep.subr.mxu0 0.0
        %1671 = vmatpush1.msra.mxu0 0.0
        %1672 = vmatprep.subr.mxu0 0.0
        %1673 = vmatpush1.msra.mxu0 0.0
        %1674 = vmatprep.subr.mxu0 0.0
        %1675 = vmatpush1.msra.mxu0 0.0
        %1676 = vmatprep.subr.mxu0 0.0
        %1677 = vmatpush1.msra.mxu0 0.0
        %1678 = vmatprep.subr.mxu0 0.0
        %1679 = vmatpush1.msra.mxu0 0.0
        %1680 = vmatprep.subr.mxu0 0.0
        %1681 = vmatpush1.msra.mxu0 0.0
        %1682 = vmatprep.subr.mxu0 0.0
        %1683 = vmatpush1.msra.mxu0 0.0
        %1684 = vmatprep.subr.mxu0 0.0
        %1685 = vmatpush1.msra.mxu0 0.0
        %1686 = vmatprep.subr.mxu0 0.0
        %1687 = vmatpush1.msra.mxu0 0.0
        %1688 = vmatprep.subr.mxu0 0.0
        %1689 = vmatpush1.msra.mxu0 0.0
        %1690 = vmatprep.subr.mxu0 0.0
        %1691 = vmatpush1.msra.mxu0 0.0
        %1692 = vmatprep.subr.mxu0 0.0
        %1693 = vmatpush1.msra.mxu0 0.0
        %1694 = vmatprep.subr.mxu0 0.0
        %1695 = vmatpush1.msra.mxu0 0.0
        %1696 = vmatprep.subr.mxu0 0.0
        %1697 = vmatpush1.msra.mxu0 0.0
        %1698 = vmatprep.subr.mxu0 0.0
        %1699 = vmatpush1.msra.mxu0 0.0
        %1700 = vmatprep.subr.mxu0 0.0
        %1701 = vmatpush1.msra.mxu0 0.0
        %1702 = vmatprep.subr.mxu0 0.0
        %1703 = vmatpush1.msra.mxu0 0.0
        %1704 = vmatprep.subr.mxu0 0.0
        %1705 = vmatpush1.msra.mxu0 0.0
        %1706 = vmatprep.mubr.f32.mxu0 0.0
        %1707 = vmatmul.mubr.f32.gmra.mrb[0].mxu0 %v1569
        %v1708 = vpop.f32.mrb[0].mxu0
        %v1709 = vadd.f32 0.0, %v1708
        %v1710 = vpop.f32.mrb[0].mxu0
        %1711 = vdwg.mxu0
        %v1712 = vadd.f32 %v1492, %v1638
        %v1713 = vadd.f32 %v1494, %v1640
        %v1714 = vadd.f32 %v1563, %v1709
        %1718 = vrot.lane.b32.xlu0 %v1712, 110
        %v1719 = vpop.permute.xlu0 %1718
        %1720 = vrot.lane.b32.xlu0 %v1713, 110
        %v1721 = vpop.permute.xlu0 %1720
        %1722 = vrot.lane.b32.xlu0 %v1714, 110
        %v1723 = vpop.permute.xlu0 %1722
        %vm1724 = vcmask 900096
        %v1725 = vsel %vm1724, %v1719, %v1721
        %v1726 = vsel %vm1724, %v1721, %v1723
        %1730 = vrot.lane.b32.xlu0 %v1712, 50
        %v1731 = vpop.permute.xlu0 %1730
        %vm1733 = vcmask 408576
        %v1734 = vsel %vm1733, %v1723, %v1731
        %v1735 = vadd.f32 %v1271, %v1725
        %v1736 = vadd.f32 %v1272, %v1726
        %v1737 = vadd.f32 %v1273, %v1734
        %v1740 = vmul.f32 %v1735, %v300
        %v1741 = vmul.f32 %v1736, %v304
        %v1742 = vmul.f32 %v1737, %v308
        %vm1743 = vcmask 1045504
        %v1744 = vsel %vm1743, %v1740, 0.0
        %v1745 = vsel %vm1743, %v1741, 0.0
        %v1746 = vadd.f32 %v1744, %v1745
        %vm1747 = vcmask 553984
        %v1748 = vsel %vm1747, %v1742, 0.0
        %v1749 = vadd.f32 %v1746, %v1748
        %1750 = vadd.xlane.f32.xlu0 %v1749
        %v1751 = vpop.xlane.xlu0 %1750
        %v1752 = vmul.f32 %v1740, %v1740
        %v1753 = vmul.f32 %v1741, %v1741
        %v1754 = vmul.f32 %v1742, %v1742
        %v1755 = vsel %vm1743, %v1752, 0.0
        %v1756 = vsel %vm1743, %v1753, 0.0
        %v1757 = vadd.f32 %v1755, %v1756
        %v1758 = vsel %vm1747, %v1754, 0.0
        %v1759 = vadd.f32 %v1757, %v1758
        %1760 = vadd.xlane.f32.xlu0 %v1759
        %v1761 = vpop.xlane.xlu0 %1760
        %v1762 = vlaneseq
        %v1763 = vand.u32 %v1762, 127
        %vm1764 = vcmp.eq.s32.totalorder %v1763, 0
        %v1765 = vsel %vm1764, %v1751, %v1761
        %vm1766 = vcmask 13312
        %1767 = vst.msk [vmem:[%s252] sm:$0x3f] %vm1766, %v1765
        %1768 = vst [vmem:[%s262] sm:$0x3f] %v1740
        %1769 = vst [vmem:[%s262 + $0x8] sm:$0x3f] %v1741
        %1770 = vst.msk [vmem:[%s262 + $0x10] sm:$0x3f] %vm1747, %v1742
        %p1771 = scmp.lt.s32.totalorder %s21, 1
        %s1772 = scalar_select %p1771, %s21, 1
        %s1773 = smul.addr %s1772, 3
        %s1774 = smul.addr %s1773, 8
        %s1775 = scalar_lea.vmem %s5, %s1774
        %s1776 = sand.u32 %s165, 1
        %s1777 = scalar_lea.sflag [#allocation3], %s1776
        %s1778 = sand.u32 %s165, 1
        %s1779 = smul.addr %s1778, 8
        %s1780 = scalar_lea.vmem [#allocation2], %s1779
        // Predicated region
        $region41: #{dncnn_pallas.10} parent=39 // pred_check
          %p1781 = pneg %p149
        $region42: #{dncnn_pallas.10} parent=39 // pred_check_branch
          %1783 = sbr.rel (%p1781) target = $region44
        $region43: #{dncnn_pallas.10} parent=39 // pred_region
          _
        $region44: #{dncnn_pallas.10} parent=39 // pred_fallthru
          _
        // Predicated region
        $region45: #{dncnn_pallas.10} parent=39 // pred_check
          %p1784 = pneg %p175
        $region46: #{dncnn_pallas.10} parent=39 // pred_check_branch
          %1786 = sbr.rel (%p1784) target = $region48
        $region47: #{dncnn_pallas.10} parent=39 // pred_region
          %s1788 = ssub.s32 128, 128
          %1789 = vsyncadd %s1777, %s1788
          %s1790 = smul.addr %s21, 128
          %s1791 = scalar_lea.hbm %s6, %s1790
          %s1793 = sshll.u32 %s1780, 4
          %s1794 = int_to_ptr.vmem [resolvable:$true] %s1793
          %1796 = dma.vmem_to_hbm [thread:$0]  %s1794, 128, %s1791, %s1777
        $region48: #{dncnn_pallas.10} parent=39 // pred_fallthru
          _
      $region40: #{dncnn_pallas.10} parent=5 // pred_fallthru
        _
      %p1797 = scmp.le.s32.totalorder 2, %s16
      // Predicated region
      $region49: #{dncnn_pallas.10} parent=5 // pred_check
        %p1798 = pneg %p1797
      $region50: #{dncnn_pallas.10} parent=5 // pred_check_branch
        %1800 = sbr.rel (%p1798) target = $region52
      $region51: #{dncnn_pallas.10} parent=5 // pred_region
        %s1801 = ssub.s32 %s16, 2
        // Predicated region
        $region53: #{dncnn_pallas.10} parent=51 // pred_check
          %p1802 = pneg %p155
        $region54: #{dncnn_pallas.10} parent=51 // pred_check_branch
          %1804 = sbr.rel (%p1802) target = $region56
        $region55: #{dncnn_pallas.10} parent=51 // pred_region
          %p1805 = scmp.lt.s32.totalorder %s22, 1
          %s1806 = scalar_select %p1805, %s22, 1
          %s1807 = smul.addr %s1806, 3
          %s1808 = smul.addr %s1807, 8
          %s1809 = scalar_lea.vmem %s5, %s1808
        $region56: #{dncnn_pallas.10} parent=51 // pred_fallthru
          _
        // Predicated region
        $region57: #{dncnn_pallas.10} parent=51 // pred_check
          %p1810 = pneg %p181
        $region58: #{dncnn_pallas.10} parent=51 // pred_check_branch
          %1812 = sbr.rel (%p1810) target = $region60
        $region59: #{dncnn_pallas.10} parent=51 // pred_region
          %s1813 = sand.u32 %s166, 1
          %s1814 = scalar_lea.sflag [#allocation3], %s1813
          %s1815 = sand.u32 %s166, 1
          %s1816 = smul.addr %s1815, 8
          %s1817 = scalar_lea.vmem [#allocation2], %s1816
          %1818 = dma.done %s1814, 128
        $region60: #{dncnn_pallas.10} parent=51 // pred_fallthru
          _
      $region52: #{dncnn_pallas.10} parent=5 // pred_fallthru
        _
    $region6: #{dncnn_pallas.10} parent=1 // loop_footer
      %s20 = sadd.s32 1, %s16
    $region7: #{dncnn_pallas.10} parent=1 // loop_footer_branch
      %15 = sbr.rel target = $region3
    $region8: #{dncnn_pallas.10} parent=1 // loop_exit
      _
    %1819 = vsyncpa [#allocation3], 1
    %s1820 = scalar_lea.sflag [#allocation3], 1
    %1821 = vsyncpa %s1820, 1

// kernel: dncnn_pallas.11
$region0: #{dncnn_pallas.11}
  #allocation0 [shape = 'u32[]', space=smem, size = 0x4, offset = 0x4, fixed_abs, tag = 'smem constant byte address 0x4 - core index']
  #allocation1 [shape = 'u32[144,128]{1,0:T(1,128)}', space=vmem, size = 0x12000, scoped, tag = 'internal scratch']
  %s0 = inlined_call_operand.vmem [shape: f32[2,6,324], index: 0, kind: input, shape index: {}]
  %s1 = inlined_call_operand.vmem [shape: f32[9,8,6], index: 1, kind: input, shape index: {}]
  %s2 = inlined_call_operand.vmem [shape: f32[6,1], index: 2, kind: input, shape index: {}]
  %s3 = inlined_call_operand.vmem [shape: f32[6,1], index: 3, kind: input, shape index: {}]
  %s4 = inlined_call_operand.vmem [shape: f32[1,324], index: 4, kind: input, shape index: {}]
  %s5 = inlined_call_operand.vmem [shape: f32[2,6,324], index: 5, kind: output, shape index: {0}]
  %s6 = inlined_call_operand.vmem [shape: f32[2,6,2], index: 6, kind: output, shape index: {1}]
  %7 = xla_tuple %s5, %s6
  %s8 = sld [smem:[#allocation0]]
  $region61: #{dncnn_pallas.11} parent=0
    _
  %s10 = ssub.s32 1, %s8
  %s11 = scalar_select 0, %s10, %s8
  loop: start=0, step=1, limit=4
  $region2: #{dncnn_pallas.11} parent=0 // loop_pre_header
    _
  $region3: #{dncnn_pallas.11} parent=0 // loop_header
    %s13 = sphi 0, %s17
    %p14 = scmp.ge.s32.totalorder %s13, 4
    %s23 = sphi 0, %s25
    %s26 = sphi 0, %s23
    %s27 = sphi 0, %s26
    %s43 = sphi 0, %s27
    %s47 = sphi 0, %s47
    %s49 = sphi 0, %s47
    %s50 = sphi 0, %s49
    %s64 = sphi 0, %s50
    %s68 = sphi 0, %s68
    %s70 = sphi 0, %s68
    %s71 = sphi 0, %s70
    %s85 = sphi 0, %s71
    %s89 = sphi 0, %s89
    %s91 = sphi 0, %s89
    %s92 = sphi 0, %s91
    %s106 = sphi 0, %s92
    %s110 = sphi 0, %s110
    %s112 = sphi 0, %s110
    %s113 = sphi 0, %s112
    %s127 = sphi 0, %s113
    %s133 = sphi 0, %s135
    %s136 = sphi 0, %s133
    %s137 = sphi 0, %s136
    %s153 = sphi 0, %s137
    %s159 = sphi 0, %s161
    %s162 = sphi 0, %s159
    %s163 = sphi 0, %s162
    %s179 = sphi 0, %s163
  $region4: #{dncnn_pallas.11} parent=0 // loop_header_branch
    %16 = sbr.rel (%p14) target = $region8
  $region5: #{dncnn_pallas.11} parent=0 // loop_body
    %s18 = ssub.s32 %s13, 1
    %s19 = ssub.s32 %s13, 2
    %s20 = sadd.s32 %s13, 1
    %s21 = ssub.s32 %s13, %s20
    %p22 = scmp.eq.s32.totalorder %s21, 0
    %s24 = sadd.s32 %s23, 1
    %s25 = scalar_select %p22, %s23, %s24
    %p28 = pneg %p22
    %p29 = scmp.eq.s32.totalorder %s13, 1
    %p30 = por %p28, %p29
    %p31 = scmp.ne.s32.totalorder %s23, %s26
    %p32 = scmp.eq.s32.totalorder %s13, 0
    %p33 = por %p31, %p32
    %p34 = scmp.ne.s32.totalorder %s23, %s26
    %p35 = scmp.eq.s32.totalorder %s18, 1
    %p36 = por %p34, %p35
    %p37 = scmp.ne.s32.totalorder %s26, %s27
    %p38 = scmp.eq.s32.totalorder %s18, 0
    %p39 = por %p37, %p38
    %p40 = scmp.ne.s32.totalorder %s26, %s27
    %p41 = scmp.eq.s32.totalorder %s19, 1
    %p42 = por %p40, %p41
    %p44 = scmp.ne.s32.totalorder %s27, %s43
    %p45 = scmp.eq.s32.totalorder %s19, 0
    %p46 = por %p44, %p45
    %s48 = sadd.s32 %s47, 1
    %p51 = scmp.eq.s32.totalorder %s13, 1
    %p52 = scmp.ne.s32.totalorder %s47, %s49
    %p53 = scmp.eq.s32.totalorder %s13, 0
    %p54 = por %p52, %p53
    %p55 = scmp.ne.s32.totalorder %s47, %s49
    %p56 = scmp.eq.s32.totalorder %s18, 1
    %p57 = por %p55, %p56
    %p58 = scmp.ne.s32.totalorder %s49, %s50
    %p59 = scmp.eq.s32.totalorder %s18, 0
    %p60 = por %p58, %p59
    %p61 = scmp.ne.s32.totalorder %s49, %s50
    %p62 = scmp.eq.s32.totalorder %s19, 1
    %p63 = por %p61, %p62
    %p65 = scmp.ne.s32.totalorder %s50, %s64
    %p66 = scmp.eq.s32.totalorder %s19, 0
    %p67 = por %p65, %p66
    %s69 = sadd.s32 %s68, 1
    %p72 = scmp.eq.s32.totalorder %s13, 1
    %p73 = scmp.ne.s32.totalorder %s68, %s70
    %p74 = scmp.eq.s32.totalorder %s13, 0
    %p75 = por %p73, %p74
    %p76 = scmp.ne.s32.totalorder %s68, %s70
    %p77 = scmp.eq.s32.totalorder %s18, 1
    %p78 = por %p76, %p77
    %p79 = scmp.ne.s32.totalorder %s70, %s71
    %p80 = scmp.eq.s32.totalorder %s18, 0
    %p81 = por %p79, %p80
    %p82 = scmp.ne.s32.totalorder %s70, %s71
    %p83 = scmp.eq.s32.totalorder %s19, 1
    %p84 = por %p82, %p83
    %p86 = scmp.ne.s32.totalorder %s71, %s85
    %p87 = scmp.eq.s32.totalorder %s19, 0
    %p88 = por %p86, %p87
    %s90 = sadd.s32 %s89, 1
    %p93 = scmp.eq.s32.totalorder %s13, 1
    %p94 = scmp.ne.s32.totalorder %s89, %s91
    %p95 = scmp.eq.s32.totalorder %s13, 0
    %p96 = por %p94, %p95
    %p97 = scmp.ne.s32.totalorder %s89, %s91
    %p98 = scmp.eq.s32.totalorder %s18, 1
    %p99 = por %p97, %p98
    %p100 = scmp.ne.s32.totalorder %s91, %s92
    %p101 = scmp.eq.s32.totalorder %s18, 0
    %p102 = por %p100, %p101
    %p103 = scmp.ne.s32.totalorder %s91, %s92
    %p104 = scmp.eq.s32.totalorder %s19, 1
    %p105 = por %p103, %p104
    %p107 = scmp.ne.s32.totalorder %s92, %s106
    %p108 = scmp.eq.s32.totalorder %s19, 0
    %p109 = por %p107, %p108
    %s111 = sadd.s32 %s110, 1
    %p114 = scmp.eq.s32.totalorder %s13, 1
    %p115 = scmp.ne.s32.totalorder %s110, %s112
    %p116 = scmp.eq.s32.totalorder %s13, 0
    %p117 = por %p115, %p116
    %p118 = scmp.ne.s32.totalorder %s110, %s112
    %p119 = scmp.eq.s32.totalorder %s18, 1
    %p120 = por %p118, %p119
    %p121 = scmp.ne.s32.totalorder %s112, %s113
    %p122 = scmp.eq.s32.totalorder %s18, 0
    %p123 = por %p121, %p122
    %p124 = scmp.ne.s32.totalorder %s112, %s113
    %p125 = scmp.eq.s32.totalorder %s19, 1
    %p126 = por %p124, %p125
    %p128 = scmp.ne.s32.totalorder %s113, %s127
    %p129 = scmp.eq.s32.totalorder %s19, 0
    %p130 = por %p128, %p129
    %s131 = ssub.s32 %s13, %s20
    %p132 = scmp.eq.s32.totalorder %s131, 0
    %s134 = sadd.s32 %s133, 1
    %s135 = scalar_select %p132, %s133, %s134
    %p138 = pneg %p132
    %p139 = scmp.eq.s32.totalorder %s13, 1
    %p140 = por %p138, %p139
    %p141 = scmp.ne.s32.totalorder %s133, %s136
    %p142 = scmp.eq.s32.totalorder %s13, 0
    %p143 = por %p141, %p142
    %p144 = scmp.ne.s32.totalorder %s133, %s136
    %p145 = scmp.eq.s32.totalorder %s18, 1
    %p146 = por %p144, %p145
    %p147 = scmp.ne.s32.totalorder %s136, %s137
    %p148 = scmp.eq.s32.totalorder %s18, 0
    %p149 = por %p147, %p148
    %p150 = scmp.ne.s32.totalorder %s136, %s137
    %p151 = scmp.eq.s32.totalorder %s19, 1
    %p152 = por %p150, %p151
    %p154 = scmp.ne.s32.totalorder %s137, %s153
    %p155 = scmp.eq.s32.totalorder %s19, 0
    %p156 = por %p154, %p155
    %s157 = ssub.s32 %s13, %s20
    %p158 = scmp.eq.s32.totalorder %s157, 0
    %s160 = sadd.s32 %s159, 1
    %s161 = scalar_select %p158, %s159, %s160
    %p164 = pneg %p158
    %p165 = scmp.eq.s32.totalorder %s13, 1
    %p166 = por %p164, %p165
    %p167 = scmp.ne.s32.totalorder %s159, %s162
    %p168 = scmp.eq.s32.totalorder %s13, 0
    %p169 = por %p167, %p168
    %p170 = scmp.ne.s32.totalorder %s159, %s162
    %p171 = scmp.eq.s32.totalorder %s18, 1
    %p172 = por %p170, %p171
    %p173 = scmp.ne.s32.totalorder %s162, %s163
    %p174 = scmp.eq.s32.totalorder %s18, 0
    %p175 = por %p173, %p174
    %p176 = scmp.ne.s32.totalorder %s162, %s163
    %p177 = scmp.eq.s32.totalorder %s19, 1
    %p178 = por %p176, %p177
    %p180 = scmp.ne.s32.totalorder %s163, %s179
    %p181 = scmp.eq.s32.totalorder %s19, 0
    %p182 = por %p180, %p181
    %p183 = scmp.le.s32.totalorder 1, %s13
    %p184 = scmp.lt.s32.totalorder %s13, 3
    %p185 = pnand %p183, %p184
    %p186 = pneg %p185
    // Predicated region
    $region9: #{dncnn_pallas.11} parent=5 // pred_check
      _
    $region10: #{dncnn_pallas.11} parent=5 // pred_check_branch
      %188 = sbr.rel (%p185) target = $region12
    $region11: #{dncnn_pallas.11} parent=5 // pred_region
      %s189 = ssub.s32 %s13, 1
      // Predicated region
      $region13: #{dncnn_pallas.11} parent=11 // pred_check
        %p190 = pneg %p60
      $region14: #{dncnn_pallas.11} parent=11 // pred_check_branch
        %192 = sbr.rel (%p190) target = $region16
      $region15: #{dncnn_pallas.11} parent=11 // pred_region
        _
      $region16: #{dncnn_pallas.11} parent=11 // pred_fallthru
        _
      // Predicated region
      $region17: #{dncnn_pallas.11} parent=11 // pred_check
        %p193 = pneg %p81
      $region18: #{dncnn_pallas.11} parent=11 // pred_check_branch
        %195 = sbr.rel (%p193) target = $region20
      $region19: #{dncnn_pallas.11} parent=11 // pred_region
        _
      $region20: #{dncnn_pallas.11} parent=11 // pred_fallthru
        _
      // Predicated region
      $region21: #{dncnn_pallas.11} parent=11 // pred_check
        %p196 = pneg %p102
      $region22: #{dncnn_pallas.11} parent=11 // pred_check_branch
        %198 = sbr.rel (%p196) target = $region24
      $region23: #{dncnn_pallas.11} parent=11 // pred_region
        _
      $region24: #{dncnn_pallas.11} parent=11 // pred_fallthru
        _
      // Predicated region
      $region25: #{dncnn_pallas.11} parent=11 // pred_check
        %p199 = pneg %p123
      $region26: #{dncnn_pallas.11} parent=11 // pred_check_branch
        %201 = sbr.rel (%p199) target = $region28
      $region27: #{dncnn_pallas.11} parent=11 // pred_region
        _
      $region28: #{dncnn_pallas.11} parent=11 // pred_fallthru
        _
    $region12: #{dncnn_pallas.11} parent=5 // pred_fallthru
      _
    %p202 = scmp.lt.s32.totalorder %s13, 2
    // Predicated region
    $region29: #{dncnn_pallas.11} parent=5 // pred_check
      %p203 = pneg %p202
    $region30: #{dncnn_pallas.11} parent=5 // pred_check_branch
      %205 = sbr.rel (%p203) target = $region32
    $region31: #{dncnn_pallas.11} parent=5 // pred_region
      // Predicated region
      $region33: #{dncnn_pallas.11} parent=31 // pred_check
        %p206 = pneg %p33
      $region34: #{dncnn_pallas.11} parent=31 // pred_check_branch
        %208 = sbr.rel (%p206) target = $region36
      $region35: #{dncnn_pallas.11} parent=31 // pred_region
        %p209 = scmp.lt.s32.totalorder %s13, 1
        %s210 = scalar_select %p209, %s13, 1
        %s211 = smul.addr %s210, 3
        %s212 = smul.addr %s211, 8
        %s213 = scalar_lea.vmem %s0, %s212
      $region36: #{dncnn_pallas.11} parent=31 // pred_fallthru
        _
    $region32: #{dncnn_pallas.11} parent=5 // pred_fallthru
      _
    %p214 = scmp.le.s32.totalorder 1, %s13
    %p215 = scmp.lt.s32.totalorder %s13, 3
    %p216 = pnand %p214, %p215
    %p217 = pneg %p216
    // Predicated region
    $region37: #{dncnn_pallas.11} parent=5 // pred_check
      _
    $region38: #{dncnn_pallas.11} parent=5 // pred_check_branch
      %219 = sbr.rel (%p216) target = $region40
    $region39: #{dncnn_pallas.11} parent=5 // pred_region
      %s220 = ssub.s32 %s13, 1
      %p221 = scmp.lt.s32.totalorder %s18, 1
      %s222 = scalar_select %p221, %s18, 1
      %s223 = smul.addr %s222, 3
      %s224 = smul.addr %s223, 8
      %s225 = scalar_lea.vmem %s0, %s224
      %p226 = pneg %p39
      %p227 = pneg %p36
      %p228 = pneg %p60
      %p229 = pneg %p57
      %p230 = pneg %p81
      %p231 = pneg %p78
      %p232 = pneg %p102
      %p233 = pneg %p99
      %p234 = pneg %p123
      %p235 = pneg %p120
      %p236 = pneg %p149
      %p237 = pneg %p146
      %p238 = scmp.lt.s32.totalorder %s18, 1
      %s239 = scalar_select %p238, %s18, 1
      %s240 = smul.addr %s239, 3
      %s241 = smul.addr %s240, 8
      %s242 = scalar_lea.vmem %s5, %s241
      %p243 = pneg %p175
      %p244 = pneg %p172
      %p245 = scmp.lt.s32.totalorder %s18, 1
      %s246 = scalar_select %p245, %s18, 1
      %s247 = smul.addr %s246, 8
      %s248 = scalar_lea.vmem %s6, %s247
      %p249 = scmp.lt.s32.totalorder %s18, 1
      %s250 = scalar_select %p249, %s18, 1
      %s251 = smul.addr %s250, 3
      %s252 = smul.addr %s251, 8
      %s253 = scalar_lea.vmem %s0, %s252
      %p254 = scmp.lt.s32.totalorder %s18, 1
      %s255 = scalar_select %p254, %s18, 1
      %s256 = smul.addr %s255, 3
      %s257 = smul.addr %s256, 8
      %s258 = scalar_lea.vmem %s5, %s257
      %p259 = scmp.lt.s32.totalorder %s18, 1
      %s260 = scalar_select %p259, %s18, 1
      %s261 = smul.addr %s260, 8
      %s262 = scalar_lea.vmem %s6, %s261
      %v263 = vld [vmem:[%s4] sm:$0x7]
      %v264 = vld [vmem:[%s253] sm:$0x3f]
      %v265 = vld [vmem:[%s253 + $0x8] sm:$0x3f]
      %v266 = vld [vmem:[%s253 + $0x10] sm:$0x3f]
      %v267 = vld [vmem:[%s2] sm:$0x3f]
      %269 = vset.pattern.permute.xlu0 0
      %270 = vperm.xlu0 %269, %v267
      %v271 = vpop.permute.xlu0 %270
      %v273 = vmul.f32 %v264, %v271
      %v274 = vmul.f32 %v265, %v271
      %v275 = vmul.f32 %v266, %v271
      %v276 = vld [vmem:[%s3] sm:$0x3f]
      %278 = vset.pattern.permute.xlu0 0
      %279 = vperm.xlu0 %278, %v276
      %v280 = vpop.permute.xlu0 %279
      %v282 = vadd.f32 %v273, %v280
      %v283 = vadd.f32 %v274, %v280
      %v284 = vadd.f32 %v275, %v280
      %v285 = vmax.f32 %v282, 0.0
      %v286 = vmax.f32 %v283, 0.0
      %v287 = vmax.f32 %v284, 0.0
      %v289 = vlaneseq
      %v290 = vshrl.u32 %v289, 7
      %v291 = vsub.s32 0, %v290
      %v292 = vrot.slane %v263, %v291
      %v293 = vlaneseq
      %v294 = vshrl.u32 %v293, 7
      %v295 = vsub.s32 1, %v294
      %v296 = vrot.slane %v263, %v295
      %v297 = vlaneseq
      %v298 = vshrl.u32 %v297, 7
      %v299 = vsub.s32 2, %v298
      %v300 = vrot.slane %v263, %v299
      %v304 = vmul.f32 %v285, %v292
      %v305 = vmul.f32 %v286, %v296
      %v306 = vmul.f32 %v287, %v300
      %308 = vrot.lane.b32.xlu0 %v306, 61
      %v309 = vpop.permute.xlu0 %308
      %313 = vrot.lane.b32.xlu0 %v304, 1
      %v314 = vpop.permute.xlu0 %313
      %315 = vrot.lane.b32.xlu0 %v305, 1
      %v316 = vpop.permute.xlu0 %315
      %317 = vrot.lane.b32.xlu0 %v306, 1
      %v318 = vpop.permute.xlu0 %317
      %vm319 = vcmask 7168
      %v320 = vsel %vm319, %v314, %v316
      %v321 = vsel %vm319, %v316, %v318
      %v323 = vsel %vm319, %v309, %v314
      %324 = vrot.lane.b32.xlu0 %v304, 127
      %v325 = vpop.permute.xlu0 %324
      %326 = vrot.lane.b32.xlu0 %v305, 127
      %v327 = vpop.permute.xlu0 %326
      %328 = vrot.lane.b32.xlu0 %v306, 127
      %v329 = vpop.permute.xlu0 %328
      %vm330 = vcmask 1039360
      %v331 = vsel %vm330, %v325, %v327
      %v332 = vsel %vm330, %v327, %v329
      %334 = vrot.lane.b32.xlu0 %v304, 67
      %v335 = vpop.permute.xlu0 %334
      %vm337 = vcmask 547840
      %v338 = vsel %vm337, %v329, %v335
      %v339 = vld [vmem:[%s1] sm:$0xff]
      %s340 = scalar_lea.vmem %s1, 8
      %v341 = vld [vmem:[%s340] sm:$0xff]
      %vm342 = vcmask 48128
      %v344 = vsel %vm342, %v341, 0
      %vm346 = vcmask 1045504
      %v347 = vsel %vm346, %v304, 0
      %v349 = vsel %vm346, %v305, 0
      %v351 = vsel %vm346, %v306, 0
      %353 = vmatprep.subr.mxu0 %v349
      %354 = vmatpush1.msra.mxu0 %v347
      %355 = vmatprep.subr.mxu0 0.0
      %356 = vmatpush1.msra.mxu0 0.0
      %357 = vmatprep.subr.mxu0 0.0
      %358 = vmatpush1.msra.mxu0 0.0
      %359 = vmatprep.subr.mxu0 0.0
      %360 = vmatpush1.msra.mxu0 0.0
      %361 = vmatprep.subr.mxu0 0.0
      %362 = vmatpush1.msra.mxu0 0.0
      %363 = vmatprep.subr.mxu0 0.0
      %364 = vmatpush1.msra.mxu0 0.0
      %365 = vmatprep.subr.mxu0 0.0
      %366 = vmatpush1.msra.mxu0 0.0
      %367 = vmatprep.subr.mxu0 0.0
      %368 = vmatpush1.msra.mxu0 0.0
      %369 = vmatprep.subr.mxu0 0.0
      %370 = vmatpush1.msra.mxu0 0.0
      %371 = vmatprep.subr.mxu0 0.0
      %372 = vmatpush1.msra.mxu0 0.0
      %373 = vmatprep.subr.mxu0 0.0
      %374 = vmatpush1.msra.mxu0 0.0
      %375 = vmatprep.subr.mxu0 0.0
      %376 = vmatpush1.msra.mxu0 0.0
      %377 = vmatprep.subr.mxu0 0.0
      %378 = vmatpush1.msra.mxu0 0.0
      %379 = vmatprep.subr.mxu0 0.0
      %380 = vmatpush1.msra.mxu0 0.0
      %381 = vmatprep.subr.mxu0 0.0
      %382 = vmatpush1.msra.mxu0 0.0
      %383 = vmatprep.subr.mxu0 0.0
      %384 = vmatpush1.msra.mxu0 0.0
      %385 = vmatprep.subr.mxu0 0.0
      %386 = vmatpush1.msra.mxu0 0.0
      %387 = vmatprep.subr.mxu0 0.0
      %388 = vmatpush1.msra.mxu0 0.0
      %389 = vmatprep.subr.mxu0 0.0
      %390 = vmatpush1.msra.mxu0 0.0
      %391 = vmatprep.subr.mxu0 0.0
      %392 = vmatpush1.msra.mxu0 0.0
      %393 = vmatprep.subr.mxu0 0.0
      %394 = vmatpush1.msra.mxu0 0.0
      %395 = vmatprep.subr.mxu0 0.0
      %396 = vmatpush1.msra.mxu0 0.0
      %397 = vmatprep.subr.mxu0 0.0
      %398 = vmatpush1.msra.mxu0 0.0
      %399 = vmatprep.subr.mxu0 0.0
      %400 = vmatpush1.msra.mxu0 0.0
      %401 = vmatprep.subr.mxu0 0.0
      %402 = vmatpush1.msra.mxu0 0.0
      %403 = vmatprep.subr.mxu0 0.0
      %404 = vmatpush1.msra.mxu0 0.0
      %405 = vmatprep.subr.mxu0 0.0
      %406 = vmatpush1.msra.mxu0 0.0
      %407 = vmatprep.subr.mxu0 0.0
      %408 = vmatpush1.msra.mxu0 0.0
      %409 = vmatprep.subr.mxu0 0.0
      %410 = vmatpush1.msra.mxu0 0.0
      %411 = vmatprep.subr.mxu0 0.0
      %412 = vmatpush1.msra.mxu0 0.0
      %413 = vmatprep.subr.mxu0 0.0
      %414 = vmatpush1.msra.mxu0 0.0
      %415 = vmatprep.subr.mxu0 0.0
      %416 = vmatpush1.msra.mxu0 0.0
      %417 = vmatprep.mubr.f32.mxu0 0.0
      %418 = vmatmul.mubr.f32.gmra.mrb[0].mxu0 %v344
      %v419 = vpop.f32.mrb[0].mxu0
      %v420 = vadd.f32 0.0, %v419
      %v421 = vpop.f32.mrb[0].mxu0
      %v422 = vadd.f32 0.0, %v421
      %423 = vdwg.mxu0
      %424 = vmatprep.subr.mxu0 0.0
      %425 = vmatpush1.msra.mxu0 %v351
      %426 = vmatprep.subr.mxu0 0.0
      %427 = vmatpush1.msra.mxu0 0.0
      %428 = vmatprep.subr.mxu0 0.0
      %429 = vmatpush1.msra.mxu0 0.0
      %430 = vmatprep.subr.mxu0 0.0
      %431 = vmatpush1.msra.mxu0 0.0
      %432 = vmatprep.subr.mxu0 0.0
      %433 = vmatpush1.msra.mxu0 0.0
      %434 = vmatprep.subr.mxu0 0.0
      %435 = vmatpush1.msra.mxu0 0.0
      %436 = vmatprep.subr.mxu0 0.0
      %437 = vmatpush1.msra.mxu0 0.0
      %438 = vmatprep.subr.mxu0 0.0
      %439 = vmatpush1.msra.mxu0 0.0
      %440 = vmatprep.subr.mxu0 0.0
      %441 = vmatpush1.msra.mxu0 0.0
      %442 = vmatprep.subr.mxu0 0.0
      %443 = vmatpush1.msra.mxu0 0.0
      %444 = vmatprep.subr.mxu0 0.0
      %445 = vmatpush1.msra.mxu0 0.0
      %446 = vmatprep.subr.mxu0 0.0
      %447 = vmatpush1.msra.mxu0 0.0
      %448 = vmatprep.subr.mxu0 0.0
      %449 = vmatpush1.msra.mxu0 0.0
      %450 = vmatprep.subr.mxu0 0.0
      %451 = vmatpush1.msra.mxu0 0.0
      %452 = vmatprep.subr.mxu0 0.0
      %453 = vmatpush1.msra.mxu0 0.0
      %454 = vmatprep.subr.mxu0 0.0
      %455 = vmatpush1.msra.mxu0 0.0
      %456 = vmatprep.subr.mxu0 0.0
      %457 = vmatpush1.msra.mxu0 0.0
      %458 = vmatprep.subr.mxu0 0.0
      %459 = vmatpush1.msra.mxu0 0.0
      %460 = vmatprep.subr.mxu0 0.0
      %461 = vmatpush1.msra.mxu0 0.0
      %462 = vmatprep.subr.mxu0 0.0
      %463 = vmatpush1.msra.mxu0 0.0
      %464 = vmatprep.subr.mxu0 0.0
      %465 = vmatpush1.msra.mxu0 0.0
      %466 = vmatprep.subr.mxu0 0.0
      %467 = vmatpush1.msra.mxu0 0.0
      %468 = vmatprep.subr.mxu0 0.0
      %469 = vmatpush1.msra.mxu0 0.0
      %470 = vmatprep.subr.mxu0 0.0
      %471 = vmatpush1.msra.mxu0 0.0
      %472 = vmatprep.subr.mxu0 0.0
      %473 = vmatpush1.msra.mxu0 0.0
      %474 = vmatprep.subr.mxu0 0.0
      %475 = vmatpush1.msra.mxu0 0.0
      %476 = vmatprep.subr.mxu0 0.0
      %477 = vmatpush1.msra.mxu0 0.0
      %478 = vmatprep.subr.mxu0 0.0
      %479 = vmatpush1.msra.mxu0 0.0
      %480 = vmatprep.subr.mxu0 0.0
      %481 = vmatpush1.msra.mxu0 0.0
      %482 = vmatprep.subr.mxu0 0.0
      %483 = vmatpush1.msra.mxu0 0.0
      %484 = vmatprep.subr.mxu0 0.0
      %485 = vmatpush1.msra.mxu0 0.0
      %486 = vmatprep.subr.mxu0 0.0
      %487 = vmatpush1.msra.mxu0 0.0
      %488 = vmatprep.mubr.f32.mxu0 0.0
      %489 = vmatmul.mubr.f32.gmra.mrb[0].mxu0 %v344
      %v490 = vpop.f32.mrb[0].mxu0
      %v491 = vadd.f32 0.0, %v490
      %v492 = vpop.f32.mrb[0].mxu0
      %493 = vdwg.mxu0
      %v495 = vsel %vm342, %v339, 0
      %v498 = vsel %vm346, %v323, 0
      %v500 = vsel %vm346, %v320, 0
      %v502 = vsel %vm346, %v321, 0
      %504 = vmatprep.subr.mxu0 %v500
      %505 = vmatpush1.msra.mxu0 %v498
      %506 = vmatprep.subr.mxu0 0.0
      %507 = vmatpush1.msra.mxu0 0.0
      %508 = vmatprep.subr.mxu0 0.0
      %509 = vmatpush1.msra.mxu0 0.0
      %510 = vmatprep.subr.mxu0 0.0
      %511 = vmatpush1.msra.mxu0 0.0
      %512 = vmatprep.subr.mxu0 0.0
      %513 = vmatpush1.msra.mxu0 0.0
      %514 = vmatprep.subr.mxu0 0.0
      %515 = vmatpush1.msra.mxu0 0.0
      %516 = vmatprep.subr.mxu0 0.0
      %517 = vmatpush1.msra.mxu0 0.0
      %518 = vmatprep.subr.mxu0 0.0
      %519 = vmatpush1.msra.mxu0 0.0
      %520 = vmatprep.subr.mxu0 0.0
      %521 = vmatpush1.msra.mxu0 0.0
      %522 = vmatprep.subr.mxu0 0.0
      %523 = vmatpush1.msra.mxu0 0.0
      %524 = vmatprep.subr.mxu0 0.0
      %525 = vmatpush1.msra.mxu0 0.0
      %526 = vmatprep.subr.mxu0 0.0
      %527 = vmatpush1.msra.mxu0 0.0
      %528 = vmatprep.subr.mxu0 0.0
      %529 = vmatpush1.msra.mxu0 0.0
      %530 = vmatprep.subr.mxu0 0.0
      %531 = vmatpush1.msra.mxu0 0.0
      %532 = vmatprep.subr.mxu0 0.0
      %533 = vmatpush1.msra.mxu0 0.0
      %534 = vmatprep.subr.mxu0 0.0
      %535 = vmatpush1.msra.mxu0 0.0
      %536 = vmatprep.subr.mxu0 0.0
      %537 = vmatpush1.msra.mxu0 0.0
      %538 = vmatprep.subr.mxu0 0.0
      %539 = vmatpush1.msra.mxu0 0.0
      %540 = vmatprep.subr.mxu0 0.0
      %541 = vmatpush1.msra.mxu0 0.0
      %542 = vmatprep.subr.mxu0 0.0
      %543 = vmatpush1.msra.mxu0 0.0
      %544 = vmatprep.subr.mxu0 0.0
      %545 = vmatpush1.msra.mxu0 0.0
      %546 = vmatprep.subr.mxu0 0.0
      %547 = vmatpush1.msra.mxu0 0.0
      %548 = vmatprep.subr.mxu0 0.0
      %549 = vmatpush1.msra.mxu0 0.0
      %550 = vmatprep.subr.mxu0 0.0
      %551 = vmatpush1.msra.mxu0 0.0
      %552 = vmatprep.subr.mxu0 0.0
      %553 = vmatpush1.msra.mxu0 0.0
      %554 = vmatprep.subr.mxu0 0.0
      %555 = vmatpush1.msra.mxu0 0.0
      %556 = vmatprep.subr.mxu0 0.0
      %557 = vmatpush1.msra.mxu0 0.0
      %558 = vmatprep.subr.mxu0 0.0
      %559 = vmatpush1.msra.mxu0 0.0
      %560 = vmatprep.subr.mxu0 0.0
      %561 = vmatpush1.msra.mxu0 0.0
      %562 = vmatprep.subr.mxu0 0.0
      %563 = vmatpush1.msra.mxu0 0.0
      %564 = vmatprep.subr.mxu0 0.0
      %565 = vmatpush1.msra.mxu0 0.0
      %566 = vmatprep.subr.mxu0 0.0
      %567 = vmatpush1.msra.mxu0 0.0
      %568 = vmatprep.mubr.f32.mxu0 0.0
      %569 = vmatmul.mubr.f32.gmra.mrb[0].mxu0 %v495
      %v570 = vpop.f32.mrb[0].mxu0
      %v571 = vadd.f32 %v420, %v570
      %v572 = vpop.f32.mrb[0].mxu0
      %v573 = vadd.f32 %v422, %v572
      %574 = vdwg.mxu0
      %575 = vmatprep.subr.mxu0 0.0
      %576 = vmatpush1.msra.mxu0 %v502
      %577 = vmatprep.subr.mxu0 0.0
      %578 = vmatpush1.msra.mxu0 0.0
      %579 = vmatprep.subr.mxu0 0.0
      %580 = vmatpush1.msra.mxu0 0.0
      %581 = vmatprep.subr.mxu0 0.0
      %582 = vmatpush1.msra.mxu0 0.0
      %583 = vmatprep.subr.mxu0 0.0
      %584 = vmatpush1.msra.mxu0 0.0
      %585 = vmatprep.subr.mxu0 0.0
      %586 = vmatpush1.msra.mxu0 0.0
      %587 = vmatprep.subr.mxu0 0.0
      %588 = vmatpush1.msra.mxu0 0.0
      %589 = vmatprep.subr.mxu0 0.0
      %590 = vmatpush1.msra.mxu0 0.0
      %591 = vmatprep.subr.mxu0 0.0
      %592 = vmatpush1.msra.mxu0 0.0
      %593 = vmatprep.subr.mxu0 0.0
      %594 = vmatpush1.msra.mxu0 0.0
      %595 = vmatprep.subr.mxu0 0.0
      %596 = vmatpush1.msra.mxu0 0.0
      %597 = vmatprep.subr.mxu0 0.0
      %598 = vmatpush1.msra.mxu0 0.0
      %599 = vmatprep.subr.mxu0 0.0
      %600 = vmatpush1.msra.mxu0 0.0
      %601 = vmatprep.subr.mxu0 0.0
      %602 = vmatpush1.msra.mxu0 0.0
      %603 = vmatprep.subr.mxu0 0.0
      %604 = vmatpush1.msra.mxu0 0.0
      %605 = vmatprep.subr.mxu0 0.0
      %606 = vmatpush1.msra.mxu0 0.0
      %607 = vmatprep.subr.mxu0 0.0
      %608 = vmatpush1.msra.mxu0 0.0
      %609 = vmatprep.subr.mxu0 0.0
      %610 = vmatpush1.msra.mxu0 0.0
      %611 = vmatprep.subr.mxu0 0.0
      %612 = vmatpush1.msra.mxu0 0.0
      %613 = vmatprep.subr.mxu0 0.0
      %614 = vmatpush1.msra.mxu0 0.0
      %615 = vmatprep.subr.mxu0 0.0
      %616 = vmatpush1.msra.mxu0 0.0
      %617 = vmatprep.subr.mxu0 0.0
      %618 = vmatpush1.msra.mxu0 0.0
      %619 = vmatprep.subr.mxu0 0.0
      %620 = vmatpush1.msra.mxu0 0.0
      %621 = vmatprep.subr.mxu0 0.0
      %622 = vmatpush1.msra.mxu0 0.0
      %623 = vmatprep.subr.mxu0 0.0
      %624 = vmatpush1.msra.mxu0 0.0
      %625 = vmatprep.subr.mxu0 0.0
      %626 = vmatpush1.msra.mxu0 0.0
      %627 = vmatprep.subr.mxu0 0.0
      %628 = vmatpush1.msra.mxu0 0.0
      %629 = vmatprep.subr.mxu0 0.0
      %630 = vmatpush1.msra.mxu0 0.0
      %631 = vmatprep.subr.mxu0 0.0
      %632 = vmatpush1.msra.mxu0 0.0
      %633 = vmatprep.subr.mxu0 0.0
      %634 = vmatpush1.msra.mxu0 0.0
      %635 = vmatprep.subr.mxu0 0.0
      %636 = vmatpush1.msra.mxu0 0.0
      %637 = vmatprep.subr.mxu0 0.0
      %638 = vmatpush1.msra.mxu0 0.0
      %639 = vmatprep.mubr.f32.mxu0 0.0
      %640 = vmatmul.mubr.f32.gmra.mrb[0].mxu0 %v495
      %v641 = vpop.f32.mrb[0].mxu0
      %v642 = vadd.f32 %v491, %v641
      %v643 = vpop.f32.mrb[0].mxu0
      %644 = vdwg.mxu0
      %s645 = scalar_lea.vmem %s1, 16
      %v646 = vld [vmem:[%s645] sm:$0xff]
      %v648 = vsel %vm342, %v646, 0
      %v650 = vsel %vm346, %v331, 0
      %v652 = vsel %vm346, %v332, 0
      %v655 = vsel %vm346, %v338, 0
      %657 = vmatprep.subr.mxu0 %v652
      %658 = vmatpush1.msra.mxu0 %v650
      %659 = vmatprep.subr.mxu0 0.0
      %660 = vmatpush1.msra.mxu0 0.0
      %661 = vmatprep.subr.mxu0 0.0
      %662 = vmatpush1.msra.mxu0 0.0
      %663 = vmatprep.subr.mxu0 0.0
      %664 = vmatpush1.msra.mxu0 0.0
      %665 = vmatprep.subr.mxu0 0.0
      %666 = vmatpush1.msra.mxu0 0.0
      %667 = vmatprep.subr.mxu0 0.0
      %668 = vmatpush1.msra.mxu0 0.0
      %669 = vmatprep.subr.mxu0 0.0
      %670 = vmatpush1.msra.mxu0 0.0
      %671 = vmatprep.subr.mxu0 0.0
      %672 = vmatpush1.msra.mxu0 0.0
      %673 = vmatprep.subr.mxu0 0.0
      %674 = vmatpush1.msra.mxu0 0.0
      %675 = vmatprep.subr.mxu0 0.0
      %676 = vmatpush1.msra.mxu0 0.0
      %677 = vmatprep.subr.mxu0 0.0
      %678 = vmatpush1.msra.mxu0 0.0
      %679 = vmatprep.subr.mxu0 0.0
      %680 = vmatpush1.msra.mxu0 0.0
      %681 = vmatprep.subr.mxu0 0.0
      %682 = vmatpush1.msra.mxu0 0.0
      %683 = vmatprep.subr.mxu0 0.0
      %684 = vmatpush1.msra.mxu0 0.0
      %685 = vmatprep.subr.mxu0 0.0
      %686 = vmatpush1.msra.mxu0 0.0
      %687 = vmatprep.subr.mxu0 0.0
      %688 = vmatpush1.msra.mxu0 0.0
      %689 = vmatprep.subr.mxu0 0.0
      %690 = vmatpush1.msra.mxu0 0.0
      %691 = vmatprep.subr.mxu0 0.0
      %692 = vmatpush1.msra.mxu0 0.0
      %693 = vmatprep.subr.mxu0 0.0
      %694 = vmatpush1.msra.mxu0 0.0
      %695 = vmatprep.subr.mxu0 0.0
      %696 = vmatpush1.msra.mxu0 0.0
      %697 = vmatprep.subr.mxu0 0.0
      %698 = vmatpush1.msra.mxu0 0.0
      %699 = vmatprep.subr.mxu0 0.0
      %700 = vmatpush1.msra.mxu0 0.0
      %701 = vmatprep.subr.mxu0 0.0
      %702 = vmatpush1.msra.mxu0 0.0
      %703 = vmatprep.subr.mxu0 0.0
      %704 = vmatpush1.msra.mxu0 0.0
      %705 = vmatprep.subr.mxu0 0.0
      %706 = vmatpush1.msra.mxu0 0.0
      %707 = vmatprep.subr.mxu0 0.0
      %708 = vmatpush1.msra.mxu0 0.0
      %709 = vmatprep.subr.mxu0 0.0
      %710 = vmatpush1.msra.mxu0 0.0
      %711 = vmatprep.subr.mxu0 0.0
      %712 = vmatpush1.msra.mxu0 0.0
      %713 = vmatprep.subr.mxu0 0.0
      %714 = vmatpush1.msra.mxu0 0.0
      %715 = vmatprep.subr.mxu0 0.0
      %716 = vmatpush1.msra.mxu0 0.0
      %717 = vmatprep.subr.mxu0 0.0
      %718 = vmatpush1.msra.mxu0 0.0
      %719 = vmatprep.subr.mxu0 0.0
      %720 = vmatpush1.msra.mxu0 0.0
      %721 = vmatprep.mubr.f32.mxu0 0.0
      %722 = vmatmul.mubr.f32.gmra.mrb[0].mxu0 %v648
      %v723 = vpop.f32.mrb[0].mxu0
      %v724 = vadd.f32 0.0, %v723
      %v725 = vpop.f32.mrb[0].mxu0
      %v726 = vadd.f32 0.0, %v725
      %727 = vdwg.mxu0
      %728 = vmatprep.subr.mxu0 0.0
      %729 = vmatpush1.msra.mxu0 %v655
      %730 = vmatprep.subr.mxu0 0.0
      %731 = vmatpush1.msra.mxu0 0.0
      %732 = vmatprep.subr.mxu0 0.0
      %733 = vmatpush1.msra.mxu0 0.0
      %734 = vmatprep.subr.mxu0 0.0
      %735 = vmatpush1.msra.mxu0 0.0
      %736 = vmatprep.subr.mxu0 0.0
      %737 = vmatpush1.msra.mxu0 0.0
      %738 = vmatprep.subr.mxu0 0.0
      %739 = vmatpush1.msra.mxu0 0.0
      %740 = vmatprep.subr.mxu0 0.0
      %741 = vmatpush1.msra.mxu0 0.0
      %742 = vmatprep.subr.mxu0 0.0
      %743 = vmatpush1.msra.mxu0 0.0
      %744 = vmatprep.subr.mxu0 0.0
      %745 = vmatpush1.msra.mxu0 0.0
      %746 = vmatprep.subr.mxu0 0.0
      %747 = vmatpush1.msra.mxu0 0.0
      %748 = vmatprep.subr.mxu0 0.0
      %749 = vmatpush1.msra.mxu0 0.0
      %750 = vmatprep.subr.mxu0 0.0
      %751 = vmatpush1.msra.mxu0 0.0
      %752 = vmatprep.subr.mxu0 0.0
      %753 = vmatpush1.msra.mxu0 0.0
      %754 = vmatprep.subr.mxu0 0.0
      %755 = vmatpush1.msra.mxu0 0.0
      %756 = vmatprep.subr.mxu0 0.0
      %757 = vmatpush1.msra.mxu0 0.0
      %758 = vmatprep.subr.mxu0 0.0
      %759 = vmatpush1.msra.mxu0 0.0
      %760 = vmatprep.subr.mxu0 0.0
      %761 = vmatpush1.msra.mxu0 0.0
      %762 = vmatprep.subr.mxu0 0.0
      %763 = vmatpush1.msra.mxu0 0.0
      %764 = vmatprep.subr.mxu0 0.0
      %765 = vmatpush1.msra.mxu0 0.0
      %766 = vmatprep.subr.mxu0 0.0
      %767 = vmatpush1.msra.mxu0 0.0
      %768 = vmatprep.subr.mxu0 0.0
      %769 = vmatpush1.msra.mxu0 0.0
      %770 = vmatprep.subr.mxu0 0.0
      %771 = vmatpush1.msra.mxu0 0.0
      %772 = vmatprep.subr.mxu0 0.0
      %773 = vmatpush1.msra.mxu0 0.0
      %774 = vmatprep.subr.mxu0 0.0
      %775 = vmatpush1.msra.mxu0 0.0
      %776 = vmatprep.subr.mxu0 0.0
      %777 = vmatpush1.msra.mxu0 0.0
      %778 = vmatprep.subr.mxu0 0.0
      %779 = vmatpush1.msra.mxu0 0.0
      %780 = vmatprep.subr.mxu0 0.0
      %781 = vmatpush1.msra.mxu0 0.0
      %782 = vmatprep.subr.mxu0 0.0
      %783 = vmatpush1.msra.mxu0 0.0
      %784 = vmatprep.subr.mxu0 0.0
      %785 = vmatpush1.msra.mxu0 0.0
      %786 = vmatprep.subr.mxu0 0.0
      %787 = vmatpush1.msra.mxu0 0.0
      %788 = vmatprep.subr.mxu0 0.0
      %789 = vmatpush1.msra.mxu0 0.0
      %790 = vmatprep.subr.mxu0 0.0
      %791 = vmatpush1.msra.mxu0 0.0
      %792 = vmatprep.mubr.f32.mxu0 0.0
      %793 = vmatmul.mubr.f32.gmra.mrb[0].mxu0 %v648
      %v794 = vpop.f32.mrb[0].mxu0
      %v795 = vadd.f32 0.0, %v794
      %v796 = vpop.f32.mrb[0].mxu0
      %797 = vdwg.mxu0
      %v798 = vadd.f32 %v571, %v724
      %v799 = vadd.f32 %v573, %v726
      %v800 = vadd.f32 %v642, %v795
      %802 = vrot.lane.b32.xlu0 %v800, 78
      %v803 = vpop.permute.xlu0 %802
      %807 = vrot.lane.b32.xlu0 %v798, 18
      %v808 = vpop.permute.xlu0 %807
      %809 = vrot.lane.b32.xlu0 %v799, 18
      %v810 = vpop.permute.xlu0 %809
      %811 = vrot.lane.b32.xlu0 %v800, 18
      %v812 = vpop.permute.xlu0 %811
      %vm813 = vcmask 146432
      %v814 = vsel %vm813, %v808, %v810
      %v815 = vsel %vm813, %v810, %v812
      %v819 = vsel %vm813, %v803, %v808
      %v820 = vadd.f32 %v819, 0.0
      %v821 = vadd.f32 %v814, 0.0
      %v822 = vadd.f32 %v815, 0.0
      %s823 = scalar_lea.vmem %s1, 24
      %v824 = vld [vmem:[%s823] sm:$0xff]
      %s825 = scalar_lea.vmem %s1, 32
      %v826 = vld [vmem:[%s825] sm:$0xff]
      %v828 = vsel %vm342, %v826, 0
      %830 = vmatprep.subr.mxu0 %v349
      %831 = vmatpush1.msra.mxu0 %v347
      %832 = vmatprep.subr.mxu0 0.0
      %833 = vmatpush1.msra.mxu0 0.0
      %834 = vmatprep.subr.mxu0 0.0
      %835 = vmatpush1.msra.mxu0 0.0
      %836 = vmatprep.subr.mxu0 0.0
      %837 = vmatpush1.msra.mxu0 0.0
      %838 = vmatprep.subr.mxu0 0.0
      %839 = vmatpush1.msra.mxu0 0.0
      %840 = vmatprep.subr.mxu0 0.0
      %841 = vmatpush1.msra.mxu0 0.0
      %842 = vmatprep.subr.mxu0 0.0
      %843 = vmatpush1.msra.mxu0 0.0
      %844 = vmatprep.subr.mxu0 0.0
      %845 = vmatpush1.msra.mxu0 0.0
      %846 = vmatprep.subr.mxu0 0.0
      %847 = vmatpush1.msra.mxu0 0.0
      %848 = vmatprep.subr.mxu0 0.0
      %849 = vmatpush1.msra.mxu0 0.0
      %850 = vmatprep.subr.mxu0 0.0
      %851 = vmatpush1.msra.mxu0 0.0
      %852 = vmatprep.subr.mxu0 0.0
      %853 = vmatpush1.msra.mxu0 0.0
      %854 = vmatprep.subr.mxu0 0.0
      %855 = vmatpush1.msra.mxu0 0.0
      %856 = vmatprep.subr.mxu0 0.0
      %857 = vmatpush1.msra.mxu0 0.0
      %858 = vmatprep.subr.mxu0 0.0
      %859 = vmatpush1.msra.mxu0 0.0
      %860 = vmatprep.subr.mxu0 0.0
      %861 = vmatpush1.msra.mxu0 0.0
      %862 = vmatprep.subr.mxu0 0.0
      %863 = vmatpush1.msra.mxu0 0.0
      %864 = vmatprep.subr.mxu0 0.0
      %865 = vmatpush1.msra.mxu0 0.0
      %866 = vmatprep.subr.mxu0 0.0
      %867 = vmatpush1.msra.mxu0 0.0
      %868 = vmatprep.subr.mxu0 0.0
      %869 = vmatpush1.msra.mxu0 0.0
      %870 = vmatprep.subr.mxu0 0.0
      %871 = vmatpush1.msra.mxu0 0.0
      %872 = vmatprep.subr.mxu0 0.0
      %873 = vmatpush1.msra.mxu0 0.0
      %874 = vmatprep.subr.mxu0 0.0
      %875 = vmatpush1.msra.mxu0 0.0
      %876 = vmatprep.subr.mxu0 0.0
      %877 = vmatpush1.msra.mxu0 0.0
      %878 = vmatprep.subr.mxu0 0.0
      %879 = vmatpush1.msra.mxu0 0.0
      %880 = vmatprep.subr.mxu0 0.0
      %881 = vmatpush1.msra.mxu0 0.0
      %882 = vmatprep.subr.mxu0 0.0
      %883 = vmatpush1.msra.mxu0 0.0
      %884 = vmatprep.subr.mxu0 0.0
      %885 = vmatpush1.msra.mxu0 0.0
      %886 = vmatprep.subr.mxu0 0.0
      %887 = vmatpush1.msra.mxu0 0.0
      %888 = vmatprep.subr.mxu0 0.0
      %889 = vmatpush1.msra.mxu0 0.0
      %890 = vmatprep.subr.mxu0 0.0
      %891 = vmatpush1.msra.mxu0 0.0
      %892 = vmatprep.subr.mxu0 0.0
      %893 = vmatpush1.msra.mxu0 0.0
      %894 = vmatprep.mubr.f32.mxu0 0.0
      %895 = vmatmul.mubr.f32.gmra.mrb[0].mxu0 %v828
      %v896 = vpop.f32.mrb[0].mxu0
      %v897 = vadd.f32 0.0, %v896
      %v898 = vpop.f32.mrb[0].mxu0
      %v899 = vadd.f32 0.0, %v898
      %900 = vdwg.mxu0
      %901 = vmatprep.subr.mxu0 0.0
      %902 = vmatpush1.msra.mxu0 %v351
      %903 = vmatprep.subr.mxu0 0.0
      %904 = vmatpush1.msra.mxu0 0.0
      %905 = vmatprep.subr.mxu0 0.0
      %906 = vmatpush1.msra.mxu0 0.0
      %907 = vmatprep.subr.mxu0 0.0
      %908 = vmatpush1.msra.mxu0 0.0
      %909 = vmatprep.subr.mxu0 0.0
      %910 = vmatpush1.msra.mxu0 0.0
      %911 = vmatprep.subr.mxu0 0.0
      %912 = vmatpush1.msra.mxu0 0.0
      %913 = vmatprep.subr.mxu0 0.0
      %914 = vmatpush1.msra.mxu0 0.0
      %915 = vmatprep.subr.mxu0 0.0
      %916 = vmatpush1.msra.mxu0 0.0
      %917 = vmatprep.subr.mxu0 0.0
      %918 = vmatpush1.msra.mxu0 0.0
      %919 = vmatprep.subr.mxu0 0.0
      %920 = vmatpush1.msra.mxu0 0.0
      %921 = vmatprep.subr.mxu0 0.0
      %922 = vmatpush1.msra.mxu0 0.0
      %923 = vmatprep.subr.mxu0 0.0
      %924 = vmatpush1.msra.mxu0 0.0
      %925 = vmatprep.subr.mxu0 0.0
      %926 = vmatpush1.msra.mxu0 0.0
      %927 = vmatprep.subr.mxu0 0.0
      %928 = vmatpush1.msra.mxu0 0.0
      %929 = vmatprep.subr.mxu0 0.0
      %930 = vmatpush1.msra.mxu0 0.0
      %931 = vmatprep.subr.mxu0 0.0
      %932 = vmatpush1.msra.mxu0 0.0
      %933 = vmatprep.subr.mxu0 0.0
      %934 = vmatpush1.msra.mxu0 0.0
      %935 = vmatprep.subr.mxu0 0.0
      %936 = vmatpush1.msra.mxu0 0.0
      %937 = vmatprep.subr.mxu0 0.0
      %938 = vmatpush1.msra.mxu0 0.0
      %939 = vmatprep.subr.mxu0 0.0
      %940 = vmatpush1.msra.mxu0 0.0
      %941 = vmatprep.subr.mxu0 0.0
      %942 = vmatpush1.msra.mxu0 0.0
      %943 = vmatprep.subr.mxu0 0.0
      %944 = vmatpush1.msra.mxu0 0.0
      %945 = vmatprep.subr.mxu0 0.0
      %946 = vmatpush1.msra.mxu0 0.0
      %947 = vmatprep.subr.mxu0 0.0
      %948 = vmatpush1.msra.mxu0 0.0
      %949 = vmatprep.subr.mxu0 0.0
      %950 = vmatpush1.msra.mxu0 0.0
      %951 = vmatprep.subr.mxu0 0.0
      %952 = vmatpush1.msra.mxu0 0.0
      %953 = vmatprep.subr.mxu0 0.0
      %954 = vmatpush1.msra.mxu0 0.0
      %955 = vmatprep.subr.mxu0 0.0
      %956 = vmatpush1.msra.mxu0 0.0
      %957 = vmatprep.subr.mxu0 0.0
      %958 = vmatpush1.msra.mxu0 0.0
      %959 = vmatprep.subr.mxu0 0.0
      %960 = vmatpush1.msra.mxu0 0.0
      %961 = vmatprep.subr.mxu0 0.0
      %962 = vmatpush1.msra.mxu0 0.0
      %963 = vmatprep.subr.mxu0 0.0
      %964 = vmatpush1.msra.mxu0 0.0
      %965 = vmatprep.mubr.f32.mxu0 0.0
      %966 = vmatmul.mubr.f32.gmra.mrb[0].mxu0 %v828
      %v967 = vpop.f32.mrb[0].mxu0
      %v968 = vadd.f32 0.0, %v967
      %v969 = vpop.f32.mrb[0].mxu0
      %970 = vdwg.mxu0
      %v972 = vsel %vm342, %v824, 0
      %974 = vmatprep.subr.mxu0 %v500
      %975 = vmatpush1.msra.mxu0 %v498
      %976 = vmatprep.subr.mxu0 0.0
      %977 = vmatpush1.msra.mxu0 0.0
      %978 = vmatprep.subr.mxu0 0.0
      %979 = vmatpush1.msra.mxu0 0.0
      %980 = vmatprep.subr.mxu0 0.0
      %981 = vmatpush1.msra.mxu0 0.0
      %982 = vmatprep.subr.mxu0 0.0
      %983 = vmatpush1.msra.mxu0 0.0
      %984 = vmatprep.subr.mxu0 0.0
      %985 = vmatpush1.msra.mxu0 0.0
      %986 = vmatprep.subr.mxu0 0.0
      %987 = vmatpush1.msra.mxu0 0.0
      %988 = vmatprep.subr.mxu0 0.0
      %989 = vmatpush1.msra.mxu0 0.0
      %990 = vmatprep.subr.mxu0 0.0
      %991 = vmatpush1.msra.mxu0 0.0
      %992 = vmatprep.subr.mxu0 0.0
      %993 = vmatpush1.msra.mxu0 0.0
      %994 = vmatprep.subr.mxu0 0.0
      %995 = vmatpush1.msra.mxu0 0.0
      %996 = vmatprep.subr.mxu0 0.0
      %997 = vmatpush1.msra.mxu0 0.0
      %998 = vmatprep.subr.mxu0 0.0
      %999 = vmatpush1.msra.mxu0 0.0
      %1000 = vmatprep.subr.mxu0 0.0
      %1001 = vmatpush1.msra.mxu0 0.0
      %1002 = vmatprep.subr.mxu0 0.0
      %1003 = vmatpush1.msra.mxu0 0.0
      %1004 = vmatprep.subr.mxu0 0.0
      %1005 = vmatpush1.msra.mxu0 0.0
      %1006 = vmatprep.subr.mxu0 0.0
      %1007 = vmatpush1.msra.mxu0 0.0
      %1008 = vmatprep.subr.mxu0 0.0
      %1009 = vmatpush1.msra.mxu0 0.0
      %1010 = vmatprep.subr.mxu0 0.0
      %1011 = vmatpush1.msra.mxu0 0.0
      %1012 = vmatprep.subr.mxu0 0.0
      %1013 = vmatpush1.msra.mxu0 0.0
      %1014 = vmatprep.subr.mxu0 0.0
      %1015 = vmatpush1.msra.mxu0 0.0
      %1016 = vmatprep.subr.mxu0 0.0
      %1017 = vmatpush1.msra.mxu0 0.0
      %1018 = vmatprep.subr.mxu0 0.0
      %1019 = vmatpush1.msra.mxu0 0.0
      %1020 = vmatprep.subr.mxu0 0.0
      %1021 = vmatpush1.msra.mxu0 0.0
      %1022 = vmatprep.subr.mxu0 0.0
      %1023 = vmatpush1.msra.mxu0 0.0
      %1024 = vmatprep.subr.mxu0 0.0
      %1025 = vmatpush1.msra.mxu0 0.0
      %1026 = vmatprep.subr.mxu0 0.0
      %1027 = vmatpush1.msra.mxu0 0.0
      %1028 = vmatprep.subr.mxu0 0.0
      %1029 = vmatpush1.msra.mxu0 0.0
      %1030 = vmatprep.subr.mxu0 0.0
      %1031 = vmatpush1.msra.mxu0 0.0
      %1032 = vmatprep.subr.mxu0 0.0
      %1033 = vmatpush1.msra.mxu0 0.0
      %1034 = vmatprep.subr.mxu0 0.0
      %1035 = vmatpush1.msra.mxu0 0.0
      %1036 = vmatprep.subr.mxu0 0.0
      %1037 = vmatpush1.msra.mxu0 0.0
      %1038 = vmatprep.mubr.f32.mxu0 0.0
      %1039 = vmatmul.mubr.f32.gmra.mrb[0].mxu0 %v972
      %v1040 = vpop.f32.mrb[0].mxu0
      %v1041 = vadd.f32 %v897, %v1040
      %v1042 = vpop.f32.mrb[0].mxu0
      %v1043 = vadd.f32 %v899, %v1042
      %1044 = vdwg.mxu0
      %1045 = vmatprep.subr.mxu0 0.0
      %1046 = vmatpush1.msra.mxu0 %v502
      %1047 = vmatprep.subr.mxu0 0.0
      %1048 = vmatpush1.msra.mxu0 0.0
      %1049 = vmatprep.subr.mxu0 0.0
      %1050 = vmatpush1.msra.mxu0 0.0
      %1051 = vmatprep.subr.mxu0 0.0
      %1052 = vmatpush1.msra.mxu0 0.0
      %1053 = vmatprep.subr.mxu0 0.0
      %1054 = vmatpush1.msra.mxu0 0.0
      %1055 = vmatprep.subr.mxu0 0.0
      %1056 = vmatpush1.msra.mxu0 0.0
      %1057 = vmatprep.subr.mxu0 0.0
      %1058 = vmatpush1.msra.mxu0 0.0
      %1059 = vmatprep.subr.mxu0 0.0
      %1060 = vmatpush1.msra.mxu0 0.0
      %1061 = vmatprep.subr.mxu0 0.0
      %1062 = vmatpush1.msra.mxu0 0.0
      %1063 = vmatprep.subr.mxu0 0.0
      %1064 = vmatpush1.msra.mxu0 0.0
      %1065 = vmatprep.subr.mxu0 0.0
      %1066 = vmatpush1.msra.mxu0 0.0
      %1067 = vmatprep.subr.mxu0 0.0
      %1068 = vmatpush1.msra.mxu0 0.0
      %1069 = vmatprep.subr.mxu0 0.0
      %1070 = vmatpush1.msra.mxu0 0.0
      %1071 = vmatprep.subr.mxu0 0.0
      %1072 = vmatpush1.msra.mxu0 0.0
      %1073 = vmatprep.subr.mxu0 0.0
      %1074 = vmatpush1.msra.mxu0 0.0
      %1075 = vmatprep.subr.mxu0 0.0
      %1076 = vmatpush1.msra.mxu0 0.0
      %1077 = vmatprep.subr.mxu0 0.0
      %1078 = vmatpush1.msra.mxu0 0.0
      %1079 = vmatprep.subr.mxu0 0.0
      %1080 = vmatpush1.msra.mxu0 0.0
      %1081 = vmatprep.subr.mxu0 0.0
      %1082 = vmatpush1.msra.mxu0 0.0
      %1083 = vmatprep.subr.mxu0 0.0
      %1084 = vmatpush1.msra.mxu0 0.0
      %1085 = vmatprep.subr.mxu0 0.0
      %1086 = vmatpush1.msra.mxu0 0.0
      %1087 = vmatprep.subr.mxu0 0.0
      %1088 = vmatpush1.msra.mxu0 0.0
      %1089 = vmatprep.subr.mxu0 0.0
      %1090 = vmatpush1.msra.mxu0 0.0
      %1091 = vmatprep.subr.mxu0 0.0
      %1092 = vmatpush1.msra.mxu0 0.0
      %1093 = vmatprep.subr.mxu0 0.0
      %1094 = vmatpush1.msra.mxu0 0.0
      %1095 = vmatprep.subr.mxu0 0.0
      %1096 = vmatpush1.msra.mxu0 0.0
      %1097 = vmatprep.subr.mxu0 0.0
      %1098 = vmatpush1.msra.mxu0 0.0
      %1099 = vmatprep.subr.mxu0 0.0
      %1100 = vmatpush1.msra.mxu0 0.0
      %1101 = vmatprep.subr.mxu0 0.0
      %1102 = vmatpush1.msra.mxu0 0.0
      %1103 = vmatprep.subr.mxu0 0.0
      %1104 = vmatpush1.msra.mxu0 0.0
      %1105 = vmatprep.subr.mxu0 0.0
      %1106 = vmatpush1.msra.mxu0 0.0
      %1107 = vmatprep.subr.mxu0 0.0
      %1108 = vmatpush1.msra.mxu0 0.0
      %1109 = vmatprep.mubr.f32.mxu0 0.0
      %1110 = vmatmul.mubr.f32.gmra.mrb[0].mxu0 %v972
      %v1111 = vpop.f32.mrb[0].mxu0
      %v1112 = vadd.f32 %v968, %v1111
      %v1113 = vpop.f32.mrb[0].mxu0
      %1114 = vdwg.mxu0
      %s1115 = scalar_lea.vmem %s1, 40
      %v1116 = vld [vmem:[%s1115] sm:$0xff]
      %v1118 = vsel %vm342, %v1116, 0
      %1120 = vmatprep.subr.mxu0 %v652
      %1121 = vmatpush1.msra.mxu0 %v650
      %1122 = vmatprep.subr.mxu0 0.0
      %1123 = vmatpush1.msra.mxu0 0.0
      %1124 = vmatprep.subr.mxu0 0.0
      %1125 = vmatpush1.msra.mxu0 0.0
      %1126 = vmatprep.subr.mxu0 0.0
      %1127 = vmatpush1.msra.mxu0 0.0
      %1128 = vmatprep.subr.mxu0 0.0
      %1129 = vmatpush1.msra.mxu0 0.0
      %1130 = vmatprep.subr.mxu0 0.0
      %1131 = vmatpush1.msra.mxu0 0.0
      %1132 = vmatprep.subr.mxu0 0.0
      %1133 = vmatpush1.msra.mxu0 0.0
      %1134 = vmatprep.subr.mxu0 0.0
      %1135 = vmatpush1.msra.mxu0 0.0
      %1136 = vmatprep.subr.mxu0 0.0
      %1137 = vmatpush1.msra.mxu0 0.0
      %1138 = vmatprep.subr.mxu0 0.0
      %1139 = vmatpush1.msra.mxu0 0.0
      %1140 = vmatprep.subr.mxu0 0.0
      %1141 = vmatpush1.msra.mxu0 0.0
      %1142 = vmatprep.subr.mxu0 0.0
      %1143 = vmatpush1.msra.mxu0 0.0
      %1144 = vmatprep.subr.mxu0 0.0
      %1145 = vmatpush1.msra.mxu0 0.0
      %1146 = vmatprep.subr.mxu0 0.0
      %1147 = vmatpush1.msra.mxu0 0.0
      %1148 = vmatprep.subr.mxu0 0.0
      %1149 = vmatpush1.msra.mxu0 0.0
      %1150 = vmatprep.subr.mxu0 0.0
      %1151 = vmatpush1.msra.mxu0 0.0
      %1152 = vmatprep.subr.mxu0 0.0
      %1153 = vmatpush1.msra.mxu0 0.0
      %1154 = vmatprep.subr.mxu0 0.0
      %1155 = vmatpush1.msra.mxu0 0.0
      %1156 = vmatprep.subr.mxu0 0.0
      %1157 = vmatpush1.msra.mxu0 0.0
      %1158 = vmatprep.subr.mxu0 0.0
      %1159 = vmatpush1.msra.mxu0 0.0
      %1160 = vmatprep.subr.mxu0 0.0
      %1161 = vmatpush1.msra.mxu0 0.0
      %1162 = vmatprep.subr.mxu0 0.0
      %1163 = vmatpush1.msra.mxu0 0.0
      %1164 = vmatprep.subr.mxu0 0.0
      %1165 = vmatpush1.msra.mxu0 0.0
      %1166 = vmatprep.subr.mxu0 0.0
      %1167 = vmatpush1.msra.mxu0 0.0
      %1168 = vmatprep.subr.mxu0 0.0
      %1169 = vmatpush1.msra.mxu0 0.0
      %1170 = vmatprep.subr.mxu0 0.0
      %1171 = vmatpush1.msra.mxu0 0.0
      %1172 = vmatprep.subr.mxu0 0.0
      %1173 = vmatpush1.msra.mxu0 0.0
      %1174 = vmatprep.subr.mxu0 0.0
      %1175 = vmatpush1.msra.mxu0 0.0
      %1176 = vmatprep.subr.mxu0 0.0
      %1177 = vmatpush1.msra.mxu0 0.0
      %1178 = vmatprep.subr.mxu0 0.0
      %1179 = vmatpush1.msra.mxu0 0.0
      %1180 = vmatprep.subr.mxu0 0.0
      %1181 = vmatpush1.msra.mxu0 0.0
      %1182 = vmatprep.subr.mxu0 0.0
      %1183 = vmatpush1.msra.mxu0 0.0
      %1184 = vmatprep.mubr.f32.mxu0 0.0
      %1185 = vmatmul.mubr.f32.gmra.mrb[0].mxu0 %v1118
      %v1186 = vpop.f32.mrb[0].mxu0
      %v1187 = vadd.f32 0.0, %v1186
      %v1188 = vpop.f32.mrb[0].mxu0
      %v1189 = vadd.f32 0.0, %v1188
      %1190 = vdwg.mxu0
      %1191 = vmatprep.subr.mxu0 0.0
      %1192 = vmatpush1.msra.mxu0 %v655
      %1193 = vmatprep.subr.mxu0 0.0
      %1194 = vmatpush1.msra.mxu0 0.0
      %1195 = vmatprep.subr.mxu0 0.0
      %1196 = vmatpush1.msra.mxu0 0.0
      %1197 = vmatprep.subr.mxu0 0.0
      %1198 = vmatpush1.msra.mxu0 0.0
      %1199 = vmatprep.subr.mxu0 0.0
      %1200 = vmatpush1.msra.mxu0 0.0
      %1201 = vmatprep.subr.mxu0 0.0
      %1202 = vmatpush1.msra.mxu0 0.0
      %1203 = vmatprep.subr.mxu0 0.0
      %1204 = vmatpush1.msra.mxu0 0.0
      %1205 = vmatprep.subr.mxu0 0.0
      %1206 = vmatpush1.msra.mxu0 0.0
      %1207 = vmatprep.subr.mxu0 0.0
      %1208 = vmatpush1.msra.mxu0 0.0
      %1209 = vmatprep.subr.mxu0 0.0
      %1210 = vmatpush1.msra.mxu0 0.0
      %1211 = vmatprep.subr.mxu0 0.0
      %1212 = vmatpush1.msra.mxu0 0.0
      %1213 = vmatprep.subr.mxu0 0.0
      %1214 = vmatpush1.msra.mxu0 0.0
      %1215 = vmatprep.subr.mxu0 0.0
      %1216 = vmatpush1.msra.mxu0 0.0
      %1217 = vmatprep.subr.mxu0 0.0
      %1218 = vmatpush1.msra.mxu0 0.0
      %1219 = vmatprep.subr.mxu0 0.0
      %1220 = vmatpush1.msra.mxu0 0.0
      %1221 = vmatprep.subr.mxu0 0.0
      %1222 = vmatpush1.msra.mxu0 0.0
      %1223 = vmatprep.subr.mxu0 0.0
      %1224 = vmatpush1.msra.mxu0 0.0
      %1225 = vmatprep.subr.mxu0 0.0
      %1226 = vmatpush1.msra.mxu0 0.0
      %1227 = vmatprep.subr.mxu0 0.0
      %1228 = vmatpush1.msra.mxu0 0.0
      %1229 = vmatprep.subr.mxu0 0.0
      %1230 = vmatpush1.msra.mxu0 0.0
      %1231 = vmatprep.subr.mxu0 0.0
      %1232 = vmatpush1.msra.mxu0 0.0
      %1233 = vmatprep.subr.mxu0 0.0
      %1234 = vmatpush1.msra.mxu0 0.0
      %1235 = vmatprep.subr.mxu0 0.0
      %1236 = vmatpush1.msra.mxu0 0.0
      %1237 = vmatprep.subr.mxu0 0.0
      %1238 = vmatpush1.msra.mxu0 0.0
      %1239 = vmatprep.subr.mxu0 0.0
      %1240 = vmatpush1.msra.mxu0 0.0
      %1241 = vmatprep.subr.mxu0 0.0
      %1242 = vmatpush1.msra.mxu0 0.0
      %1243 = vmatprep.subr.mxu0 0.0
      %1244 = vmatpush1.msra.mxu0 0.0
      %1245 = vmatprep.subr.mxu0 0.0
      %1246 = vmatpush1.msra.mxu0 0.0
      %1247 = vmatprep.subr.mxu0 0.0
      %1248 = vmatpush1.msra.mxu0 0.0
      %1249 = vmatprep.subr.mxu0 0.0
      %1250 = vmatpush1.msra.mxu0 0.0
      %1251 = vmatprep.subr.mxu0 0.0
      %1252 = vmatpush1.msra.mxu0 0.0
      %1253 = vmatprep.subr.mxu0 0.0
      %1254 = vmatpush1.msra.mxu0 0.0
      %1255 = vmatprep.mubr.f32.mxu0 0.0
      %1256 = vmatmul.mubr.f32.gmra.mrb[0].mxu0 %v1118
      %v1257 = vpop.f32.mrb[0].mxu0
      %v1258 = vadd.f32 0.0, %v1257
      %v1259 = vpop.f32.mrb[0].mxu0
      %1260 = vdwg.mxu0
      %v1261 = vadd.f32 %v1041, %v1187
      %v1262 = vadd.f32 %v1043, %v1189
      %v1263 = vadd.f32 %v1112, %v1258
      %v1264 = vadd.f32 %v820, %v1261
      %v1265 = vadd.f32 %v821, %v1262
      %v1266 = vadd.f32 %v822, %v1263
      %s1267 = scalar_lea.vmem %s1, 48
      %v1268 = vld [vmem:[%s1267] sm:$0xff]
      %s1269 = scalar_lea.vmem %s1, 56
      %v1270 = vld [vmem:[%s1269] sm:$0xff]
      %v1272 = vsel %vm342, %v1270, 0
      %1274 = vmatprep.subr.mxu0 %v349
      %1275 = vmatpush1.msra.mxu0 %v347
      %1276 = vmatprep.subr.mxu0 0.0
      %1277 = vmatpush1.msra.mxu0 0.0
      %1278 = vmatprep.subr.mxu0 0.0
      %1279 = vmatpush1.msra.mxu0 0.0
      %1280 = vmatprep.subr.mxu0 0.0
      %1281 = vmatpush1.msra.mxu0 0.0
      %1282 = vmatprep.subr.mxu0 0.0
      %1283 = vmatpush1.msra.mxu0 0.0
      %1284 = vmatprep.subr.mxu0 0.0
      %1285 = vmatpush1.msra.mxu0 0.0
      %1286 = vmatprep.subr.mxu0 0.0
      %1287 = vmatpush1.msra.mxu0 0.0
      %1288 = vmatprep.subr.mxu0 0.0
      %1289 = vmatpush1.msra.mxu0 0.0
      %1290 = vmatprep.subr.mxu0 0.0
      %1291 = vmatpush1.msra.mxu0 0.0
      %1292 = vmatprep.subr.mxu0 0.0
      %1293 = vmatpush1.msra.mxu0 0.0
      %1294 = vmatprep.subr.mxu0 0.0
      %1295 = vmatpush1.msra.mxu0 0.0
      %1296 = vmatprep.subr.mxu0 0.0
      %1297 = vmatpush1.msra.mxu0 0.0
      %1298 = vmatprep.subr.mxu0 0.0
      %1299 = vmatpush1.msra.mxu0 0.0
      %1300 = vmatprep.subr.mxu0 0.0
      %1301 = vmatpush1.msra.mxu0 0.0
      %1302 = vmatprep.subr.mxu0 0.0
      %1303 = vmatpush1.msra.mxu0 0.0
      %1304 = vmatprep.subr.mxu0 0.0
      %1305 = vmatpush1.msra.mxu0 0.0
      %1306 = vmatprep.subr.mxu0 0.0
      %1307 = vmatpush1.msra.mxu0 0.0
      %1308 = vmatprep.subr.mxu0 0.0
      %1309 = vmatpush1.msra.mxu0 0.0
      %1310 = vmatprep.subr.mxu0 0.0
      %1311 = vmatpush1.msra.mxu0 0.0
      %1312 = vmatprep.subr.mxu0 0.0
      %1313 = vmatpush1.msra.mxu0 0.0
      %1314 = vmatprep.subr.mxu0 0.0
      %1315 = vmatpush1.msra.mxu0 0.0
      %1316 = vmatprep.subr.mxu0 0.0
      %1317 = vmatpush1.msra.mxu0 0.0
      %1318 = vmatprep.subr.mxu0 0.0
      %1319 = vmatpush1.msra.mxu0 0.0
      %1320 = vmatprep.subr.mxu0 0.0
      %1321 = vmatpush1.msra.mxu0 0.0
      %1322 = vmatprep.subr.mxu0 0.0
      %1323 = vmatpush1.msra.mxu0 0.0
      %1324 = vmatprep.subr.mxu0 0.0
      %1325 = vmatpush1.msra.mxu0 0.0
      %1326 = vmatprep.subr.mxu0 0.0
      %1327 = vmatpush1.msra.mxu0 0.0
      %1328 = vmatprep.subr.mxu0 0.0
      %1329 = vmatpush1.msra.mxu0 0.0
      %1330 = vmatprep.subr.mxu0 0.0
      %1331 = vmatpush1.msra.mxu0 0.0
      %1332 = vmatprep.subr.mxu0 0.0
      %1333 = vmatpush1.msra.mxu0 0.0
      %1334 = vmatprep.subr.mxu0 0.0
      %1335 = vmatpush1.msra.mxu0 0.0
      %1336 = vmatprep.subr.mxu0 0.0
      %1337 = vmatpush1.msra.mxu0 0.0
      %1338 = vmatprep.mubr.f32.mxu0 0.0
      %1339 = vmatmul.mubr.f32.gmra.mrb[0].mxu0 %v1272
      %v1340 = vpop.f32.mrb[0].mxu0
      %v1341 = vadd.f32 0.0, %v1340
      %v1342 = vpop.f32.mrb[0].mxu0
      %v1343 = vadd.f32 0.0, %v1342
      %1344 = vdwg.mxu0
      %1345 = vmatprep.subr.mxu0 0.0
      %1346 = vmatpush1.msra.mxu0 %v351
      %1347 = vmatprep.subr.mxu0 0.0
      %1348 = vmatpush1.msra.mxu0 0.0
      %1349 = vmatprep.subr.mxu0 0.0
      %1350 = vmatpush1.msra.mxu0 0.0
      %1351 = vmatprep.subr.mxu0 0.0
      %1352 = vmatpush1.msra.mxu0 0.0
      %1353 = vmatprep.subr.mxu0 0.0
      %1354 = vmatpush1.msra.mxu0 0.0
      %1355 = vmatprep.subr.mxu0 0.0
      %1356 = vmatpush1.msra.mxu0 0.0
      %1357 = vmatprep.subr.mxu0 0.0
      %1358 = vmatpush1.msra.mxu0 0.0
      %1359 = vmatprep.subr.mxu0 0.0
      %1360 = vmatpush1.msra.mxu0 0.0
      %1361 = vmatprep.subr.mxu0 0.0
      %1362 = vmatpush1.msra.mxu0 0.0
      %1363 = vmatprep.subr.mxu0 0.0
      %1364 = vmatpush1.msra.mxu0 0.0
      %1365 = vmatprep.subr.mxu0 0.0
      %1366 = vmatpush1.msra.mxu0 0.0
      %1367 = vmatprep.subr.mxu0 0.0
      %1368 = vmatpush1.msra.mxu0 0.0
      %1369 = vmatprep.subr.mxu0 0.0
      %1370 = vmatpush1.msra.mxu0 0.0
      %1371 = vmatprep.subr.mxu0 0.0
      %1372 = vmatpush1.msra.mxu0 0.0
      %1373 = vmatprep.subr.mxu0 0.0
      %1374 = vmatpush1.msra.mxu0 0.0
      %1375 = vmatprep.subr.mxu0 0.0
      %1376 = vmatpush1.msra.mxu0 0.0
      %1377 = vmatprep.subr.mxu0 0.0
      %1378 = vmatpush1.msra.mxu0 0.0
      %1379 = vmatprep.subr.mxu0 0.0
      %1380 = vmatpush1.msra.mxu0 0.0
      %1381 = vmatprep.subr.mxu0 0.0
      %1382 = vmatpush1.msra.mxu0 0.0
      %1383 = vmatprep.subr.mxu0 0.0
      %1384 = vmatpush1.msra.mxu0 0.0
      %1385 = vmatprep.subr.mxu0 0.0
      %1386 = vmatpush1.msra.mxu0 0.0
      %1387 = vmatprep.subr.mxu0 0.0
      %1388 = vmatpush1.msra.mxu0 0.0
      %1389 = vmatprep.subr.mxu0 0.0
      %1390 = vmatpush1.msra.mxu0 0.0
      %1391 = vmatprep.subr.mxu0 0.0
      %1392 = vmatpush1.msra.mxu0 0.0
      %1393 = vmatprep.subr.mxu0 0.0
      %1394 = vmatpush1.msra.mxu0 0.0
      %1395 = vmatprep.subr.mxu0 0.0
      %1396 = vmatpush1.msra.mxu0 0.0
      %1397 = vmatprep.subr.mxu0 0.0
      %1398 = vmatpush1.msra.mxu0 0.0
      %1399 = vmatprep.subr.mxu0 0.0
      %1400 = vmatpush1.msra.mxu0 0.0
      %1401 = vmatprep.subr.mxu0 0.0
      %1402 = vmatpush1.msra.mxu0 0.0
      %1403 = vmatprep.subr.mxu0 0.0
      %1404 = vmatpush1.msra.mxu0 0.0
      %1405 = vmatprep.subr.mxu0 0.0
      %1406 = vmatpush1.msra.mxu0 0.0
      %1407 = vmatprep.subr.mxu0 0.0
      %1408 = vmatpush1.msra.mxu0 0.0
      %1409 = vmatprep.mubr.f32.mxu0 0.0
      %1410 = vmatmul.mubr.f32.gmra.mrb[0].mxu0 %v1272
      %v1411 = vpop.f32.mrb[0].mxu0
      %v1412 = vadd.f32 0.0, %v1411
      %v1413 = vpop.f32.mrb[0].mxu0
      %1414 = vdwg.mxu0
      %v1416 = vsel %vm342, %v1268, 0
      %1418 = vmatprep.subr.mxu0 %v500
      %1419 = vmatpush1.msra.mxu0 %v498
      %1420 = vmatprep.subr.mxu0 0.0
      %1421 = vmatpush1.msra.mxu0 0.0
      %1422 = vmatprep.subr.mxu0 0.0
      %1423 = vmatpush1.msra.mxu0 0.0
      %1424 = vmatprep.subr.mxu0 0.0
      %1425 = vmatpush1.msra.mxu0 0.0
      %1426 = vmatprep.subr.mxu0 0.0
      %1427 = vmatpush1.msra.mxu0 0.0
      %1428 = vmatprep.subr.mxu0 0.0
      %1429 = vmatpush1.msra.mxu0 0.0
      %1430 = vmatprep.subr.mxu0 0.0
      %1431 = vmatpush1.msra.mxu0 0.0
      %1432 = vmatprep.subr.mxu0 0.0
      %1433 = vmatpush1.msra.mxu0 0.0
      %1434 = vmatprep.subr.mxu0 0.0
      %1435 = vmatpush1.msra.mxu0 0.0
      %1436 = vmatprep.subr.mxu0 0.0
      %1437 = vmatpush1.msra.mxu0 0.0
      %1438 = vmatprep.subr.mxu0 0.0
      %1439 = vmatpush1.msra.mxu0 0.0
      %1440 = vmatprep.subr.mxu0 0.0
      %1441 = vmatpush1.msra.mxu0 0.0
      %1442 = vmatprep.subr.mxu0 0.0
      %1443 = vmatpush1.msra.mxu0 0.0
      %1444 = vmatprep.subr.mxu0 0.0
      %1445 = vmatpush1.msra.mxu0 0.0
      %1446 = vmatprep.subr.mxu0 0.0
      %1447 = vmatpush1.msra.mxu0 0.0
      %1448 = vmatprep.subr.mxu0 0.0
      %1449 = vmatpush1.msra.mxu0 0.0
      %1450 = vmatprep.subr.mxu0 0.0
      %1451 = vmatpush1.msra.mxu0 0.0
      %1452 = vmatprep.subr.mxu0 0.0
      %1453 = vmatpush1.msra.mxu0 0.0
      %1454 = vmatprep.subr.mxu0 0.0
      %1455 = vmatpush1.msra.mxu0 0.0
      %1456 = vmatprep.subr.mxu0 0.0
      %1457 = vmatpush1.msra.mxu0 0.0
      %1458 = vmatprep.subr.mxu0 0.0
      %1459 = vmatpush1.msra.mxu0 0.0
      %1460 = vmatprep.subr.mxu0 0.0
      %1461 = vmatpush1.msra.mxu0 0.0
      %1462 = vmatprep.subr.mxu0 0.0
      %1463 = vmatpush1.msra.mxu0 0.0
      %1464 = vmatprep.subr.mxu0 0.0
      %1465 = vmatpush1.msra.mxu0 0.0
      %1466 = vmatprep.subr.mxu0 0.0
      %1467 = vmatpush1.msra.mxu0 0.0
      %1468 = vmatprep.subr.mxu0 0.0
      %1469 = vmatpush1.msra.mxu0 0.0
      %1470 = vmatprep.subr.mxu0 0.0
      %1471 = vmatpush1.msra.mxu0 0.0
      %1472 = vmatprep.subr.mxu0 0.0
      %1473 = vmatpush1.msra.mxu0 0.0
      %1474 = vmatprep.subr.mxu0 0.0
      %1475 = vmatpush1.msra.mxu0 0.0
      %1476 = vmatprep.subr.mxu0 0.0
      %1477 = vmatpush1.msra.mxu0 0.0
      %1478 = vmatprep.subr.mxu0 0.0
      %1479 = vmatpush1.msra.mxu0 0.0
      %1480 = vmatprep.subr.mxu0 0.0
      %1481 = vmatpush1.msra.mxu0 0.0
      %1482 = vmatprep.mubr.f32.mxu0 0.0
      %1483 = vmatmul.mubr.f32.gmra.mrb[0].mxu0 %v1416
      %v1484 = vpop.f32.mrb[0].mxu0
      %v1485 = vadd.f32 %v1341, %v1484
      %v1486 = vpop.f32.mrb[0].mxu0
      %v1487 = vadd.f32 %v1343, %v1486
      %1488 = vdwg.mxu0
      %1489 = vmatprep.subr.mxu0 0.0
      %1490 = vmatpush1.msra.mxu0 %v502
      %1491 = vmatprep.subr.mxu0 0.0
      %1492 = vmatpush1.msra.mxu0 0.0
      %1493 = vmatprep.subr.mxu0 0.0
      %1494 = vmatpush1.msra.mxu0 0.0
      %1495 = vmatprep.subr.mxu0 0.0
      %1496 = vmatpush1.msra.mxu0 0.0
      %1497 = vmatprep.subr.mxu0 0.0
      %1498 = vmatpush1.msra.mxu0 0.0
      %1499 = vmatprep.subr.mxu0 0.0
      %1500 = vmatpush1.msra.mxu0 0.0
      %1501 = vmatprep.subr.mxu0 0.0
      %1502 = vmatpush1.msra.mxu0 0.0
      %1503 = vmatprep.subr.mxu0 0.0
      %1504 = vmatpush1.msra.mxu0 0.0
      %1505 = vmatprep.subr.mxu0 0.0
      %1506 = vmatpush1.msra.mxu0 0.0
      %1507 = vmatprep.subr.mxu0 0.0
      %1508 = vmatpush1.msra.mxu0 0.0
      %1509 = vmatprep.subr.mxu0 0.0
      %1510 = vmatpush1.msra.mxu0 0.0
      %1511 = vmatprep.subr.mxu0 0.0
      %1512 = vmatpush1.msra.mxu0 0.0
      %1513 = vmatprep.subr.mxu0 0.0
      %1514 = vmatpush1.msra.mxu0 0.0
      %1515 = vmatprep.subr.mxu0 0.0
      %1516 = vmatpush1.msra.mxu0 0.0
      %1517 = vmatprep.subr.mxu0 0.0
      %1518 = vmatpush1.msra.mxu0 0.0
      %1519 = vmatprep.subr.mxu0 0.0
      %1520 = vmatpush1.msra.mxu0 0.0
      %1521 = vmatprep.subr.mxu0 0.0
      %1522 = vmatpush1.msra.mxu0 0.0
      %1523 = vmatprep.subr.mxu0 0.0
      %1524 = vmatpush1.msra.mxu0 0.0
      %1525 = vmatprep.subr.mxu0 0.0
      %1526 = vmatpush1.msra.mxu0 0.0
      %1527 = vmatprep.subr.mxu0 0.0
      %1528 = vmatpush1.msra.mxu0 0.0
      %1529 = vmatprep.subr.mxu0 0.0
      %1530 = vmatpush1.msra.mxu0 0.0
      %1531 = vmatprep.subr.mxu0 0.0
      %1532 = vmatpush1.msra.mxu0 0.0
      %1533 = vmatprep.subr.mxu0 0.0
      %1534 = vmatpush1.msra.mxu0 0.0
      %1535 = vmatprep.subr.mxu0 0.0
      %1536 = vmatpush1.msra.mxu0 0.0
      %1537 = vmatprep.subr.mxu0 0.0
      %1538 = vmatpush1.msra.mxu0 0.0
      %1539 = vmatprep.subr.mxu0 0.0
      %1540 = vmatpush1.msra.mxu0 0.0
      %1541 = vmatprep.subr.mxu0 0.0
      %1542 = vmatpush1.msra.mxu0 0.0
      %1543 = vmatprep.subr.mxu0 0.0
      %1544 = vmatpush1.msra.mxu0 0.0
      %1545 = vmatprep.subr.mxu0 0.0
      %1546 = vmatpush1.msra.mxu0 0.0
      %1547 = vmatprep.subr.mxu0 0.0
      %1548 = vmatpush1.msra.mxu0 0.0
      %1549 = vmatprep.subr.mxu0 0.0
      %1550 = vmatpush1.msra.mxu0 0.0
      %1551 = vmatprep.subr.mxu0 0.0
      %1552 = vmatpush1.msra.mxu0 0.0
      %1553 = vmatprep.mubr.f32.mxu0 0.0
      %1554 = vmatmul.mubr.f32.gmra.mrb[0].mxu0 %v1416
      %v1555 = vpop.f32.mrb[0].mxu0
      %v1556 = vadd.f32 %v1412, %v1555
      %v1557 = vpop.f32.mrb[0].mxu0
      %1558 = vdwg.mxu0
      %s1559 = scalar_lea.vmem %s1, 64
      %v1560 = vld [vmem:[%s1559] sm:$0xff]
      %v1562 = vsel %vm342, %v1560, 0
      %1564 = vmatprep.subr.mxu0 %v652
      %1565 = vmatpush1.msra.mxu0 %v650
      %1566 = vmatprep.subr.mxu0 0.0
      %1567 = vmatpush1.msra.mxu0 0.0
      %1568 = vmatprep.subr.mxu0 0.0
      %1569 = vmatpush1.msra.mxu0 0.0
      %1570 = vmatprep.subr.mxu0 0.0
      %1571 = vmatpush1.msra.mxu0 0.0
      %1572 = vmatprep.subr.mxu0 0.0
      %1573 = vmatpush1.msra.mxu0 0.0
      %1574 = vmatprep.subr.mxu0 0.0
      %1575 = vmatpush1.msra.mxu0 0.0
      %1576 = vmatprep.subr.mxu0 0.0
      %1577 = vmatpush1.msra.mxu0 0.0
      %1578 = vmatprep.subr.mxu0 0.0
      %1579 = vmatpush1.msra.mxu0 0.0
      %1580 = vmatprep.subr.mxu0 0.0
      %1581 = vmatpush1.msra.mxu0 0.0
      %1582 = vmatprep.subr.mxu0 0.0
      %1583 = vmatpush1.msra.mxu0 0.0
      %1584 = vmatprep.subr.mxu0 0.0
      %1585 = vmatpush1.msra.mxu0 0.0
      %1586 = vmatprep.subr.mxu0 0.0
      %1587 = vmatpush1.msra.mxu0 0.0
      %1588 = vmatprep.subr.mxu0 0.0
      %1589 = vmatpush1.msra.mxu0 0.0
      %1590 = vmatprep.subr.mxu0 0.0
      %1591 = vmatpush1.msra.mxu0 0.0
      %1592 = vmatprep.subr.mxu0 0.0
      %1593 = vmatpush1.msra.mxu0 0.0
      %1594 = vmatprep.subr.mxu0 0.0
      %1595 = vmatpush1.msra.mxu0 0.0
      %1596 = vmatprep.subr.mxu0 0.0
      %1597 = vmatpush1.msra.mxu0 0.0
      %1598 = vmatprep.subr.mxu0 0.0
      %1599 = vmatpush1.msra.mxu0 0.0
      %1600 = vmatprep.subr.mxu0 0.0
      %1601 = vmatpush1.msra.mxu0 0.0
      %1602 = vmatprep.subr.mxu0 0.0
      %1603 = vmatpush1.msra.mxu0 0.0
      %1604 = vmatprep.subr.mxu0 0.0
      %1605 = vmatpush1.msra.mxu0 0.0
      %1606 = vmatprep.subr.mxu0 0.0
      %1607 = vmatpush1.msra.mxu0 0.0
      %1608 = vmatprep.subr.mxu0 0.0
      %1609 = vmatpush1.msra.mxu0 0.0
      %1610 = vmatprep.subr.mxu0 0.0
      %1611 = vmatpush1.msra.mxu0 0.0
      %1612 = vmatprep.subr.mxu0 0.0
      %1613 = vmatpush1.msra.mxu0 0.0
      %1614 = vmatprep.subr.mxu0 0.0
      %1615 = vmatpush1.msra.mxu0 0.0
      %1616 = vmatprep.subr.mxu0 0.0
      %1617 = vmatpush1.msra.mxu0 0.0
      %1618 = vmatprep.subr.mxu0 0.0
      %1619 = vmatpush1.msra.mxu0 0.0
      %1620 = vmatprep.subr.mxu0 0.0
      %1621 = vmatpush1.msra.mxu0 0.0
      %1622 = vmatprep.subr.mxu0 0.0
      %1623 = vmatpush1.msra.mxu0 0.0
      %1624 = vmatprep.subr.mxu0 0.0
      %1625 = vmatpush1.msra.mxu0 0.0
      %1626 = vmatprep.subr.mxu0 0.0
      %1627 = vmatpush1.msra.mxu0 0.0
      %1628 = vmatprep.mubr.f32.mxu0 0.0
      %1629 = vmatmul.mubr.f32.gmra.mrb[0].mxu0 %v1562
      %v1630 = vpop.f32.mrb[0].mxu0
      %v1631 = vadd.f32 0.0, %v1630
      %v1632 = vpop.f32.mrb[0].mxu0
      %v1633 = vadd.f32 0.0, %v1632
      %1634 = vdwg.mxu0
      %1635 = vmatprep.subr.mxu0 0.0
      %1636 = vmatpush1.msra.mxu0 %v655
      %1637 = vmatprep.subr.mxu0 0.0
      %1638 = vmatpush1.msra.mxu0 0.0
      %1639 = vmatprep.subr.mxu0 0.0
      %1640 = vmatpush1.msra.mxu0 0.0
      %1641 = vmatprep.subr.mxu0 0.0
      %1642 = vmatpush1.msra.mxu0 0.0
      %1643 = vmatprep.subr.mxu0 0.0
      %1644 = vmatpush1.msra.mxu0 0.0
      %1645 = vmatprep.subr.mxu0 0.0
      %1646 = vmatpush1.msra.mxu0 0.0
      %1647 = vmatprep.subr.mxu0 0.0
      %1648 = vmatpush1.msra.mxu0 0.0
      %1649 = vmatprep.subr.mxu0 0.0
      %1650 = vmatpush1.msra.mxu0 0.0
      %1651 = vmatprep.subr.mxu0 0.0
      %1652 = vmatpush1.msra.mxu0 0.0
      %1653 = vmatprep.subr.mxu0 0.0
      %1654 = vmatpush1.msra.mxu0 0.0
      %1655 = vmatprep.subr.mxu0 0.0
      %1656 = vmatpush1.msra.mxu0 0.0
      %1657 = vmatprep.subr.mxu0 0.0
      %1658 = vmatpush1.msra.mxu0 0.0
      %1659 = vmatprep.subr.mxu0 0.0
      %1660 = vmatpush1.msra.mxu0 0.0
      %1661 = vmatprep.subr.mxu0 0.0
      %1662 = vmatpush1.msra.mxu0 0.0
      %1663 = vmatprep.subr.mxu0 0.0
      %1664 = vmatpush1.msra.mxu0 0.0
      %1665 = vmatprep.subr.mxu0 0.0
      %1666 = vmatpush1.msra.mxu0 0.0
      %1667 = vmatprep.subr.mxu0 0.0
      %1668 = vmatpush1.msra.mxu0 0.0
      %1669 = vmatprep.subr.mxu0 0.0
      %1670 = vmatpush1.msra.mxu0 0.0
      %1671 = vmatprep.subr.mxu0 0.0
      %1672 = vmatpush1.msra.mxu0 0.0
      %1673 = vmatprep.subr.mxu0 0.0
      %1674 = vmatpush1.msra.mxu0 0.0
      %1675 = vmatprep.subr.mxu0 0.0
      %1676 = vmatpush1.msra.mxu0 0.0
      %1677 = vmatprep.subr.mxu0 0.0
      %1678 = vmatpush1.msra.mxu0 0.0
      %1679 = vmatprep.subr.mxu0 0.0
      %1680 = vmatpush1.msra.mxu0 0.0
      %1681 = vmatprep.subr.mxu0 0.0
      %1682 = vmatpush1.msra.mxu0 0.0
      %1683 = vmatprep.subr.mxu0 0.0
      %1684 = vmatpush1.msra.mxu0 0.0
      %1685 = vmatprep.subr.mxu0 0.0
      %1686 = vmatpush1.msra.mxu0 0.0
      %1687 = vmatprep.subr.mxu0 0.0
      %1688 = vmatpush1.msra.mxu0 0.0
      %1689 = vmatprep.subr.mxu0 0.0
      %1690 = vmatpush1.msra.mxu0 0.0
      %1691 = vmatprep.subr.mxu0 0.0
      %1692 = vmatpush1.msra.mxu0 0.0
      %1693 = vmatprep.subr.mxu0 0.0
      %1694 = vmatpush1.msra.mxu0 0.0
      %1695 = vmatprep.subr.mxu0 0.0
      %1696 = vmatpush1.msra.mxu0 0.0
      %1697 = vmatprep.subr.mxu0 0.0
      %1698 = vmatpush1.msra.mxu0 0.0
      %1699 = vmatprep.mubr.f32.mxu0 0.0
      %1700 = vmatmul.mubr.f32.gmra.mrb[0].mxu0 %v1562
      %v1701 = vpop.f32.mrb[0].mxu0
      %v1702 = vadd.f32 0.0, %v1701
      %v1703 = vpop.f32.mrb[0].mxu0
      %1704 = vdwg.mxu0
      %v1705 = vadd.f32 %v1485, %v1631
      %v1706 = vadd.f32 %v1487, %v1633
      %v1707 = vadd.f32 %v1556, %v1702
      %1711 = vrot.lane.b32.xlu0 %v1705, 110
      %v1712 = vpop.permute.xlu0 %1711
      %1713 = vrot.lane.b32.xlu0 %v1706, 110
      %v1714 = vpop.permute.xlu0 %1713
      %1715 = vrot.lane.b32.xlu0 %v1707, 110
      %v1716 = vpop.permute.xlu0 %1715
      %vm1717 = vcmask 900096
      %v1718 = vsel %vm1717, %v1712, %v1714
      %v1719 = vsel %vm1717, %v1714, %v1716
      %1723 = vrot.lane.b32.xlu0 %v1705, 50
      %v1724 = vpop.permute.xlu0 %1723
      %vm1726 = vcmask 408576
      %v1727 = vsel %vm1726, %v1716, %v1724
      %v1728 = vadd.f32 %v1264, %v1718
      %v1729 = vadd.f32 %v1265, %v1719
      %v1730 = vadd.f32 %v1266, %v1727
      %v1731 = vmul.f32 %v1728, %v292
      %v1732 = vmul.f32 %v1729, %v296
      %v1733 = vmul.f32 %v1730, %v300
      %v1734 = vsel %vm346, %v1731, 0.0
      %v1735 = vsel %vm346, %v1732, 0.0
      %v1736 = vadd.f32 %v1734, %v1735
      %vm1737 = vcmask 553984
      %v1738 = vsel %vm1737, %v1733, 0.0
      %v1739 = vadd.f32 %v1736, %v1738
      %1740 = vadd.xlane.f32.xlu0 %v1739
      %v1741 = vpop.xlane.xlu0 %1740
      %v1742 = vmul.f32 %v1731, %v1731
      %v1743 = vmul.f32 %v1732, %v1732
      %v1744 = vmul.f32 %v1733, %v1733
      %v1745 = vsel %vm346, %v1742, 0.0
      %v1746 = vsel %vm346, %v1743, 0.0
      %v1747 = vadd.f32 %v1745, %v1746
      %v1748 = vsel %vm1737, %v1744, 0.0
      %v1749 = vadd.f32 %v1747, %v1748
      %1750 = vadd.xlane.f32.xlu0 %v1749
      %v1751 = vpop.xlane.xlu0 %1750
      %v1752 = vlaneseq
      %v1753 = vand.u32 %v1752, 127
      %vm1754 = vcmp.eq.s32.totalorder %v1753, 0
      %v1755 = vsel %vm1754, %v1741, %v1751
      %vm1756 = vcmask 13312
      %1757 = vst.msk [vmem:[%s262] sm:$0x3f] %vm1756, %v1755
      %1758 = vst [vmem:[%s258] sm:$0x3f] %v1731
      %1759 = vst [vmem:[%s258 + $0x8] sm:$0x3f] %v1732
      %1760 = vst.msk [vmem:[%s258 + $0x10] sm:$0x3f] %vm1737, %v1733
      %p1761 = scmp.lt.s32.totalorder %s18, 1
      %s1762 = scalar_select %p1761, %s18, 1
      %s1763 = smul.addr %s1762, 3
      %s1764 = smul.addr %s1763, 8
      %s1765 = scalar_lea.vmem %s5, %s1764
      %p1766 = scmp.lt.s32.totalorder %s18, 1
      %s1767 = scalar_select %p1766, %s18, 1
      %s1768 = smul.addr %s1767, 8
      %s1769 = scalar_lea.vmem %s6, %s1768
      // Predicated region
      $region41: #{dncnn_pallas.11} parent=39 // pred_check
        %p1770 = pneg %p146
      $region42: #{dncnn_pallas.11} parent=39 // pred_check_branch
        %1772 = sbr.rel (%p1770) target = $region44
      $region43: #{dncnn_pallas.11} parent=39 // pred_region
        _
      $region44: #{dncnn_pallas.11} parent=39 // pred_fallthru
        _
      // Predicated region
      $region45: #{dncnn_pallas.11} parent=39 // pred_check
        %p1773 = pneg %p172
      $region46: #{dncnn_pallas.11} parent=39 // pred_check_branch
        %1775 = sbr.rel (%p1773) target = $region48
      $region47: #{dncnn_pallas.11} parent=39 // pred_region
        _
      $region48: #{dncnn_pallas.11} parent=39 // pred_fallthru
        _
    $region40: #{dncnn_pallas.11} parent=5 // pred_fallthru
      _
    %p1776 = scmp.le.s32.totalorder 2, %s13
    // Predicated region
    $region49: #{dncnn_pallas.11} parent=5 // pred_check
      %p1777 = pneg %p1776
    $region50: #{dncnn_pallas.11} parent=5 // pred_check_branch
      %1779 = sbr.rel (%p1777) target = $region52
    $region51: #{dncnn_pallas.11} parent=5 // pred_region
      %s1780 = ssub.s32 %s13, 2
      // Predicated region
      $region53: #{dncnn_pallas.11} parent=51 // pred_check
        %p1781 = pneg %p152
      $region54: #{dncnn_pallas.11} parent=51 // pred_check_branch
        %1783 = sbr.rel (%p1781) target = $region56
      $region55: #{dncnn_pallas.11} parent=51 // pred_region
        %p1784 = scmp.lt.s32.totalorder %s19, 1
        %s1785 = scalar_select %p1784, %s19, 1
        %s1786 = smul.addr %s1785, 3
        %s1787 = smul.addr %s1786, 8
        %s1788 = scalar_lea.vmem %s5, %s1787
      $region56: #{dncnn_pallas.11} parent=51 // pred_fallthru
        _
      // Predicated region
      $region57: #{dncnn_pallas.11} parent=51 // pred_check
        %p1789 = pneg %p178
      $region58: #{dncnn_pallas.11} parent=51 // pred_check_branch
        %1791 = sbr.rel (%p1789) target = $region60
      $region59: #{dncnn_pallas.11} parent=51 // pred_region
        %p1792 = scmp.lt.s32.totalorder %s19, 1
        %s1793 = scalar_select %p1792, %s19, 1
        %s1794 = smul.addr %s1793, 8
        %s1795 = scalar_lea.vmem %s6, %s1794
      $region60: #{dncnn_pallas.11} parent=51 // pred_fallthru
        _
    $region52: #{dncnn_pallas.11} parent=5 // pred_fallthru
      _
  $region6: #{dncnn_pallas.11} parent=0 // loop_footer
    %s17 = sadd.s32 1, %s13
  $region7: #{dncnn_pallas.11} parent=0 // loop_footer_branch
    %12 = sbr.rel target = $region3
  $region8: #{dncnn_pallas.11} parent=0 // loop_exit
    _

// kernel: dncnn_pallas.19
$region0: #{dncnn_pallas.19}
  #allocation0 [shape = 'u32[]', space=smem, size = 0x4, offset = 0x4, fixed_abs, tag = 'smem constant byte address 0x4 - core index']
  #allocation1 [shape = 'u32[144,128]{1,0:T(1,128)}', space=vmem, size = 0x12000, scoped, tag = 'internal scratch']
  %s0 = inlined_call_operand.vmem [shape: f32[2,6,324], index: 0, kind: input, shape index: {}]
  %s1 = inlined_call_operand.vmem [shape: f32[9,8,6], index: 1, kind: input, shape index: {}]
  %s2 = inlined_call_operand.vmem [shape: f32[6,1], index: 2, kind: input, shape index: {}]
  %s3 = inlined_call_operand.vmem [shape: f32[6,1], index: 3, kind: input, shape index: {}]
  %s4 = inlined_call_operand.vmem [shape: f32[1,324], index: 4, kind: input, shape index: {}]
  %s5 = inlined_call_operand.vmem [shape: f32[2,3,324], index: 5, kind: output, shape index: {0}]
  %s6 = inlined_call_operand.hbm [shape: f32[2,3,2], index: 6, kind: output, shape index: {1}]
  %7 = xla_tuple %s5, %s6
  %s8 = sld [smem:[#allocation0]]
  $region61: #{dncnn_pallas.19} parent=0
    _
  %s10 = ssub.s32 1, %s8
  %s11 = scalar_select 0, %s10, %s8
  $region1: #{dncnn_pallas.19} parent=0
    #allocation2 [shape = 'u8[4096]{0}', space=vmem, size = 0x1000, scoped, tag = 'output window, operand 1']
    #allocation3 [shape = 's32[2]{0}', space=sflag, size = 0x8, scoped, tag = 'scoped memory for dncnn_pallas.19']
    %12 = vsyncpa [#allocation3], 0
    %s13 = scalar_lea.sflag [#allocation3], 1
    %14 = vsyncpa %s13, 0
    loop: start=0, step=1, limit=4
    $region2: #{dncnn_pallas.19} parent=1 // loop_pre_header
      _
    $region3: #{dncnn_pallas.19} parent=1 // loop_header
      %s16 = sphi 0, %s20
      %p17 = scmp.ge.s32.totalorder %s16, 4
      %s26 = sphi 0, %s28
      %s29 = sphi 0, %s26
      %s30 = sphi 0, %s29
      %s46 = sphi 0, %s30
      %s50 = sphi 0, %s50
      %s52 = sphi 0, %s50
      %s53 = sphi 0, %s52
      %s67 = sphi 0, %s53
      %s71 = sphi 0, %s71
      %s73 = sphi 0, %s71
      %s74 = sphi 0, %s73
      %s88 = sphi 0, %s74
      %s92 = sphi 0, %s92
      %s94 = sphi 0, %s92
      %s95 = sphi 0, %s94
      %s109 = sphi 0, %s95
      %s113 = sphi 0, %s113
      %s115 = sphi 0, %s113
      %s116 = sphi 0, %s115
      %s130 = sphi 0, %s116
      %s136 = sphi 0, %s138
      %s139 = sphi 0, %s136
      %s140 = sphi 0, %s139
      %s156 = sphi 0, %s140
      %s162 = sphi 0, %s164
      %s165 = sphi 0, %s162
      %s166 = sphi 0, %s165
      %s182 = sphi 0, %s166
    $region4: #{dncnn_pallas.19} parent=1 // loop_header_branch
      %19 = sbr.rel (%p17) target = $region8
    $region5: #{dncnn_pallas.19} parent=1 // loop_body
      %s21 = ssub.s32 %s16, 1
      %s22 = ssub.s32 %s16, 2
      %s23 = sadd.s32 %s16, 1
      %s24 = ssub.s32 %s16, %s23
      %p25 = scmp.eq.s32.totalorder %s24, 0
      %s27 = sadd.s32 %s26, 1
      %s28 = scalar_select %p25, %s26, %s27
      %p31 = pneg %p25
      %p32 = scmp.eq.s32.totalorder %s16, 1
      %p33 = por %p31, %p32
      %p34 = scmp.ne.s32.totalorder %s26, %s29
      %p35 = scmp.eq.s32.totalorder %s16, 0
      %p36 = por %p34, %p35
      %p37 = scmp.ne.s32.totalorder %s26, %s29
      %p38 = scmp.eq.s32.totalorder %s21, 1
      %p39 = por %p37, %p38
      %p40 = scmp.ne.s32.totalorder %s29, %s30
      %p41 = scmp.eq.s32.totalorder %s21, 0
      %p42 = por %p40, %p41
      %p43 = scmp.ne.s32.totalorder %s29, %s30
      %p44 = scmp.eq.s32.totalorder %s22, 1
      %p45 = por %p43, %p44
      %p47 = scmp.ne.s32.totalorder %s30, %s46
      %p48 = scmp.eq.s32.totalorder %s22, 0
      %p49 = por %p47, %p48
      %s51 = sadd.s32 %s50, 1
      %p54 = scmp.eq.s32.totalorder %s16, 1
      %p55 = scmp.ne.s32.totalorder %s50, %s52
      %p56 = scmp.eq.s32.totalorder %s16, 0
      %p57 = por %p55, %p56
      %p58 = scmp.ne.s32.totalorder %s50, %s52
      %p59 = scmp.eq.s32.totalorder %s21, 1
      %p60 = por %p58, %p59
      %p61 = scmp.ne.s32.totalorder %s52, %s53
      %p62 = scmp.eq.s32.totalorder %s21, 0
      %p63 = por %p61, %p62
      %p64 = scmp.ne.s32.totalorder %s52, %s53
      %p65 = scmp.eq.s32.totalorder %s22, 1
      %p66 = por %p64, %p65
      %p68 = scmp.ne.s32.totalorder %s53, %s67
      %p69 = scmp.eq.s32.totalorder %s22, 0
      %p70 = por %p68, %p69
      %s72 = sadd.s32 %s71, 1
      %p75 = scmp.eq.s32.totalorder %s16, 1
      %p76 = scmp.ne.s32.totalorder %s71, %s73
      %p77 = scmp.eq.s32.totalorder %s16, 0
      %p78 = por %p76, %p77
      %p79 = scmp.ne.s32.totalorder %s71, %s73
      %p80 = scmp.eq.s32.totalorder %s21, 1
      %p81 = por %p79, %p80
      %p82 = scmp.ne.s32.totalorder %s73, %s74
      %p83 = scmp.eq.s32.totalorder %s21, 0
      %p84 = por %p82, %p83
      %p85 = scmp.ne.s32.totalorder %s73, %s74
      %p86 = scmp.eq.s32.totalorder %s22, 1
      %p87 = por %p85, %p86
      %p89 = scmp.ne.s32.totalorder %s74, %s88
      %p90 = scmp.eq.s32.totalorder %s22, 0
      %p91 = por %p89, %p90
      %s93 = sadd.s32 %s92, 1
      %p96 = scmp.eq.s32.totalorder %s16, 1
      %p97 = scmp.ne.s32.totalorder %s92, %s94
      %p98 = scmp.eq.s32.totalorder %s16, 0
      %p99 = por %p97, %p98
      %p100 = scmp.ne.s32.totalorder %s92, %s94
      %p101 = scmp.eq.s32.totalorder %s21, 1
      %p102 = por %p100, %p101
      %p103 = scmp.ne.s32.totalorder %s94, %s95
      %p104 = scmp.eq.s32.totalorder %s21, 0
      %p105 = por %p103, %p104
      %p106 = scmp.ne.s32.totalorder %s94, %s95
      %p107 = scmp.eq.s32.totalorder %s22, 1
      %p108 = por %p106, %p107
      %p110 = scmp.ne.s32.totalorder %s95, %s109
      %p111 = scmp.eq.s32.totalorder %s22, 0
      %p112 = por %p110, %p111
      %s114 = sadd.s32 %s113, 1
      %p117 = scmp.eq.s32.totalorder %s16, 1
      %p118 = scmp.ne.s32.totalorder %s113, %s115
      %p119 = scmp.eq.s32.totalorder %s16, 0
      %p120 = por %p118, %p119
      %p121 = scmp.ne.s32.totalorder %s113, %s115
      %p122 = scmp.eq.s32.totalorder %s21, 1
      %p123 = por %p121, %p122
      %p124 = scmp.ne.s32.totalorder %s115, %s116
      %p125 = scmp.eq.s32.totalorder %s21, 0
      %p126 = por %p124, %p125
      %p127 = scmp.ne.s32.totalorder %s115, %s116
      %p128 = scmp.eq.s32.totalorder %s22, 1
      %p129 = por %p127, %p128
      %p131 = scmp.ne.s32.totalorder %s116, %s130
      %p132 = scmp.eq.s32.totalorder %s22, 0
      %p133 = por %p131, %p132
      %s134 = ssub.s32 %s16, %s23
      %p135 = scmp.eq.s32.totalorder %s134, 0
      %s137 = sadd.s32 %s136, 1
      %s138 = scalar_select %p135, %s136, %s137
      %p141 = pneg %p135
      %p142 = scmp.eq.s32.totalorder %s16, 1
      %p143 = por %p141, %p142
      %p144 = scmp.ne.s32.totalorder %s136, %s139
      %p145 = scmp.eq.s32.totalorder %s16, 0
      %p146 = por %p144, %p145
      %p147 = scmp.ne.s32.totalorder %s136, %s139
      %p148 = scmp.eq.s32.totalorder %s21, 1
      %p149 = por %p147, %p148
      %p150 = scmp.ne.s32.totalorder %s139, %s140
      %p151 = scmp.eq.s32.totalorder %s21, 0
      %p152 = por %p150, %p151
      %p153 = scmp.ne.s32.totalorder %s139, %s140
      %p154 = scmp.eq.s32.totalorder %s22, 1
      %p155 = por %p153, %p154
      %p157 = scmp.ne.s32.totalorder %s140, %s156
      %p158 = scmp.eq.s32.totalorder %s22, 0
      %p159 = por %p157, %p158
      %s160 = ssub.s32 %s16, %s23
      %p161 = scmp.eq.s32.totalorder %s160, 0
      %s163 = sadd.s32 %s162, 1
      %s164 = scalar_select %p161, %s162, %s163
      %p167 = pneg %p161
      %p168 = scmp.eq.s32.totalorder %s16, 1
      %p169 = por %p167, %p168
      %p170 = scmp.ne.s32.totalorder %s162, %s165
      %p171 = scmp.eq.s32.totalorder %s16, 0
      %p172 = por %p170, %p171
      %p173 = scmp.ne.s32.totalorder %s162, %s165
      %p174 = scmp.eq.s32.totalorder %s21, 1
      %p175 = por %p173, %p174
      %p176 = scmp.ne.s32.totalorder %s165, %s166
      %p177 = scmp.eq.s32.totalorder %s21, 0
      %p178 = por %p176, %p177
      %p179 = scmp.ne.s32.totalorder %s165, %s166
      %p180 = scmp.eq.s32.totalorder %s22, 1
      %p181 = por %p179, %p180
      %p183 = scmp.ne.s32.totalorder %s166, %s182
      %p184 = scmp.eq.s32.totalorder %s22, 0
      %p185 = por %p183, %p184
      %p186 = scmp.le.s32.totalorder 1, %s16
      %p187 = scmp.lt.s32.totalorder %s16, 3
      %p188 = pnand %p186, %p187
      %p189 = pneg %p188
      // Predicated region
      $region9: #{dncnn_pallas.19} parent=5 // pred_check
        _
      $region10: #{dncnn_pallas.19} parent=5 // pred_check_branch
        %191 = sbr.rel (%p188) target = $region12
      $region11: #{dncnn_pallas.19} parent=5 // pred_region
        %s192 = ssub.s32 %s16, 1
        // Predicated region
        $region13: #{dncnn_pallas.19} parent=11 // pred_check
          %p193 = pneg %p63
        $region14: #{dncnn_pallas.19} parent=11 // pred_check_branch
          %195 = sbr.rel (%p193) target = $region16
        $region15: #{dncnn_pallas.19} parent=11 // pred_region
          _
        $region16: #{dncnn_pallas.19} parent=11 // pred_fallthru
          _
        // Predicated region
        $region17: #{dncnn_pallas.19} parent=11 // pred_check
          %p196 = pneg %p84
        $region18: #{dncnn_pallas.19} parent=11 // pred_check_branch
          %198 = sbr.rel (%p196) target = $region20
        $region19: #{dncnn_pallas.19} parent=11 // pred_region
          _
        $region20: #{dncnn_pallas.19} parent=11 // pred_fallthru
          _
        // Predicated region
        $region21: #{dncnn_pallas.19} parent=11 // pred_check
          %p199 = pneg %p105
        $region22: #{dncnn_pallas.19} parent=11 // pred_check_branch
          %201 = sbr.rel (%p199) target = $region24
        $region23: #{dncnn_pallas.19} parent=11 // pred_region
          _
        $region24: #{dncnn_pallas.19} parent=11 // pred_fallthru
          _
        // Predicated region
        $region25: #{dncnn_pallas.19} parent=11 // pred_check
          %p202 = pneg %p126
        $region26: #{dncnn_pallas.19} parent=11 // pred_check_branch
          %204 = sbr.rel (%p202) target = $region28
        $region27: #{dncnn_pallas.19} parent=11 // pred_region
          _
        $region28: #{dncnn_pallas.19} parent=11 // pred_fallthru
          _
      $region12: #{dncnn_pallas.19} parent=5 // pred_fallthru
        _
      %p205 = scmp.lt.s32.totalorder %s16, 2
      // Predicated region
      $region29: #{dncnn_pallas.19} parent=5 // pred_check
        %p206 = pneg %p205
      $region30: #{dncnn_pallas.19} parent=5 // pred_check_branch
        %208 = sbr.rel (%p206) target = $region32
      $region31: #{dncnn_pallas.19} parent=5 // pred_region
        // Predicated region
        $region33: #{dncnn_pallas.19} parent=31 // pred_check
          %p209 = pneg %p36
        $region34: #{dncnn_pallas.19} parent=31 // pred_check_branch
          %211 = sbr.rel (%p209) target = $region36
        $region35: #{dncnn_pallas.19} parent=31 // pred_region
          %p212 = scmp.lt.s32.totalorder %s16, 1
          %s213 = scalar_select %p212, %s16, 1
          %s214 = smul.addr %s213, 3
          %s215 = smul.addr %s214, 8
          %s216 = scalar_lea.vmem %s0, %s215
        $region36: #{dncnn_pallas.19} parent=31 // pred_fallthru
          _
      $region32: #{dncnn_pallas.19} parent=5 // pred_fallthru
        _
      %p217 = scmp.le.s32.totalorder 1, %s16
      %p218 = scmp.lt.s32.totalorder %s16, 3
      %p219 = pnand %p217, %p218
      %p220 = pneg %p219
      // Predicated region
      $region37: #{dncnn_pallas.19} parent=5 // pred_check
        _
      $region38: #{dncnn_pallas.19} parent=5 // pred_check_branch
        %222 = sbr.rel (%p219) target = $region40
      $region39: #{dncnn_pallas.19} parent=5 // pred_region
        %s223 = ssub.s32 %s16, 1
        %p224 = scmp.lt.s32.totalorder %s21, 1
        %s225 = scalar_select %p224, %s21, 1
        %s226 = smul.addr %s225, 3
        %s227 = smul.addr %s226, 8
        %s228 = scalar_lea.vmem %s0, %s227
        %p229 = pneg %p42
        %p230 = pneg %p39
        %p231 = pneg %p63
        %p232 = pneg %p60
        %p233 = pneg %p84
        %p234 = pneg %p81
        %p235 = pneg %p105
        %p236 = pneg %p102
        %p237 = pneg %p126
        %p238 = pneg %p123
        %p239 = pneg %p152
        %p240 = pneg %p149
        %p241 = scmp.lt.s32.totalorder %s21, 1
        %s242 = scalar_select %p241, %s21, 1
        %s243 = smul.addr %s242, 3
        %s244 = smul.addr %s243, 4
        %s245 = scalar_lea.vmem %s5, %s244
        %p246 = pneg %p178
        %p247 = pneg %p175
        %s248 = sand.u32 %s165, 1
        %s249 = scalar_lea.sflag [#allocation3], %s248
        %s250 = sand.u32 %s165, 1
        %s251 = smul.addr %s250, 4
        %s252 = scalar_lea.vmem [#allocation2], %s251
        %p253 = scmp.lt.s32.totalorder %s21, 1
        %s254 = scalar_select %p253, %s21, 1
        %s255 = smul.addr %s254, 3
        %s256 = smul.addr %s255, 8
        %s257 = scalar_lea.vmem %s0, %s256
        %p258 = scmp.lt.s32.totalorder %s21, 1
        %s259 = scalar_select %p258, %s21, 1
        %s260 = smul.addr %s259, 3
        %s261 = smul.addr %s260, 4
        %s262 = scalar_lea.vmem %s5, %s261
        %v263 = vld [vmem:[%s4] sm:$0x7]
        %v264 = vld [vmem:[%s257] sm:$0x3f]
        %v265 = vld [vmem:[%s257 + $0x8] sm:$0x3f]
        %v266 = vld [vmem:[%s257 + $0x10] sm:$0x3f]
        %v267 = vld [vmem:[%s2] sm:$0x3f]
        %269 = vset.pattern.permute.xlu0 0
        %270 = vperm.xlu0 %269, %v267
        %v271 = vpop.permute.xlu0 %270
        %v273 = vmul.f32 %v264, %v271
        %v274 = vmul.f32 %v265, %v271
        %v275 = vmul.f32 %v266, %v271
        %v276 = vld [vmem:[%s3] sm:$0x3f]
        %278 = vset.pattern.permute.xlu0 0
        %279 = vperm.xlu0 %278, %v276
        %v280 = vpop.permute.xlu0 %279
        %v282 = vadd.f32 %v273, %v280
        %v283 = vadd.f32 %v274, %v280
        %v284 = vadd.f32 %v275, %v280
        %v285 = vmax.f32 %v282, 0.0
        %v286 = vmax.f32 %v283, 0.0
        %v287 = vmax.f32 %v284, 0.0
        %v289 = vlaneseq
        %v290 = vshrl.u32 %v289, 7
        %v291 = vsub.s32 0, %v290
        %v292 = vrot.slane %v263, %v291
        %v293 = vlaneseq
        %v294 = vshrl.u32 %v293, 7
        %v295 = vsub.s32 1, %v294
        %v296 = vrot.slane %v263, %v295
        %v297 = vlaneseq
        %v298 = vshrl.u32 %v297, 7
        %v299 = vsub.s32 2, %v298
        %v300 = vrot.slane %v263, %v299
        %v304 = vmul.f32 %v285, %v292
        %v305 = vmul.f32 %v286, %v296
        %v306 = vmul.f32 %v287, %v300
        %308 = vrot.lane.b32.xlu0 %v306, 61
        %v309 = vpop.permute.xlu0 %308
        %313 = vrot.lane.b32.xlu0 %v304, 1
        %v314 = vpop.permute.xlu0 %313
        %315 = vrot.lane.b32.xlu0 %v305, 1
        %v316 = vpop.permute.xlu0 %315
        %317 = vrot.lane.b32.xlu0 %v306, 1
        %v318 = vpop.permute.xlu0 %317
        %vm319 = vcmask 7168
        %v320 = vsel %vm319, %v314, %v316
        %v321 = vsel %vm319, %v316, %v318
        %v323 = vsel %vm319, %v309, %v314
        %324 = vrot.lane.b32.xlu0 %v304, 127
        %v325 = vpop.permute.xlu0 %324
        %326 = vrot.lane.b32.xlu0 %v305, 127
        %v327 = vpop.permute.xlu0 %326
        %328 = vrot.lane.b32.xlu0 %v306, 127
        %v329 = vpop.permute.xlu0 %328
        %vm330 = vcmask 1039360
        %v331 = vsel %vm330, %v325, %v327
        %v332 = vsel %vm330, %v327, %v329
        %334 = vrot.lane.b32.xlu0 %v304, 67
        %v335 = vpop.permute.xlu0 %334
        %vm337 = vcmask 547840
        %v338 = vsel %vm337, %v329, %v335
        %v339 = vld [vmem:[%s1] sm:$0xff]
        %s340 = scalar_lea.vmem %s1, 8
        %v341 = vld [vmem:[%s340] sm:$0xff]
        %vm342 = vcmask 48128
        %v344 = vsel %vm342, %v341, 0
        %vm346 = vcmask 1045504
        %v347 = vsel %vm346, %v304, 0
        %v349 = vsel %vm346, %v305, 0
        %v351 = vsel %vm346, %v306, 0
        %353 = vmatprep.subr.mxu0 %v349
        %354 = vmatpush1.msra.mxu0 %v347
        %355 = vmatprep.subr.mxu0 0.0
        %356 = vmatpush1.msra.mxu0 0.0
        %357 = vmatprep.subr.mxu0 0.0
        %358 = vmatpush1.msra.mxu0 0.0
        %359 = vmatprep.subr.mxu0 0.0
        %360 = vmatpush1.msra.mxu0 0.0
        %361 = vmatprep.subr.mxu0 0.0
        %362 = vmatpush1.msra.mxu0 0.0
        %363 = vmatprep.subr.mxu0 0.0
        %364 = vmatpush1.msra.mxu0 0.0
        %365 = vmatprep.subr.mxu0 0.0
        %366 = vmatpush1.msra.mxu0 0.0
        %367 = vmatprep.subr.mxu0 0.0
        %368 = vmatpush1.msra.mxu0 0.0
        %369 = vmatprep.subr.mxu0 0.0
        %370 = vmatpush1.msra.mxu0 0.0
        %371 = vmatprep.subr.mxu0 0.0
        %372 = vmatpush1.msra.mxu0 0.0
        %373 = vmatprep.subr.mxu0 0.0
        %374 = vmatpush1.msra.mxu0 0.0
        %375 = vmatprep.subr.mxu0 0.0
        %376 = vmatpush1.msra.mxu0 0.0
        %377 = vmatprep.subr.mxu0 0.0
        %378 = vmatpush1.msra.mxu0 0.0
        %379 = vmatprep.subr.mxu0 0.0
        %380 = vmatpush1.msra.mxu0 0.0
        %381 = vmatprep.subr.mxu0 0.0
        %382 = vmatpush1.msra.mxu0 0.0
        %383 = vmatprep.subr.mxu0 0.0
        %384 = vmatpush1.msra.mxu0 0.0
        %385 = vmatprep.subr.mxu0 0.0
        %386 = vmatpush1.msra.mxu0 0.0
        %387 = vmatprep.subr.mxu0 0.0
        %388 = vmatpush1.msra.mxu0 0.0
        %389 = vmatprep.subr.mxu0 0.0
        %390 = vmatpush1.msra.mxu0 0.0
        %391 = vmatprep.subr.mxu0 0.0
        %392 = vmatpush1.msra.mxu0 0.0
        %393 = vmatprep.subr.mxu0 0.0
        %394 = vmatpush1.msra.mxu0 0.0
        %395 = vmatprep.subr.mxu0 0.0
        %396 = vmatpush1.msra.mxu0 0.0
        %397 = vmatprep.subr.mxu0 0.0
        %398 = vmatpush1.msra.mxu0 0.0
        %399 = vmatprep.subr.mxu0 0.0
        %400 = vmatpush1.msra.mxu0 0.0
        %401 = vmatprep.subr.mxu0 0.0
        %402 = vmatpush1.msra.mxu0 0.0
        %403 = vmatprep.subr.mxu0 0.0
        %404 = vmatpush1.msra.mxu0 0.0
        %405 = vmatprep.subr.mxu0 0.0
        %406 = vmatpush1.msra.mxu0 0.0
        %407 = vmatprep.subr.mxu0 0.0
        %408 = vmatpush1.msra.mxu0 0.0
        %409 = vmatprep.subr.mxu0 0.0
        %410 = vmatpush1.msra.mxu0 0.0
        %411 = vmatprep.subr.mxu0 0.0
        %412 = vmatpush1.msra.mxu0 0.0
        %413 = vmatprep.subr.mxu0 0.0
        %414 = vmatpush1.msra.mxu0 0.0
        %415 = vmatprep.subr.mxu0 0.0
        %416 = vmatpush1.msra.mxu0 0.0
        %417 = vmatprep.mubr.f32.mxu0 0.0
        %418 = vmatmul.mubr.f32.gmra.mrb[0].mxu0 %v344
        %v419 = vpop.f32.mrb[0].mxu0
        %v420 = vadd.f32 0.0, %v419
        %v421 = vpop.f32.mrb[0].mxu0
        %v422 = vadd.f32 0.0, %v421
        %423 = vdwg.mxu0
        %424 = vmatprep.subr.mxu0 0.0
        %425 = vmatpush1.msra.mxu0 %v351
        %426 = vmatprep.subr.mxu0 0.0
        %427 = vmatpush1.msra.mxu0 0.0
        %428 = vmatprep.subr.mxu0 0.0
        %429 = vmatpush1.msra.mxu0 0.0
        %430 = vmatprep.subr.mxu0 0.0
        %431 = vmatpush1.msra.mxu0 0.0
        %432 = vmatprep.subr.mxu0 0.0
        %433 = vmatpush1.msra.mxu0 0.0
        %434 = vmatprep.subr.mxu0 0.0
        %435 = vmatpush1.msra.mxu0 0.0
        %436 = vmatprep.subr.mxu0 0.0
        %437 = vmatpush1.msra.mxu0 0.0
        %438 = vmatprep.subr.mxu0 0.0
        %439 = vmatpush1.msra.mxu0 0.0
        %440 = vmatprep.subr.mxu0 0.0
        %441 = vmatpush1.msra.mxu0 0.0
        %442 = vmatprep.subr.mxu0 0.0
        %443 = vmatpush1.msra.mxu0 0.0
        %444 = vmatprep.subr.mxu0 0.0
        %445 = vmatpush1.msra.mxu0 0.0
        %446 = vmatprep.subr.mxu0 0.0
        %447 = vmatpush1.msra.mxu0 0.0
        %448 = vmatprep.subr.mxu0 0.0
        %449 = vmatpush1.msra.mxu0 0.0
        %450 = vmatprep.subr.mxu0 0.0
        %451 = vmatpush1.msra.mxu0 0.0
        %452 = vmatprep.subr.mxu0 0.0
        %453 = vmatpush1.msra.mxu0 0.0
        %454 = vmatprep.subr.mxu0 0.0
        %455 = vmatpush1.msra.mxu0 0.0
        %456 = vmatprep.subr.mxu0 0.0
        %457 = vmatpush1.msra.mxu0 0.0
        %458 = vmatprep.subr.mxu0 0.0
        %459 = vmatpush1.msra.mxu0 0.0
        %460 = vmatprep.subr.mxu0 0.0
        %461 = vmatpush1.msra.mxu0 0.0
        %462 = vmatprep.subr.mxu0 0.0
        %463 = vmatpush1.msra.mxu0 0.0
        %464 = vmatprep.subr.mxu0 0.0
        %465 = vmatpush1.msra.mxu0 0.0
        %466 = vmatprep.subr.mxu0 0.0
        %467 = vmatpush1.msra.mxu0 0.0
        %468 = vmatprep.subr.mxu0 0.0
        %469 = vmatpush1.msra.mxu0 0.0
        %470 = vmatprep.subr.mxu0 0.0
        %471 = vmatpush1.msra.mxu0 0.0
        %472 = vmatprep.subr.mxu0 0.0
        %473 = vmatpush1.msra.mxu0 0.0
        %474 = vmatprep.subr.mxu0 0.0
        %475 = vmatpush1.msra.mxu0 0.0
        %476 = vmatprep.subr.mxu0 0.0
        %477 = vmatpush1.msra.mxu0 0.0
        %478 = vmatprep.subr.mxu0 0.0
        %479 = vmatpush1.msra.mxu0 0.0
        %480 = vmatprep.subr.mxu0 0.0
        %481 = vmatpush1.msra.mxu0 0.0
        %482 = vmatprep.subr.mxu0 0.0
        %483 = vmatpush1.msra.mxu0 0.0
        %484 = vmatprep.subr.mxu0 0.0
        %485 = vmatpush1.msra.mxu0 0.0
        %486 = vmatprep.subr.mxu0 0.0
        %487 = vmatpush1.msra.mxu0 0.0
        %488 = vmatprep.mubr.f32.mxu0 0.0
        %489 = vmatmul.mubr.f32.gmra.mrb[0].mxu0 %v344
        %v490 = vpop.f32.mrb[0].mxu0
        %v491 = vadd.f32 0.0, %v490
        %v492 = vpop.f32.mrb[0].mxu0
        %493 = vdwg.mxu0
        %v495 = vsel %vm342, %v339, 0
        %v498 = vsel %vm346, %v323, 0
        %v500 = vsel %vm346, %v320, 0
        %v502 = vsel %vm346, %v321, 0
        %504 = vmatprep.subr.mxu0 %v500
        %505 = vmatpush1.msra.mxu0 %v498
        %506 = vmatprep.subr.mxu0 0.0
        %507 = vmatpush1.msra.mxu0 0.0
        %508 = vmatprep.subr.mxu0 0.0
        %509 = vmatpush1.msra.mxu0 0.0
        %510 = vmatprep.subr.mxu0 0.0
        %511 = vmatpush1.msra.mxu0 0.0
        %512 = vmatprep.subr.mxu0 0.0
        %513 = vmatpush1.msra.mxu0 0.0
        %514 = vmatprep.subr.mxu0 0.0
        %515 = vmatpush1.msra.mxu0 0.0
        %516 = vmatprep.subr.mxu0 0.0
        %517 = vmatpush1.msra.mxu0 0.0
        %518 = vmatprep.subr.mxu0 0.0
        %519 = vmatpush1.msra.mxu0 0.0
        %520 = vmatprep.subr.mxu0 0.0
        %521 = vmatpush1.msra.mxu0 0.0
        %522 = vmatprep.subr.mxu0 0.0
        %523 = vmatpush1.msra.mxu0 0.0
        %524 = vmatprep.subr.mxu0 0.0
        %525 = vmatpush1.msra.mxu0 0.0
        %526 = vmatprep.subr.mxu0 0.0
        %527 = vmatpush1.msra.mxu0 0.0
        %528 = vmatprep.subr.mxu0 0.0
        %529 = vmatpush1.msra.mxu0 0.0
        %530 = vmatprep.subr.mxu0 0.0
        %531 = vmatpush1.msra.mxu0 0.0
        %532 = vmatprep.subr.mxu0 0.0
        %533 = vmatpush1.msra.mxu0 0.0
        %534 = vmatprep.subr.mxu0 0.0
        %535 = vmatpush1.msra.mxu0 0.0
        %536 = vmatprep.subr.mxu0 0.0
        %537 = vmatpush1.msra.mxu0 0.0
        %538 = vmatprep.subr.mxu0 0.0
        %539 = vmatpush1.msra.mxu0 0.0
        %540 = vmatprep.subr.mxu0 0.0
        %541 = vmatpush1.msra.mxu0 0.0
        %542 = vmatprep.subr.mxu0 0.0
        %543 = vmatpush1.msra.mxu0 0.0
        %544 = vmatprep.subr.mxu0 0.0
        %545 = vmatpush1.msra.mxu0 0.0
        %546 = vmatprep.subr.mxu0 0.0
        %547 = vmatpush1.msra.mxu0 0.0
        %548 = vmatprep.subr.mxu0 0.0
        %549 = vmatpush1.msra.mxu0 0.0
        %550 = vmatprep.subr.mxu0 0.0
        %551 = vmatpush1.msra.mxu0 0.0
        %552 = vmatprep.subr.mxu0 0.0
        %553 = vmatpush1.msra.mxu0 0.0
        %554 = vmatprep.subr.mxu0 0.0
        %555 = vmatpush1.msra.mxu0 0.0
        %556 = vmatprep.subr.mxu0 0.0
        %557 = vmatpush1.msra.mxu0 0.0
        %558 = vmatprep.subr.mxu0 0.0
        %559 = vmatpush1.msra.mxu0 0.0
        %560 = vmatprep.subr.mxu0 0.0
        %561 = vmatpush1.msra.mxu0 0.0
        %562 = vmatprep.subr.mxu0 0.0
        %563 = vmatpush1.msra.mxu0 0.0
        %564 = vmatprep.subr.mxu0 0.0
        %565 = vmatpush1.msra.mxu0 0.0
        %566 = vmatprep.subr.mxu0 0.0
        %567 = vmatpush1.msra.mxu0 0.0
        %568 = vmatprep.mubr.f32.mxu0 0.0
        %569 = vmatmul.mubr.f32.gmra.mrb[0].mxu0 %v495
        %v570 = vpop.f32.mrb[0].mxu0
        %v571 = vadd.f32 %v420, %v570
        %v572 = vpop.f32.mrb[0].mxu0
        %v573 = vadd.f32 %v422, %v572
        %574 = vdwg.mxu0
        %575 = vmatprep.subr.mxu0 0.0
        %576 = vmatpush1.msra.mxu0 %v502
        %577 = vmatprep.subr.mxu0 0.0
        %578 = vmatpush1.msra.mxu0 0.0
        %579 = vmatprep.subr.mxu0 0.0
        %580 = vmatpush1.msra.mxu0 0.0
        %581 = vmatprep.subr.mxu0 0.0
        %582 = vmatpush1.msra.mxu0 0.0
        %583 = vmatprep.subr.mxu0 0.0
        %584 = vmatpush1.msra.mxu0 0.0
        %585 = vmatprep.subr.mxu0 0.0
        %586 = vmatpush1.msra.mxu0 0.0
        %587 = vmatprep.subr.mxu0 0.0
        %588 = vmatpush1.msra.mxu0 0.0
        %589 = vmatprep.subr.mxu0 0.0
        %590 = vmatpush1.msra.mxu0 0.0
        %591 = vmatprep.subr.mxu0 0.0
        %592 = vmatpush1.msra.mxu0 0.0
        %593 = vmatprep.subr.mxu0 0.0
        %594 = vmatpush1.msra.mxu0 0.0
        %595 = vmatprep.subr.mxu0 0.0
        %596 = vmatpush1.msra.mxu0 0.0
        %597 = vmatprep.subr.mxu0 0.0
        %598 = vmatpush1.msra.mxu0 0.0
        %599 = vmatprep.subr.mxu0 0.0
        %600 = vmatpush1.msra.mxu0 0.0
        %601 = vmatprep.subr.mxu0 0.0
        %602 = vmatpush1.msra.mxu0 0.0
        %603 = vmatprep.subr.mxu0 0.0
        %604 = vmatpush1.msra.mxu0 0.0
        %605 = vmatprep.subr.mxu0 0.0
        %606 = vmatpush1.msra.mxu0 0.0
        %607 = vmatprep.subr.mxu0 0.0
        %608 = vmatpush1.msra.mxu0 0.0
        %609 = vmatprep.subr.mxu0 0.0
        %610 = vmatpush1.msra.mxu0 0.0
        %611 = vmatprep.subr.mxu0 0.0
        %612 = vmatpush1.msra.mxu0 0.0
        %613 = vmatprep.subr.mxu0 0.0
        %614 = vmatpush1.msra.mxu0 0.0
        %615 = vmatprep.subr.mxu0 0.0
        %616 = vmatpush1.msra.mxu0 0.0
        %617 = vmatprep.subr.mxu0 0.0
        %618 = vmatpush1.msra.mxu0 0.0
        %619 = vmatprep.subr.mxu0 0.0
        %620 = vmatpush1.msra.mxu0 0.0
        %621 = vmatprep.subr.mxu0 0.0
        %622 = vmatpush1.msra.mxu0 0.0
        %623 = vmatprep.subr.mxu0 0.0
        %624 = vmatpush1.msra.mxu0 0.0
        %625 = vmatprep.subr.mxu0 0.0
        %626 = vmatpush1.msra.mxu0 0.0
        %627 = vmatprep.subr.mxu0 0.0
        %628 = vmatpush1.msra.mxu0 0.0
        %629 = vmatprep.subr.mxu0 0.0
        %630 = vmatpush1.msra.mxu0 0.0
        %631 = vmatprep.subr.mxu0 0.0
        %632 = vmatpush1.msra.mxu0 0.0
        %633 = vmatprep.subr.mxu0 0.0
        %634 = vmatpush1.msra.mxu0 0.0
        %635 = vmatprep.subr.mxu0 0.0
        %636 = vmatpush1.msra.mxu0 0.0
        %637 = vmatprep.subr.mxu0 0.0
        %638 = vmatpush1.msra.mxu0 0.0
        %639 = vmatprep.mubr.f32.mxu0 0.0
        %640 = vmatmul.mubr.f32.gmra.mrb[0].mxu0 %v495
        %v641 = vpop.f32.mrb[0].mxu0
        %v642 = vadd.f32 %v491, %v641
        %v643 = vpop.f32.mrb[0].mxu0
        %644 = vdwg.mxu0
        %s645 = scalar_lea.vmem %s1, 16
        %v646 = vld [vmem:[%s645] sm:$0xff]
        %v648 = vsel %vm342, %v646, 0
        %v650 = vsel %vm346, %v331, 0
        %v652 = vsel %vm346, %v332, 0
        %v655 = vsel %vm346, %v338, 0
        %657 = vmatprep.subr.mxu0 %v652
        %658 = vmatpush1.msra.mxu0 %v650
        %659 = vmatprep.subr.mxu0 0.0
        %660 = vmatpush1.msra.mxu0 0.0
        %661 = vmatprep.subr.mxu0 0.0
        %662 = vmatpush1.msra.mxu0 0.0
        %663 = vmatprep.subr.mxu0 0.0
        %664 = vmatpush1.msra.mxu0 0.0
        %665 = vmatprep.subr.mxu0 0.0
        %666 = vmatpush1.msra.mxu0 0.0
        %667 = vmatprep.subr.mxu0 0.0
        %668 = vmatpush1.msra.mxu0 0.0
        %669 = vmatprep.subr.mxu0 0.0
        %670 = vmatpush1.msra.mxu0 0.0
        %671 = vmatprep.subr.mxu0 0.0
        %672 = vmatpush1.msra.mxu0 0.0
        %673 = vmatprep.subr.mxu0 0.0
        %674 = vmatpush1.msra.mxu0 0.0
        %675 = vmatprep.subr.mxu0 0.0
        %676 = vmatpush1.msra.mxu0 0.0
        %677 = vmatprep.subr.mxu0 0.0
        %678 = vmatpush1.msra.mxu0 0.0
        %679 = vmatprep.subr.mxu0 0.0
        %680 = vmatpush1.msra.mxu0 0.0
        %681 = vmatprep.subr.mxu0 0.0
        %682 = vmatpush1.msra.mxu0 0.0
        %683 = vmatprep.subr.mxu0 0.0
        %684 = vmatpush1.msra.mxu0 0.0
        %685 = vmatprep.subr.mxu0 0.0
        %686 = vmatpush1.msra.mxu0 0.0
        %687 = vmatprep.subr.mxu0 0.0
        %688 = vmatpush1.msra.mxu0 0.0
        %689 = vmatprep.subr.mxu0 0.0
        %690 = vmatpush1.msra.mxu0 0.0
        %691 = vmatprep.subr.mxu0 0.0
        %692 = vmatpush1.msra.mxu0 0.0
        %693 = vmatprep.subr.mxu0 0.0
        %694 = vmatpush1.msra.mxu0 0.0
        %695 = vmatprep.subr.mxu0 0.0
        %696 = vmatpush1.msra.mxu0 0.0
        %697 = vmatprep.subr.mxu0 0.0
        %698 = vmatpush1.msra.mxu0 0.0
        %699 = vmatprep.subr.mxu0 0.0
        %700 = vmatpush1.msra.mxu0 0.0
        %701 = vmatprep.subr.mxu0 0.0
        %702 = vmatpush1.msra.mxu0 0.0
        %703 = vmatprep.subr.mxu0 0.0
        %704 = vmatpush1.msra.mxu0 0.0
        %705 = vmatprep.subr.mxu0 0.0
        %706 = vmatpush1.msra.mxu0 0.0
        %707 = vmatprep.subr.mxu0 0.0
        %708 = vmatpush1.msra.mxu0 0.0
        %709 = vmatprep.subr.mxu0 0.0
        %710 = vmatpush1.msra.mxu0 0.0
        %711 = vmatprep.subr.mxu0 0.0
        %712 = vmatpush1.msra.mxu0 0.0
        %713 = vmatprep.subr.mxu0 0.0
        %714 = vmatpush1.msra.mxu0 0.0
        %715 = vmatprep.subr.mxu0 0.0
        %716 = vmatpush1.msra.mxu0 0.0
        %717 = vmatprep.subr.mxu0 0.0
        %718 = vmatpush1.msra.mxu0 0.0
        %719 = vmatprep.subr.mxu0 0.0
        %720 = vmatpush1.msra.mxu0 0.0
        %721 = vmatprep.mubr.f32.mxu0 0.0
        %722 = vmatmul.mubr.f32.gmra.mrb[0].mxu0 %v648
        %v723 = vpop.f32.mrb[0].mxu0
        %v724 = vadd.f32 0.0, %v723
        %v725 = vpop.f32.mrb[0].mxu0
        %v726 = vadd.f32 0.0, %v725
        %727 = vdwg.mxu0
        %728 = vmatprep.subr.mxu0 0.0
        %729 = vmatpush1.msra.mxu0 %v655
        %730 = vmatprep.subr.mxu0 0.0
        %731 = vmatpush1.msra.mxu0 0.0
        %732 = vmatprep.subr.mxu0 0.0
        %733 = vmatpush1.msra.mxu0 0.0
        %734 = vmatprep.subr.mxu0 0.0
        %735 = vmatpush1.msra.mxu0 0.0
        %736 = vmatprep.subr.mxu0 0.0
        %737 = vmatpush1.msra.mxu0 0.0
        %738 = vmatprep.subr.mxu0 0.0
        %739 = vmatpush1.msra.mxu0 0.0
        %740 = vmatprep.subr.mxu0 0.0
        %741 = vmatpush1.msra.mxu0 0.0
        %742 = vmatprep.subr.mxu0 0.0
        %743 = vmatpush1.msra.mxu0 0.0
        %744 = vmatprep.subr.mxu0 0.0
        %745 = vmatpush1.msra.mxu0 0.0
        %746 = vmatprep.subr.mxu0 0.0
        %747 = vmatpush1.msra.mxu0 0.0
        %748 = vmatprep.subr.mxu0 0.0
        %749 = vmatpush1.msra.mxu0 0.0
        %750 = vmatprep.subr.mxu0 0.0
        %751 = vmatpush1.msra.mxu0 0.0
        %752 = vmatprep.subr.mxu0 0.0
        %753 = vmatpush1.msra.mxu0 0.0
        %754 = vmatprep.subr.mxu0 0.0
        %755 = vmatpush1.msra.mxu0 0.0
        %756 = vmatprep.subr.mxu0 0.0
        %757 = vmatpush1.msra.mxu0 0.0
        %758 = vmatprep.subr.mxu0 0.0
        %759 = vmatpush1.msra.mxu0 0.0
        %760 = vmatprep.subr.mxu0 0.0
        %761 = vmatpush1.msra.mxu0 0.0
        %762 = vmatprep.subr.mxu0 0.0
        %763 = vmatpush1.msra.mxu0 0.0
        %764 = vmatprep.subr.mxu0 0.0
        %765 = vmatpush1.msra.mxu0 0.0
        %766 = vmatprep.subr.mxu0 0.0
        %767 = vmatpush1.msra.mxu0 0.0
        %768 = vmatprep.subr.mxu0 0.0
        %769 = vmatpush1.msra.mxu0 0.0
        %770 = vmatprep.subr.mxu0 0.0
        %771 = vmatpush1.msra.mxu0 0.0
        %772 = vmatprep.subr.mxu0 0.0
        %773 = vmatpush1.msra.mxu0 0.0
        %774 = vmatprep.subr.mxu0 0.0
        %775 = vmatpush1.msra.mxu0 0.0
        %776 = vmatprep.subr.mxu0 0.0
        %777 = vmatpush1.msra.mxu0 0.0
        %778 = vmatprep.subr.mxu0 0.0
        %779 = vmatpush1.msra.mxu0 0.0
        %780 = vmatprep.subr.mxu0 0.0
        %781 = vmatpush1.msra.mxu0 0.0
        %782 = vmatprep.subr.mxu0 0.0
        %783 = vmatpush1.msra.mxu0 0.0
        %784 = vmatprep.subr.mxu0 0.0
        %785 = vmatpush1.msra.mxu0 0.0
        %786 = vmatprep.subr.mxu0 0.0
        %787 = vmatpush1.msra.mxu0 0.0
        %788 = vmatprep.subr.mxu0 0.0
        %789 = vmatpush1.msra.mxu0 0.0
        %790 = vmatprep.subr.mxu0 0.0
        %791 = vmatpush1.msra.mxu0 0.0
        %792 = vmatprep.mubr.f32.mxu0 0.0
        %793 = vmatmul.mubr.f32.gmra.mrb[0].mxu0 %v648
        %v794 = vpop.f32.mrb[0].mxu0
        %v795 = vadd.f32 0.0, %v794
        %v796 = vpop.f32.mrb[0].mxu0
        %797 = vdwg.mxu0
        %v798 = vadd.f32 %v571, %v724
        %v799 = vadd.f32 %v573, %v726
        %v800 = vadd.f32 %v642, %v795
        %802 = vrot.lane.b32.xlu0 %v800, 78
        %v803 = vpop.permute.xlu0 %802
        %807 = vrot.lane.b32.xlu0 %v798, 18
        %v808 = vpop.permute.xlu0 %807
        %809 = vrot.lane.b32.xlu0 %v799, 18
        %v810 = vpop.permute.xlu0 %809
        %811 = vrot.lane.b32.xlu0 %v800, 18
        %v812 = vpop.permute.xlu0 %811
        %vm813 = vcmask 146432
        %v814 = vsel %vm813, %v808, %v810
        %v815 = vsel %vm813, %v810, %v812
        %v819 = vsel %vm813, %v803, %v808
        %v820 = vadd.f32 %v819, 0.0
        %v821 = vadd.f32 %v814, 0.0
        %v822 = vadd.f32 %v815, 0.0
        %s823 = scalar_lea.vmem %s1, 24
        %v824 = vld [vmem:[%s823] sm:$0xff]
        %s825 = scalar_lea.vmem %s1, 32
        %v826 = vld [vmem:[%s825] sm:$0xff]
        %v828 = vsel %vm342, %v826, 0
        %830 = vmatprep.subr.mxu0 %v349
        %831 = vmatpush1.msra.mxu0 %v347
        %832 = vmatprep.subr.mxu0 0.0
        %833 = vmatpush1.msra.mxu0 0.0
        %834 = vmatprep.subr.mxu0 0.0
        %835 = vmatpush1.msra.mxu0 0.0
        %836 = vmatprep.subr.mxu0 0.0
        %837 = vmatpush1.msra.mxu0 0.0
        %838 = vmatprep.subr.mxu0 0.0
        %839 = vmatpush1.msra.mxu0 0.0
        %840 = vmatprep.subr.mxu0 0.0
        %841 = vmatpush1.msra.mxu0 0.0
        %842 = vmatprep.subr.mxu0 0.0
        %843 = vmatpush1.msra.mxu0 0.0
        %844 = vmatprep.subr.mxu0 0.0
        %845 = vmatpush1.msra.mxu0 0.0
        %846 = vmatprep.subr.mxu0 0.0
        %847 = vmatpush1.msra.mxu0 0.0
        %848 = vmatprep.subr.mxu0 0.0
        %849 = vmatpush1.msra.mxu0 0.0
        %850 = vmatprep.subr.mxu0 0.0
        %851 = vmatpush1.msra.mxu0 0.0
        %852 = vmatprep.subr.mxu0 0.0
        %853 = vmatpush1.msra.mxu0 0.0
        %854 = vmatprep.subr.mxu0 0.0
        %855 = vmatpush1.msra.mxu0 0.0
        %856 = vmatprep.subr.mxu0 0.0
        %857 = vmatpush1.msra.mxu0 0.0
        %858 = vmatprep.subr.mxu0 0.0
        %859 = vmatpush1.msra.mxu0 0.0
        %860 = vmatprep.subr.mxu0 0.0
        %861 = vmatpush1.msra.mxu0 0.0
        %862 = vmatprep.subr.mxu0 0.0
        %863 = vmatpush1.msra.mxu0 0.0
        %864 = vmatprep.subr.mxu0 0.0
        %865 = vmatpush1.msra.mxu0 0.0
        %866 = vmatprep.subr.mxu0 0.0
        %867 = vmatpush1.msra.mxu0 0.0
        %868 = vmatprep.subr.mxu0 0.0
        %869 = vmatpush1.msra.mxu0 0.0
        %870 = vmatprep.subr.mxu0 0.0
        %871 = vmatpush1.msra.mxu0 0.0
        %872 = vmatprep.subr.mxu0 0.0
        %873 = vmatpush1.msra.mxu0 0.0
        %874 = vmatprep.subr.mxu0 0.0
        %875 = vmatpush1.msra.mxu0 0.0
        %876 = vmatprep.subr.mxu0 0.0
        %877 = vmatpush1.msra.mxu0 0.0
        %878 = vmatprep.subr.mxu0 0.0
        %879 = vmatpush1.msra.mxu0 0.0
        %880 = vmatprep.subr.mxu0 0.0
        %881 = vmatpush1.msra.mxu0 0.0
        %882 = vmatprep.subr.mxu0 0.0
        %883 = vmatpush1.msra.mxu0 0.0
        %884 = vmatprep.subr.mxu0 0.0
        %885 = vmatpush1.msra.mxu0 0.0
        %886 = vmatprep.subr.mxu0 0.0
        %887 = vmatpush1.msra.mxu0 0.0
        %888 = vmatprep.subr.mxu0 0.0
        %889 = vmatpush1.msra.mxu0 0.0
        %890 = vmatprep.subr.mxu0 0.0
        %891 = vmatpush1.msra.mxu0 0.0
        %892 = vmatprep.subr.mxu0 0.0
        %893 = vmatpush1.msra.mxu0 0.0
        %894 = vmatprep.mubr.f32.mxu0 0.0
        %895 = vmatmul.mubr.f32.gmra.mrb[0].mxu0 %v828
        %v896 = vpop.f32.mrb[0].mxu0
        %v897 = vadd.f32 0.0, %v896
        %v898 = vpop.f32.mrb[0].mxu0
        %v899 = vadd.f32 0.0, %v898
        %900 = vdwg.mxu0
        %901 = vmatprep.subr.mxu0 0.0
        %902 = vmatpush1.msra.mxu0 %v351
        %903 = vmatprep.subr.mxu0 0.0
        %904 = vmatpush1.msra.mxu0 0.0
        %905 = vmatprep.subr.mxu0 0.0
        %906 = vmatpush1.msra.mxu0 0.0
        %907 = vmatprep.subr.mxu0 0.0
        %908 = vmatpush1.msra.mxu0 0.0
        %909 = vmatprep.subr.mxu0 0.0
        %910 = vmatpush1.msra.mxu0 0.0
        %911 = vmatprep.subr.mxu0 0.0
        %912 = vmatpush1.msra.mxu0 0.0
        %913 = vmatprep.subr.mxu0 0.0
        %914 = vmatpush1.msra.mxu0 0.0
        %915 = vmatprep.subr.mxu0 0.0
        %916 = vmatpush1.msra.mxu0 0.0
        %917 = vmatprep.subr.mxu0 0.0
        %918 = vmatpush1.msra.mxu0 0.0
        %919 = vmatprep.subr.mxu0 0.0
        %920 = vmatpush1.msra.mxu0 0.0
        %921 = vmatprep.subr.mxu0 0.0
        %922 = vmatpush1.msra.mxu0 0.0
        %923 = vmatprep.subr.mxu0 0.0
        %924 = vmatpush1.msra.mxu0 0.0
        %925 = vmatprep.subr.mxu0 0.0
        %926 = vmatpush1.msra.mxu0 0.0
        %927 = vmatprep.subr.mxu0 0.0
        %928 = vmatpush1.msra.mxu0 0.0
        %929 = vmatprep.subr.mxu0 0.0
        %930 = vmatpush1.msra.mxu0 0.0
        %931 = vmatprep.subr.mxu0 0.0
        %932 = vmatpush1.msra.mxu0 0.0
        %933 = vmatprep.subr.mxu0 0.0
        %934 = vmatpush1.msra.mxu0 0.0
        %935 = vmatprep.subr.mxu0 0.0
        %936 = vmatpush1.msra.mxu0 0.0
        %937 = vmatprep.subr.mxu0 0.0
        %938 = vmatpush1.msra.mxu0 0.0
        %939 = vmatprep.subr.mxu0 0.0
        %940 = vmatpush1.msra.mxu0 0.0
        %941 = vmatprep.subr.mxu0 0.0
        %942 = vmatpush1.msra.mxu0 0.0
        %943 = vmatprep.subr.mxu0 0.0
        %944 = vmatpush1.msra.mxu0 0.0
        %945 = vmatprep.subr.mxu0 0.0
        %946 = vmatpush1.msra.mxu0 0.0
        %947 = vmatprep.subr.mxu0 0.0
        %948 = vmatpush1.msra.mxu0 0.0
        %949 = vmatprep.subr.mxu0 0.0
        %950 = vmatpush1.msra.mxu0 0.0
        %951 = vmatprep.subr.mxu0 0.0
        %952 = vmatpush1.msra.mxu0 0.0
        %953 = vmatprep.subr.mxu0 0.0
        %954 = vmatpush1.msra.mxu0 0.0
        %955 = vmatprep.subr.mxu0 0.0
        %956 = vmatpush1.msra.mxu0 0.0
        %957 = vmatprep.subr.mxu0 0.0
        %958 = vmatpush1.msra.mxu0 0.0
        %959 = vmatprep.subr.mxu0 0.0
        %960 = vmatpush1.msra.mxu0 0.0
        %961 = vmatprep.subr.mxu0 0.0
        %962 = vmatpush1.msra.mxu0 0.0
        %963 = vmatprep.subr.mxu0 0.0
        %964 = vmatpush1.msra.mxu0 0.0
        %965 = vmatprep.mubr.f32.mxu0 0.0
        %966 = vmatmul.mubr.f32.gmra.mrb[0].mxu0 %v828
        %v967 = vpop.f32.mrb[0].mxu0
        %v968 = vadd.f32 0.0, %v967
        %v969 = vpop.f32.mrb[0].mxu0
        %970 = vdwg.mxu0
        %v972 = vsel %vm342, %v824, 0
        %974 = vmatprep.subr.mxu0 %v500
        %975 = vmatpush1.msra.mxu0 %v498
        %976 = vmatprep.subr.mxu0 0.0
        %977 = vmatpush1.msra.mxu0 0.0
        %978 = vmatprep.subr.mxu0 0.0
        %979 = vmatpush1.msra.mxu0 0.0
        %980 = vmatprep.subr.mxu0 0.0
        %981 = vmatpush1.msra.mxu0 0.0
        %982 = vmatprep.subr.mxu0 0.0
        %983 = vmatpush1.msra.mxu0 0.0
        %984 = vmatprep.subr.mxu0 0.0
        %985 = vmatpush1.msra.mxu0 0.0
        %986 = vmatprep.subr.mxu0 0.0
        %987 = vmatpush1.msra.mxu0 0.0
        %988 = vmatprep.subr.mxu0 0.0
        %989 = vmatpush1.msra.mxu0 0.0
        %990 = vmatprep.subr.mxu0 0.0
        %991 = vmatpush1.msra.mxu0 0.0
        %992 = vmatprep.subr.mxu0 0.0
        %993 = vmatpush1.msra.mxu0 0.0
        %994 = vmatprep.subr.mxu0 0.0
        %995 = vmatpush1.msra.mxu0 0.0
        %996 = vmatprep.subr.mxu0 0.0
        %997 = vmatpush1.msra.mxu0 0.0
        %998 = vmatprep.subr.mxu0 0.0
        %999 = vmatpush1.msra.mxu0 0.0
        %1000 = vmatprep.subr.mxu0 0.0
        %1001 = vmatpush1.msra.mxu0 0.0
        %1002 = vmatprep.subr.mxu0 0.0
        %1003 = vmatpush1.msra.mxu0 0.0
        %1004 = vmatprep.subr.mxu0 0.0
        %1005 = vmatpush1.msra.mxu0 0.0
        %1006 = vmatprep.subr.mxu0 0.0
        %1007 = vmatpush1.msra.mxu0 0.0
        %1008 = vmatprep.subr.mxu0 0.0
        %1009 = vmatpush1.msra.mxu0 0.0
        %1010 = vmatprep.subr.mxu0 0.0
        %1011 = vmatpush1.msra.mxu0 0.0
        %1012 = vmatprep.subr.mxu0 0.0
        %1013 = vmatpush1.msra.mxu0 0.0
        %1014 = vmatprep.subr.mxu0 0.0
        %1015 = vmatpush1.msra.mxu0 0.0
        %1016 = vmatprep.subr.mxu0 0.0
        %1017 = vmatpush1.msra.mxu0 0.0
        %1018 = vmatprep.subr.mxu0 0.0
        %1019 = vmatpush1.msra.mxu0 0.0
        %1020 = vmatprep.subr.mxu0 0.0
        %1021 = vmatpush1.msra.mxu0 0.0
        %1022 = vmatprep.subr.mxu0 0.0
        %1023 = vmatpush1.msra.mxu0 0.0
        %1024 = vmatprep.subr.mxu0 0.0
        %1025 = vmatpush1.msra.mxu0 0.0
        %1026 = vmatprep.subr.mxu0 0.0
        %1027 = vmatpush1.msra.mxu0 0.0
        %1028 = vmatprep.subr.mxu0 0.0
        %1029 = vmatpush1.msra.mxu0 0.0
        %1030 = vmatprep.subr.mxu0 0.0
        %1031 = vmatpush1.msra.mxu0 0.0
        %1032 = vmatprep.subr.mxu0 0.0
        %1033 = vmatpush1.msra.mxu0 0.0
        %1034 = vmatprep.subr.mxu0 0.0
        %1035 = vmatpush1.msra.mxu0 0.0
        %1036 = vmatprep.subr.mxu0 0.0
        %1037 = vmatpush1.msra.mxu0 0.0
        %1038 = vmatprep.mubr.f32.mxu0 0.0
        %1039 = vmatmul.mubr.f32.gmra.mrb[0].mxu0 %v972
        %v1040 = vpop.f32.mrb[0].mxu0
        %v1041 = vadd.f32 %v897, %v1040
        %v1042 = vpop.f32.mrb[0].mxu0
        %v1043 = vadd.f32 %v899, %v1042
        %1044 = vdwg.mxu0
        %1045 = vmatprep.subr.mxu0 0.0
        %1046 = vmatpush1.msra.mxu0 %v502
        %1047 = vmatprep.subr.mxu0 0.0
        %1048 = vmatpush1.msra.mxu0 0.0
        %1049 = vmatprep.subr.mxu0 0.0
        %1050 = vmatpush1.msra.mxu0 0.0
        %1051 = vmatprep.subr.mxu0 0.0
        %1052 = vmatpush1.msra.mxu0 0.0
        %1053 = vmatprep.subr.mxu0 0.0
        %1054 = vmatpush1.msra.mxu0 0.0
        %1055 = vmatprep.subr.mxu0 0.0
        %1056 = vmatpush1.msra.mxu0 0.0
        %1057 = vmatprep.subr.mxu0 0.0
        %1058 = vmatpush1.msra.mxu0 0.0
        %1059 = vmatprep.subr.mxu0 0.0
        %1060 = vmatpush1.msra.mxu0 0.0
        %1061 = vmatprep.subr.mxu0 0.0
        %1062 = vmatpush1.msra.mxu0 0.0
        %1063 = vmatprep.subr.mxu0 0.0
        %1064 = vmatpush1.msra.mxu0 0.0
        %1065 = vmatprep.subr.mxu0 0.0
        %1066 = vmatpush1.msra.mxu0 0.0
        %1067 = vmatprep.subr.mxu0 0.0
        %1068 = vmatpush1.msra.mxu0 0.0
        %1069 = vmatprep.subr.mxu0 0.0
        %1070 = vmatpush1.msra.mxu0 0.0
        %1071 = vmatprep.subr.mxu0 0.0
        %1072 = vmatpush1.msra.mxu0 0.0
        %1073 = vmatprep.subr.mxu0 0.0
        %1074 = vmatpush1.msra.mxu0 0.0
        %1075 = vmatprep.subr.mxu0 0.0
        %1076 = vmatpush1.msra.mxu0 0.0
        %1077 = vmatprep.subr.mxu0 0.0
        %1078 = vmatpush1.msra.mxu0 0.0
        %1079 = vmatprep.subr.mxu0 0.0
        %1080 = vmatpush1.msra.mxu0 0.0
        %1081 = vmatprep.subr.mxu0 0.0
        %1082 = vmatpush1.msra.mxu0 0.0
        %1083 = vmatprep.subr.mxu0 0.0
        %1084 = vmatpush1.msra.mxu0 0.0
        %1085 = vmatprep.subr.mxu0 0.0
        %1086 = vmatpush1.msra.mxu0 0.0
        %1087 = vmatprep.subr.mxu0 0.0
        %1088 = vmatpush1.msra.mxu0 0.0
        %1089 = vmatprep.subr.mxu0 0.0
        %1090 = vmatpush1.msra.mxu0 0.0
        %1091 = vmatprep.subr.mxu0 0.0
        %1092 = vmatpush1.msra.mxu0 0.0
        %1093 = vmatprep.subr.mxu0 0.0
        %1094 = vmatpush1.msra.mxu0 0.0
        %1095 = vmatprep.subr.mxu0 0.0
        %1096 = vmatpush1.msra.mxu0 0.0
        %1097 = vmatprep.subr.mxu0 0.0
        %1098 = vmatpush1.msra.mxu0 0.0
        %1099 = vmatprep.subr.mxu0 0.0
        %1100 = vmatpush1.msra.mxu0 0.0
        %1101 = vmatprep.subr.mxu0 0.0
        %1102 = vmatpush1.msra.mxu0 0.0
        %1103 = vmatprep.subr.mxu0 0.0
        %1104 = vmatpush1.msra.mxu0 0.0
        %1105 = vmatprep.subr.mxu0 0.0
        %1106 = vmatpush1.msra.mxu0 0.0
        %1107 = vmatprep.subr.mxu0 0.0
        %1108 = vmatpush1.msra.mxu0 0.0
        %1109 = vmatprep.mubr.f32.mxu0 0.0
        %1110 = vmatmul.mubr.f32.gmra.mrb[0].mxu0 %v972
        %v1111 = vpop.f32.mrb[0].mxu0
        %v1112 = vadd.f32 %v968, %v1111
        %v1113 = vpop.f32.mrb[0].mxu0
        %1114 = vdwg.mxu0
        %s1115 = scalar_lea.vmem %s1, 40
        %v1116 = vld [vmem:[%s1115] sm:$0xff]
        %v1118 = vsel %vm342, %v1116, 0
        %1120 = vmatprep.subr.mxu0 %v652
        %1121 = vmatpush1.msra.mxu0 %v650
        %1122 = vmatprep.subr.mxu0 0.0
        %1123 = vmatpush1.msra.mxu0 0.0
        %1124 = vmatprep.subr.mxu0 0.0
        %1125 = vmatpush1.msra.mxu0 0.0
        %1126 = vmatprep.subr.mxu0 0.0
        %1127 = vmatpush1.msra.mxu0 0.0
        %1128 = vmatprep.subr.mxu0 0.0
        %1129 = vmatpush1.msra.mxu0 0.0
        %1130 = vmatprep.subr.mxu0 0.0
        %1131 = vmatpush1.msra.mxu0 0.0
        %1132 = vmatprep.subr.mxu0 0.0
        %1133 = vmatpush1.msra.mxu0 0.0
        %1134 = vmatprep.subr.mxu0 0.0
        %1135 = vmatpush1.msra.mxu0 0.0
        %1136 = vmatprep.subr.mxu0 0.0
        %1137 = vmatpush1.msra.mxu0 0.0
        %1138 = vmatprep.subr.mxu0 0.0
        %1139 = vmatpush1.msra.mxu0 0.0
        %1140 = vmatprep.subr.mxu0 0.0
        %1141 = vmatpush1.msra.mxu0 0.0
        %1142 = vmatprep.subr.mxu0 0.0
        %1143 = vmatpush1.msra.mxu0 0.0
        %1144 = vmatprep.subr.mxu0 0.0
        %1145 = vmatpush1.msra.mxu0 0.0
        %1146 = vmatprep.subr.mxu0 0.0
        %1147 = vmatpush1.msra.mxu0 0.0
        %1148 = vmatprep.subr.mxu0 0.0
        %1149 = vmatpush1.msra.mxu0 0.0
        %1150 = vmatprep.subr.mxu0 0.0
        %1151 = vmatpush1.msra.mxu0 0.0
        %1152 = vmatprep.subr.mxu0 0.0
        %1153 = vmatpush1.msra.mxu0 0.0
        %1154 = vmatprep.subr.mxu0 0.0
        %1155 = vmatpush1.msra.mxu0 0.0
        %1156 = vmatprep.subr.mxu0 0.0
        %1157 = vmatpush1.msra.mxu0 0.0
        %1158 = vmatprep.subr.mxu0 0.0
        %1159 = vmatpush1.msra.mxu0 0.0
        %1160 = vmatprep.subr.mxu0 0.0
        %1161 = vmatpush1.msra.mxu0 0.0
        %1162 = vmatprep.subr.mxu0 0.0
        %1163 = vmatpush1.msra.mxu0 0.0
        %1164 = vmatprep.subr.mxu0 0.0
        %1165 = vmatpush1.msra.mxu0 0.0
        %1166 = vmatprep.subr.mxu0 0.0
        %1167 = vmatpush1.msra.mxu0 0.0
        %1168 = vmatprep.subr.mxu0 0.0
        %1169 = vmatpush1.msra.mxu0 0.0
        %1170 = vmatprep.subr.mxu0 0.0
        %1171 = vmatpush1.msra.mxu0 0.0
        %1172 = vmatprep.subr.mxu0 0.0
        %1173 = vmatpush1.msra.mxu0 0.0
        %1174 = vmatprep.subr.mxu0 0.0
        %1175 = vmatpush1.msra.mxu0 0.0
        %1176 = vmatprep.subr.mxu0 0.0
        %1177 = vmatpush1.msra.mxu0 0.0
        %1178 = vmatprep.subr.mxu0 0.0
        %1179 = vmatpush1.msra.mxu0 0.0
        %1180 = vmatprep.subr.mxu0 0.0
        %1181 = vmatpush1.msra.mxu0 0.0
        %1182 = vmatprep.subr.mxu0 0.0
        %1183 = vmatpush1.msra.mxu0 0.0
        %1184 = vmatprep.mubr.f32.mxu0 0.0
        %1185 = vmatmul.mubr.f32.gmra.mrb[0].mxu0 %v1118
        %v1186 = vpop.f32.mrb[0].mxu0
        %v1187 = vadd.f32 0.0, %v1186
        %v1188 = vpop.f32.mrb[0].mxu0
        %v1189 = vadd.f32 0.0, %v1188
        %1190 = vdwg.mxu0
        %1191 = vmatprep.subr.mxu0 0.0
        %1192 = vmatpush1.msra.mxu0 %v655
        %1193 = vmatprep.subr.mxu0 0.0
        %1194 = vmatpush1.msra.mxu0 0.0
        %1195 = vmatprep.subr.mxu0 0.0
        %1196 = vmatpush1.msra.mxu0 0.0
        %1197 = vmatprep.subr.mxu0 0.0
        %1198 = vmatpush1.msra.mxu0 0.0
        %1199 = vmatprep.subr.mxu0 0.0
        %1200 = vmatpush1.msra.mxu0 0.0
        %1201 = vmatprep.subr.mxu0 0.0
        %1202 = vmatpush1.msra.mxu0 0.0
        %1203 = vmatprep.subr.mxu0 0.0
        %1204 = vmatpush1.msra.mxu0 0.0
        %1205 = vmatprep.subr.mxu0 0.0
        %1206 = vmatpush1.msra.mxu0 0.0
        %1207 = vmatprep.subr.mxu0 0.0
        %1208 = vmatpush1.msra.mxu0 0.0
        %1209 = vmatprep.subr.mxu0 0.0
        %1210 = vmatpush1.msra.mxu0 0.0
        %1211 = vmatprep.subr.mxu0 0.0
        %1212 = vmatpush1.msra.mxu0 0.0
        %1213 = vmatprep.subr.mxu0 0.0
        %1214 = vmatpush1.msra.mxu0 0.0
        %1215 = vmatprep.subr.mxu0 0.0
        %1216 = vmatpush1.msra.mxu0 0.0
        %1217 = vmatprep.subr.mxu0 0.0
        %1218 = vmatpush1.msra.mxu0 0.0
        %1219 = vmatprep.subr.mxu0 0.0
        %1220 = vmatpush1.msra.mxu0 0.0
        %1221 = vmatprep.subr.mxu0 0.0
        %1222 = vmatpush1.msra.mxu0 0.0
        %1223 = vmatprep.subr.mxu0 0.0
        %1224 = vmatpush1.msra.mxu0 0.0
        %1225 = vmatprep.subr.mxu0 0.0
        %1226 = vmatpush1.msra.mxu0 0.0
        %1227 = vmatprep.subr.mxu0 0.0
        %1228 = vmatpush1.msra.mxu0 0.0
        %1229 = vmatprep.subr.mxu0 0.0
        %1230 = vmatpush1.msra.mxu0 0.0
        %1231 = vmatprep.subr.mxu0 0.0
        %1232 = vmatpush1.msra.mxu0 0.0
        %1233 = vmatprep.subr.mxu0 0.0
        %1234 = vmatpush1.msra.mxu0 0.0
        %1235 = vmatprep.subr.mxu0 0.0
        %1236 = vmatpush1.msra.mxu0 0.0
        %1237 = vmatprep.subr.mxu0 0.0
        %1238 = vmatpush1.msra.mxu0 0.0
        %1239 = vmatprep.subr.mxu0 0.0
        %1240 = vmatpush1.msra.mxu0 0.0
        %1241 = vmatprep.subr.mxu0 0.0
        %1242 = vmatpush1.msra.mxu0 0.0
        %1243 = vmatprep.subr.mxu0 0.0
        %1244 = vmatpush1.msra.mxu0 0.0
        %1245 = vmatprep.subr.mxu0 0.0
        %1246 = vmatpush1.msra.mxu0 0.0
        %1247 = vmatprep.subr.mxu0 0.0
        %1248 = vmatpush1.msra.mxu0 0.0
        %1249 = vmatprep.subr.mxu0 0.0
        %1250 = vmatpush1.msra.mxu0 0.0
        %1251 = vmatprep.subr.mxu0 0.0
        %1252 = vmatpush1.msra.mxu0 0.0
        %1253 = vmatprep.subr.mxu0 0.0
        %1254 = vmatpush1.msra.mxu0 0.0
        %1255 = vmatprep.mubr.f32.mxu0 0.0
        %1256 = vmatmul.mubr.f32.gmra.mrb[0].mxu0 %v1118
        %v1257 = vpop.f32.mrb[0].mxu0
        %v1258 = vadd.f32 0.0, %v1257
        %v1259 = vpop.f32.mrb[0].mxu0
        %1260 = vdwg.mxu0
        %v1261 = vadd.f32 %v1041, %v1187
        %v1262 = vadd.f32 %v1043, %v1189
        %v1263 = vadd.f32 %v1112, %v1258
        %v1264 = vadd.f32 %v820, %v1261
        %v1265 = vadd.f32 %v821, %v1262
        %v1266 = vadd.f32 %v822, %v1263
        %s1267 = scalar_lea.vmem %s1, 48
        %v1268 = vld [vmem:[%s1267] sm:$0xff]
        %s1269 = scalar_lea.vmem %s1, 56
        %v1270 = vld [vmem:[%s1269] sm:$0xff]
        %v1272 = vsel %vm342, %v1270, 0
        %1274 = vmatprep.subr.mxu0 %v349
        %1275 = vmatpush1.msra.mxu0 %v347
        %1276 = vmatprep.subr.mxu0 0.0
        %1277 = vmatpush1.msra.mxu0 0.0
        %1278 = vmatprep.subr.mxu0 0.0
        %1279 = vmatpush1.msra.mxu0 0.0
        %1280 = vmatprep.subr.mxu0 0.0
        %1281 = vmatpush1.msra.mxu0 0.0
        %1282 = vmatprep.subr.mxu0 0.0
        %1283 = vmatpush1.msra.mxu0 0.0
        %1284 = vmatprep.subr.mxu0 0.0
        %1285 = vmatpush1.msra.mxu0 0.0
        %1286 = vmatprep.subr.mxu0 0.0
        %1287 = vmatpush1.msra.mxu0 0.0
        %1288 = vmatprep.subr.mxu0 0.0
        %1289 = vmatpush1.msra.mxu0 0.0
        %1290 = vmatprep.subr.mxu0 0.0
        %1291 = vmatpush1.msra.mxu0 0.0
        %1292 = vmatprep.subr.mxu0 0.0
        %1293 = vmatpush1.msra.mxu0 0.0
        %1294 = vmatprep.subr.mxu0 0.0
        %1295 = vmatpush1.msra.mxu0 0.0
        %1296 = vmatprep.subr.mxu0 0.0
        %1297 = vmatpush1.msra.mxu0 0.0
        %1298 = vmatprep.subr.mxu0 0.0
        %1299 = vmatpush1.msra.mxu0 0.0
        %1300 = vmatprep.subr.mxu0 0.0
        %1301 = vmatpush1.msra.mxu0 0.0
        %1302 = vmatprep.subr.mxu0 0.0
        %1303 = vmatpush1.msra.mxu0 0.0
        %1304 = vmatprep.subr.mxu0 0.0
        %1305 = vmatpush1.msra.mxu0 0.0
        %1306 = vmatprep.subr.mxu0 0.0
        %1307 = vmatpush1.msra.mxu0 0.0
        %1308 = vmatprep.subr.mxu0 0.0
        %1309 = vmatpush1.msra.mxu0 0.0
        %1310 = vmatprep.subr.mxu0 0.0
        %1311 = vmatpush1.msra.mxu0 0.0
        %1312 = vmatprep.subr.mxu0 0.0
        %1313 = vmatpush1.msra.mxu0 0.0
        %1314 = vmatprep.subr.mxu0 0.0
        %1315 = vmatpush1.msra.mxu0 0.0
        %1316 = vmatprep.subr.mxu0 0.0
        %1317 = vmatpush1.msra.mxu0 0.0
        %1318 = vmatprep.subr.mxu0 0.0
        %1319 = vmatpush1.msra.mxu0 0.0
        %1320 = vmatprep.subr.mxu0 0.0
        %1321 = vmatpush1.msra.mxu0 0.0
        %1322 = vmatprep.subr.mxu0 0.0
        %1323 = vmatpush1.msra.mxu0 0.0
        %1324 = vmatprep.subr.mxu0 0.0
        %1325 = vmatpush1.msra.mxu0 0.0
        %1326 = vmatprep.subr.mxu0 0.0
        %1327 = vmatpush1.msra.mxu0 0.0
        %1328 = vmatprep.subr.mxu0 0.0
        %1329 = vmatpush1.msra.mxu0 0.0
        %1330 = vmatprep.subr.mxu0 0.0
        %1331 = vmatpush1.msra.mxu0 0.0
        %1332 = vmatprep.subr.mxu0 0.0
        %1333 = vmatpush1.msra.mxu0 0.0
        %1334 = vmatprep.subr.mxu0 0.0
        %1335 = vmatpush1.msra.mxu0 0.0
        %1336 = vmatprep.subr.mxu0 0.0
        %1337 = vmatpush1.msra.mxu0 0.0
        %1338 = vmatprep.mubr.f32.mxu0 0.0
        %1339 = vmatmul.mubr.f32.gmra.mrb[0].mxu0 %v1272
        %v1340 = vpop.f32.mrb[0].mxu0
        %v1341 = vadd.f32 0.0, %v1340
        %v1342 = vpop.f32.mrb[0].mxu0
        %v1343 = vadd.f32 0.0, %v1342
        %1344 = vdwg.mxu0
        %1345 = vmatprep.subr.mxu0 0.0
        %1346 = vmatpush1.msra.mxu0 %v351
        %1347 = vmatprep.subr.mxu0 0.0
        %1348 = vmatpush1.msra.mxu0 0.0
        %1349 = vmatprep.subr.mxu0 0.0
        %1350 = vmatpush1.msra.mxu0 0.0
        %1351 = vmatprep.subr.mxu0 0.0
        %1352 = vmatpush1.msra.mxu0 0.0
        %1353 = vmatprep.subr.mxu0 0.0
        %1354 = vmatpush1.msra.mxu0 0.0
        %1355 = vmatprep.subr.mxu0 0.0
        %1356 = vmatpush1.msra.mxu0 0.0
        %1357 = vmatprep.subr.mxu0 0.0
        %1358 = vmatpush1.msra.mxu0 0.0
        %1359 = vmatprep.subr.mxu0 0.0
        %1360 = vmatpush1.msra.mxu0 0.0
        %1361 = vmatprep.subr.mxu0 0.0
        %1362 = vmatpush1.msra.mxu0 0.0
        %1363 = vmatprep.subr.mxu0 0.0
        %1364 = vmatpush1.msra.mxu0 0.0
        %1365 = vmatprep.subr.mxu0 0.0
        %1366 = vmatpush1.msra.mxu0 0.0
        %1367 = vmatprep.subr.mxu0 0.0
        %1368 = vmatpush1.msra.mxu0 0.0
        %1369 = vmatprep.subr.mxu0 0.0
        %1370 = vmatpush1.msra.mxu0 0.0
        %1371 = vmatprep.subr.mxu0 0.0
        %1372 = vmatpush1.msra.mxu0 0.0
        %1373 = vmatprep.subr.mxu0 0.0
        %1374 = vmatpush1.msra.mxu0 0.0
        %1375 = vmatprep.subr.mxu0 0.0
        %1376 = vmatpush1.msra.mxu0 0.0
        %1377 = vmatprep.subr.mxu0 0.0
        %1378 = vmatpush1.msra.mxu0 0.0
        %1379 = vmatprep.subr.mxu0 0.0
        %1380 = vmatpush1.msra.mxu0 0.0
        %1381 = vmatprep.subr.mxu0 0.0
        %1382 = vmatpush1.msra.mxu0 0.0
        %1383 = vmatprep.subr.mxu0 0.0
        %1384 = vmatpush1.msra.mxu0 0.0
        %1385 = vmatprep.subr.mxu0 0.0
        %1386 = vmatpush1.msra.mxu0 0.0
        %1387 = vmatprep.subr.mxu0 0.0
        %1388 = vmatpush1.msra.mxu0 0.0
        %1389 = vmatprep.subr.mxu0 0.0
        %1390 = vmatpush1.msra.mxu0 0.0
        %1391 = vmatprep.subr.mxu0 0.0
        %1392 = vmatpush1.msra.mxu0 0.0
        %1393 = vmatprep.subr.mxu0 0.0
        %1394 = vmatpush1.msra.mxu0 0.0
        %1395 = vmatprep.subr.mxu0 0.0
        %1396 = vmatpush1.msra.mxu0 0.0
        %1397 = vmatprep.subr.mxu0 0.0
        %1398 = vmatpush1.msra.mxu0 0.0
        %1399 = vmatprep.subr.mxu0 0.0
        %1400 = vmatpush1.msra.mxu0 0.0
        %1401 = vmatprep.subr.mxu0 0.0
        %1402 = vmatpush1.msra.mxu0 0.0
        %1403 = vmatprep.subr.mxu0 0.0
        %1404 = vmatpush1.msra.mxu0 0.0
        %1405 = vmatprep.subr.mxu0 0.0
        %1406 = vmatpush1.msra.mxu0 0.0
        %1407 = vmatprep.subr.mxu0 0.0
        %1408 = vmatpush1.msra.mxu0 0.0
        %1409 = vmatprep.mubr.f32.mxu0 0.0
        %1410 = vmatmul.mubr.f32.gmra.mrb[0].mxu0 %v1272
        %v1411 = vpop.f32.mrb[0].mxu0
        %v1412 = vadd.f32 0.0, %v1411
        %v1413 = vpop.f32.mrb[0].mxu0
        %1414 = vdwg.mxu0
        %v1416 = vsel %vm342, %v1268, 0
        %1418 = vmatprep.subr.mxu0 %v500
        %1419 = vmatpush1.msra.mxu0 %v498
        %1420 = vmatprep.subr.mxu0 0.0
        %1421 = vmatpush1.msra.mxu0 0.0
        %1422 = vmatprep.subr.mxu0 0.0
        %1423 = vmatpush1.msra.mxu0 0.0
        %1424 = vmatprep.subr.mxu0 0.0
        %1425 = vmatpush1.msra.mxu0 0.0
        %1426 = vmatprep.subr.mxu0 0.0
        %1427 = vmatpush1.msra.mxu0 0.0
        %1428 = vmatprep.subr.mxu0 0.0
        %1429 = vmatpush1.msra.mxu0 0.0
        %1430 = vmatprep.subr.mxu0 0.0
        %1431 = vmatpush1.msra.mxu0 0.0
        %1432 = vmatprep.subr.mxu0 0.0
        %1433 = vmatpush1.msra.mxu0 0.0
        %1434 = vmatprep.subr.mxu0 0.0
        %1435 = vmatpush1.msra.mxu0 0.0
        %1436 = vmatprep.subr.mxu0 0.0
        %1437 = vmatpush1.msra.mxu0 0.0
        %1438 = vmatprep.subr.mxu0 0.0
        %1439 = vmatpush1.msra.mxu0 0.0
        %1440 = vmatprep.subr.mxu0 0.0
        %1441 = vmatpush1.msra.mxu0 0.0
        %1442 = vmatprep.subr.mxu0 0.0
        %1443 = vmatpush1.msra.mxu0 0.0
        %1444 = vmatprep.subr.mxu0 0.0
        %1445 = vmatpush1.msra.mxu0 0.0
        %1446 = vmatprep.subr.mxu0 0.0
        %1447 = vmatpush1.msra.mxu0 0.0
        %1448 = vmatprep.subr.mxu0 0.0
        %1449 = vmatpush1.msra.mxu0 0.0
        %1450 = vmatprep.subr.mxu0 0.0
        %1451 = vmatpush1.msra.mxu0 0.0
        %1452 = vmatprep.subr.mxu0 0.0
        %1453 = vmatpush1.msra.mxu0 0.0
        %1454 = vmatprep.subr.mxu0 0.0
        %1455 = vmatpush1.msra.mxu0 0.0
        %1456 = vmatprep.subr.mxu0 0.0
        %1457 = vmatpush1.msra.mxu0 0.0
        %1458 = vmatprep.subr.mxu0 0.0
        %1459 = vmatpush1.msra.mxu0 0.0
        %1460 = vmatprep.subr.mxu0 0.0
        %1461 = vmatpush1.msra.mxu0 0.0
        %1462 = vmatprep.subr.mxu0 0.0
        %1463 = vmatpush1.msra.mxu0 0.0
        %1464 = vmatprep.subr.mxu0 0.0
        %1465 = vmatpush1.msra.mxu0 0.0
        %1466 = vmatprep.subr.mxu0 0.0
        %1467 = vmatpush1.msra.mxu0 0.0
        %1468 = vmatprep.subr.mxu0 0.0
        %1469 = vmatpush1.msra.mxu0 0.0
        %1470 = vmatprep.subr.mxu0 0.0
        %1471 = vmatpush1.msra.mxu0 0.0
        %1472 = vmatprep.subr.mxu0 0.0
        %1473 = vmatpush1.msra.mxu0 0.0
        %1474 = vmatprep.subr.mxu0 0.0
        %1475 = vmatpush1.msra.mxu0 0.0
        %1476 = vmatprep.subr.mxu0 0.0
        %1477 = vmatpush1.msra.mxu0 0.0
        %1478 = vmatprep.subr.mxu0 0.0
        %1479 = vmatpush1.msra.mxu0 0.0
        %1480 = vmatprep.subr.mxu0 0.0
        %1481 = vmatpush1.msra.mxu0 0.0
        %1482 = vmatprep.mubr.f32.mxu0 0.0
        %1483 = vmatmul.mubr.f32.gmra.mrb[0].mxu0 %v1416
        %v1484 = vpop.f32.mrb[0].mxu0
        %v1485 = vadd.f32 %v1341, %v1484
        %v1486 = vpop.f32.mrb[0].mxu0
        %v1487 = vadd.f32 %v1343, %v1486
        %1488 = vdwg.mxu0
        %1489 = vmatprep.subr.mxu0 0.0
        %1490 = vmatpush1.msra.mxu0 %v502
        %1491 = vmatprep.subr.mxu0 0.0
        %1492 = vmatpush1.msra.mxu0 0.0
        %1493 = vmatprep.subr.mxu0 0.0
        %1494 = vmatpush1.msra.mxu0 0.0
        %1495 = vmatprep.subr.mxu0 0.0
        %1496 = vmatpush1.msra.mxu0 0.0
        %1497 = vmatprep.subr.mxu0 0.0
        %1498 = vmatpush1.msra.mxu0 0.0
        %1499 = vmatprep.subr.mxu0 0.0
        %1500 = vmatpush1.msra.mxu0 0.0
        %1501 = vmatprep.subr.mxu0 0.0
        %1502 = vmatpush1.msra.mxu0 0.0
        %1503 = vmatprep.subr.mxu0 0.0
        %1504 = vmatpush1.msra.mxu0 0.0
        %1505 = vmatprep.subr.mxu0 0.0
        %1506 = vmatpush1.msra.mxu0 0.0
        %1507 = vmatprep.subr.mxu0 0.0
        %1508 = vmatpush1.msra.mxu0 0.0
        %1509 = vmatprep.subr.mxu0 0.0
        %1510 = vmatpush1.msra.mxu0 0.0
        %1511 = vmatprep.subr.mxu0 0.0
        %1512 = vmatpush1.msra.mxu0 0.0
        %1513 = vmatprep.subr.mxu0 0.0
        %1514 = vmatpush1.msra.mxu0 0.0
        %1515 = vmatprep.subr.mxu0 0.0
        %1516 = vmatpush1.msra.mxu0 0.0
        %1517 = vmatprep.subr.mxu0 0.0
        %1518 = vmatpush1.msra.mxu0 0.0
        %1519 = vmatprep.subr.mxu0 0.0
        %1520 = vmatpush1.msra.mxu0 0.0
        %1521 = vmatprep.subr.mxu0 0.0
        %1522 = vmatpush1.msra.mxu0 0.0
        %1523 = vmatprep.subr.mxu0 0.0
        %1524 = vmatpush1.msra.mxu0 0.0
        %1525 = vmatprep.subr.mxu0 0.0
        %1526 = vmatpush1.msra.mxu0 0.0
        %1527 = vmatprep.subr.mxu0 0.0
        %1528 = vmatpush1.msra.mxu0 0.0
        %1529 = vmatprep.subr.mxu0 0.0
        %1530 = vmatpush1.msra.mxu0 0.0
        %1531 = vmatprep.subr.mxu0 0.0
        %1532 = vmatpush1.msra.mxu0 0.0
        %1533 = vmatprep.subr.mxu0 0.0
        %1534 = vmatpush1.msra.mxu0 0.0
        %1535 = vmatprep.subr.mxu0 0.0
        %1536 = vmatpush1.msra.mxu0 0.0
        %1537 = vmatprep.subr.mxu0 0.0
        %1538 = vmatpush1.msra.mxu0 0.0
        %1539 = vmatprep.subr.mxu0 0.0
        %1540 = vmatpush1.msra.mxu0 0.0
        %1541 = vmatprep.subr.mxu0 0.0
        %1542 = vmatpush1.msra.mxu0 0.0
        %1543 = vmatprep.subr.mxu0 0.0
        %1544 = vmatpush1.msra.mxu0 0.0
        %1545 = vmatprep.subr.mxu0 0.0
        %1546 = vmatpush1.msra.mxu0 0.0
        %1547 = vmatprep.subr.mxu0 0.0
        %1548 = vmatpush1.msra.mxu0 0.0
        %1549 = vmatprep.subr.mxu0 0.0
        %1550 = vmatpush1.msra.mxu0 0.0
        %1551 = vmatprep.subr.mxu0 0.0
        %1552 = vmatpush1.msra.mxu0 0.0
        %1553 = vmatprep.mubr.f32.mxu0 0.0
        %1554 = vmatmul.mubr.f32.gmra.mrb[0].mxu0 %v1416
        %v1555 = vpop.f32.mrb[0].mxu0
        %v1556 = vadd.f32 %v1412, %v1555
        %v1557 = vpop.f32.mrb[0].mxu0
        %1558 = vdwg.mxu0
        %s1559 = scalar_lea.vmem %s1, 64
        %v1560 = vld [vmem:[%s1559] sm:$0xff]
        %v1562 = vsel %vm342, %v1560, 0
        %1564 = vmatprep.subr.mxu0 %v652
        %1565 = vmatpush1.msra.mxu0 %v650
        %1566 = vmatprep.subr.mxu0 0.0
        %1567 = vmatpush1.msra.mxu0 0.0
        %1568 = vmatprep.subr.mxu0 0.0
        %1569 = vmatpush1.msra.mxu0 0.0
        %1570 = vmatprep.subr.mxu0 0.0
        %1571 = vmatpush1.msra.mxu0 0.0
        %1572 = vmatprep.subr.mxu0 0.0
        %1573 = vmatpush1.msra.mxu0 0.0
        %1574 = vmatprep.subr.mxu0 0.0
        %1575 = vmatpush1.msra.mxu0 0.0
        %1576 = vmatprep.subr.mxu0 0.0
        %1577 = vmatpush1.msra.mxu0 0.0
        %1578 = vmatprep.subr.mxu0 0.0
        %1579 = vmatpush1.msra.mxu0 0.0
        %1580 = vmatprep.subr.mxu0 0.0
        %1581 = vmatpush1.msra.mxu0 0.0
        %1582 = vmatprep.subr.mxu0 0.0
        %1583 = vmatpush1.msra.mxu0 0.0
        %1584 = vmatprep.subr.mxu0 0.0
        %1585 = vmatpush1.msra.mxu0 0.0
        %1586 = vmatprep.subr.mxu0 0.0
        %1587 = vmatpush1.msra.mxu0 0.0
        %1588 = vmatprep.subr.mxu0 0.0
        %1589 = vmatpush1.msra.mxu0 0.0
        %1590 = vmatprep.subr.mxu0 0.0
        %1591 = vmatpush1.msra.mxu0 0.0
        %1592 = vmatprep.subr.mxu0 0.0
        %1593 = vmatpush1.msra.mxu0 0.0
        %1594 = vmatprep.subr.mxu0 0.0
        %1595 = vmatpush1.msra.mxu0 0.0
        %1596 = vmatprep.subr.mxu0 0.0
        %1597 = vmatpush1.msra.mxu0 0.0
        %1598 = vmatprep.subr.mxu0 0.0
        %1599 = vmatpush1.msra.mxu0 0.0
        %1600 = vmatprep.subr.mxu0 0.0
        %1601 = vmatpush1.msra.mxu0 0.0
        %1602 = vmatprep.subr.mxu0 0.0
        %1603 = vmatpush1.msra.mxu0 0.0
        %1604 = vmatprep.subr.mxu0 0.0
        %1605 = vmatpush1.msra.mxu0 0.0
        %1606 = vmatprep.subr.mxu0 0.0
        %1607 = vmatpush1.msra.mxu0 0.0
        %1608 = vmatprep.subr.mxu0 0.0
        %1609 = vmatpush1.msra.mxu0 0.0
        %1610 = vmatprep.subr.mxu0 0.0
        %1611 = vmatpush1.msra.mxu0 0.0
        %1612 = vmatprep.subr.mxu0 0.0
        %1613 = vmatpush1.msra.mxu0 0.0
        %1614 = vmatprep.subr.mxu0 0.0
        %1615 = vmatpush1.msra.mxu0 0.0
        %1616 = vmatprep.subr.mxu0 0.0
        %1617 = vmatpush1.msra.mxu0 0.0
        %1618 = vmatprep.subr.mxu0 0.0
        %1619 = vmatpush1.msra.mxu0 0.0
        %1620 = vmatprep.subr.mxu0 0.0
        %1621 = vmatpush1.msra.mxu0 0.0
        %1622 = vmatprep.subr.mxu0 0.0
        %1623 = vmatpush1.msra.mxu0 0.0
        %1624 = vmatprep.subr.mxu0 0.0
        %1625 = vmatpush1.msra.mxu0 0.0
        %1626 = vmatprep.subr.mxu0 0.0
        %1627 = vmatpush1.msra.mxu0 0.0
        %1628 = vmatprep.mubr.f32.mxu0 0.0
        %1629 = vmatmul.mubr.f32.gmra.mrb[0].mxu0 %v1562
        %v1630 = vpop.f32.mrb[0].mxu0
        %v1631 = vadd.f32 0.0, %v1630
        %v1632 = vpop.f32.mrb[0].mxu0
        %v1633 = vadd.f32 0.0, %v1632
        %1634 = vdwg.mxu0
        %1635 = vmatprep.subr.mxu0 0.0
        %1636 = vmatpush1.msra.mxu0 %v655
        %1637 = vmatprep.subr.mxu0 0.0
        %1638 = vmatpush1.msra.mxu0 0.0
        %1639 = vmatprep.subr.mxu0 0.0
        %1640 = vmatpush1.msra.mxu0 0.0
        %1641 = vmatprep.subr.mxu0 0.0
        %1642 = vmatpush1.msra.mxu0 0.0
        %1643 = vmatprep.subr.mxu0 0.0
        %1644 = vmatpush1.msra.mxu0 0.0
        %1645 = vmatprep.subr.mxu0 0.0
        %1646 = vmatpush1.msra.mxu0 0.0
        %1647 = vmatprep.subr.mxu0 0.0
        %1648 = vmatpush1.msra.mxu0 0.0
        %1649 = vmatprep.subr.mxu0 0.0
        %1650 = vmatpush1.msra.mxu0 0.0
        %1651 = vmatprep.subr.mxu0 0.0
        %1652 = vmatpush1.msra.mxu0 0.0
        %1653 = vmatprep.subr.mxu0 0.0
        %1654 = vmatpush1.msra.mxu0 0.0
        %1655 = vmatprep.subr.mxu0 0.0
        %1656 = vmatpush1.msra.mxu0 0.0
        %1657 = vmatprep.subr.mxu0 0.0
        %1658 = vmatpush1.msra.mxu0 0.0
        %1659 = vmatprep.subr.mxu0 0.0
        %1660 = vmatpush1.msra.mxu0 0.0
        %1661 = vmatprep.subr.mxu0 0.0
        %1662 = vmatpush1.msra.mxu0 0.0
        %1663 = vmatprep.subr.mxu0 0.0
        %1664 = vmatpush1.msra.mxu0 0.0
        %1665 = vmatprep.subr.mxu0 0.0
        %1666 = vmatpush1.msra.mxu0 0.0
        %1667 = vmatprep.subr.mxu0 0.0
        %1668 = vmatpush1.msra.mxu0 0.0
        %1669 = vmatprep.subr.mxu0 0.0
        %1670 = vmatpush1.msra.mxu0 0.0
        %1671 = vmatprep.subr.mxu0 0.0
        %1672 = vmatpush1.msra.mxu0 0.0
        %1673 = vmatprep.subr.mxu0 0.0
        %1674 = vmatpush1.msra.mxu0 0.0
        %1675 = vmatprep.subr.mxu0 0.0
        %1676 = vmatpush1.msra.mxu0 0.0
        %1677 = vmatprep.subr.mxu0 0.0
        %1678 = vmatpush1.msra.mxu0 0.0
        %1679 = vmatprep.subr.mxu0 0.0
        %1680 = vmatpush1.msra.mxu0 0.0
        %1681 = vmatprep.subr.mxu0 0.0
        %1682 = vmatpush1.msra.mxu0 0.0
        %1683 = vmatprep.subr.mxu0 0.0
        %1684 = vmatpush1.msra.mxu0 0.0
        %1685 = vmatprep.subr.mxu0 0.0
        %1686 = vmatpush1.msra.mxu0 0.0
        %1687 = vmatprep.subr.mxu0 0.0
        %1688 = vmatpush1.msra.mxu0 0.0
        %1689 = vmatprep.subr.mxu0 0.0
        %1690 = vmatpush1.msra.mxu0 0.0
        %1691 = vmatprep.subr.mxu0 0.0
        %1692 = vmatpush1.msra.mxu0 0.0
        %1693 = vmatprep.subr.mxu0 0.0
        %1694 = vmatpush1.msra.mxu0 0.0
        %1695 = vmatprep.subr.mxu0 0.0
        %1696 = vmatpush1.msra.mxu0 0.0
        %1697 = vmatprep.subr.mxu0 0.0
        %1698 = vmatpush1.msra.mxu0 0.0
        %1699 = vmatprep.mubr.f32.mxu0 0.0
        %1700 = vmatmul.mubr.f32.gmra.mrb[0].mxu0 %v1562
        %v1701 = vpop.f32.mrb[0].mxu0
        %v1702 = vadd.f32 0.0, %v1701
        %v1703 = vpop.f32.mrb[0].mxu0
        %1704 = vdwg.mxu0
        %v1705 = vadd.f32 %v1485, %v1631
        %v1706 = vadd.f32 %v1487, %v1633
        %v1707 = vadd.f32 %v1556, %v1702
        %1711 = vrot.lane.b32.xlu0 %v1705, 110
        %v1712 = vpop.permute.xlu0 %1711
        %1713 = vrot.lane.b32.xlu0 %v1706, 110
        %v1714 = vpop.permute.xlu0 %1713
        %1715 = vrot.lane.b32.xlu0 %v1707, 110
        %v1716 = vpop.permute.xlu0 %1715
        %vm1717 = vcmask 900096
        %v1718 = vsel %vm1717, %v1712, %v1714
        %v1719 = vsel %vm1717, %v1714, %v1716
        %1723 = vrot.lane.b32.xlu0 %v1705, 50
        %v1724 = vpop.permute.xlu0 %1723
        %vm1726 = vcmask 408576
        %v1727 = vsel %vm1726, %v1716, %v1724
        %v1728 = vadd.f32 %v1264, %v1718
        %v1729 = vadd.f32 %v1265, %v1719
        %v1730 = vadd.f32 %v1266, %v1727
        %v1731 = vmul.f32 %v1728, %v292
        %v1732 = vmul.f32 %v1729, %v296
        %v1733 = vmul.f32 %v1730, %v300
        %vm1734 = vcmask 1042432
        %v1735 = vsel %vm1734, %v1731, 0.0
        %v1736 = vsel %vm1734, %v1732, 0.0
        %v1737 = vadd.f32 %v1735, %v1736
        %vm1738 = vcmask 550912
        %v1739 = vsel %vm1738, %v1733, 0.0
        %v1740 = vadd.f32 %v1737, %v1739
        %1741 = vadd.xlane.f32.xlu0 %v1740
        %v1742 = vpop.xlane.xlu0 %1741
        %v1743 = vmul.f32 %v1731, %v1731
        %v1744 = vmul.f32 %v1732, %v1732
        %v1745 = vmul.f32 %v1733, %v1733
        %v1746 = vsel %vm1734, %v1743, 0.0
        %v1747 = vsel %vm1734, %v1744, 0.0
        %v1748 = vadd.f32 %v1746, %v1747
        %v1749 = vsel %vm1738, %v1745, 0.0
        %v1750 = vadd.f32 %v1748, %v1749
        %1751 = vadd.xlane.f32.xlu0 %v1750
        %v1752 = vpop.xlane.xlu0 %1751
        %v1753 = vlaneseq
        %v1754 = vand.u32 %v1753, 127
        %vm1755 = vcmp.eq.s32.totalorder %v1754, 0
        %v1756 = vsel %vm1755, %v1742, %v1752
        %vm1757 = vcmask 10240
        %1758 = vst.msk [vmem:[%s252] sm:$0x7] %vm1757, %v1756
        %v1761 = vcombine.low %v1731, %v1732
        %1763 = vst [vmem:[%s262] sm:$0x77] %v1761
        %1764 = vst.msk [vmem:[%s262 + $0x8] sm:$0x7] %vm1738, %v1733
        %p1765 = scmp.lt.s32.totalorder %s21, 1
        %s1766 = scalar_select %p1765, %s21, 1
        %s1767 = smul.addr %s1766, 3
        %s1768 = smul.addr %s1767, 4
        %s1769 = scalar_lea.vmem %s5, %s1768
        %s1770 = sand.u32 %s165, 1
        %s1771 = scalar_lea.sflag [#allocation3], %s1770
        %s1772 = sand.u32 %s165, 1
        %s1773 = smul.addr %s1772, 4
        %s1774 = scalar_lea.vmem [#allocation2], %s1773
        // Predicated region
        $region41: #{dncnn_pallas.19} parent=39 // pred_check
          %p1775 = pneg %p149
        $region42: #{dncnn_pallas.19} parent=39 // pred_check_branch
          %1777 = sbr.rel (%p1775) target = $region44
        $region43: #{dncnn_pallas.19} parent=39 // pred_region
          _
        $region44: #{dncnn_pallas.19} parent=39 // pred_fallthru
          _
        // Predicated region
        $region45: #{dncnn_pallas.19} parent=39 // pred_check
          %p1778 = pneg %p175
        $region46: #{dncnn_pallas.19} parent=39 // pred_check_branch
          %1780 = sbr.rel (%p1778) target = $region48
        $region47: #{dncnn_pallas.19} parent=39 // pred_region
          %s1782 = ssub.s32 64, 64
          %1783 = vsyncadd %s1771, %s1782
          %s1784 = smul.addr %s21, 64
          %s1785 = scalar_lea.hbm %s6, %s1784
          %s1787 = sshll.u32 %s1774, 4
          %s1788 = int_to_ptr.vmem [resolvable:$true] %s1787
          %1790 = dma.vmem_to_hbm [thread:$0]  %s1788, 64, %s1785, %s1771
        $region48: #{dncnn_pallas.19} parent=39 // pred_fallthru
          _
      $region40: #{dncnn_pallas.19} parent=5 // pred_fallthru
        _
      %p1791 = scmp.le.s32.totalorder 2, %s16
      // Predicated region
      $region49: #{dncnn_pallas.19} parent=5 // pred_check
        %p1792 = pneg %p1791
      $region50: #{dncnn_pallas.19} parent=5 // pred_check_branch
        %1794 = sbr.rel (%p1792) target = $region52
      $region51: #{dncnn_pallas.19} parent=5 // pred_region
        %s1795 = ssub.s32 %s16, 2
        // Predicated region
        $region53: #{dncnn_pallas.19} parent=51 // pred_check
          %p1796 = pneg %p155
        $region54: #{dncnn_pallas.19} parent=51 // pred_check_branch
          %1798 = sbr.rel (%p1796) target = $region56
        $region55: #{dncnn_pallas.19} parent=51 // pred_region
          %p1799 = scmp.lt.s32.totalorder %s22, 1
          %s1800 = scalar_select %p1799, %s22, 1
          %s1801 = smul.addr %s1800, 3
          %s1802 = smul.addr %s1801, 4
          %s1803 = scalar_lea.vmem %s5, %s1802
        $region56: #{dncnn_pallas.19} parent=51 // pred_fallthru
          _
        // Predicated region
        $region57: #{dncnn_pallas.19} parent=51 // pred_check
          %p1804 = pneg %p181
        $region58: #{dncnn_pallas.19} parent=51 // pred_check_branch
          %1806 = sbr.rel (%p1804) target = $region60
        $region59: #{dncnn_pallas.19} parent=51 // pred_region
          %s1807 = sand.u32 %s166, 1
          %s1808 = scalar_lea.sflag [#allocation3], %s1807
          %s1809 = sand.u32 %s166, 1
          %s1810 = smul.addr %s1809, 4
          %s1811 = scalar_lea.vmem [#allocation2], %s1810
          %1812 = dma.done %s1808, 64
        $region60: #{dncnn_pallas.19} parent=51 // pred_fallthru
          _
      $region52: #{dncnn_pallas.19} parent=5 // pred_fallthru
        _
    $region6: #{dncnn_pallas.19} parent=1 // loop_footer
      %s20 = sadd.s32 1, %s16
    $region7: #{dncnn_pallas.19} parent=1 // loop_footer_branch
      %15 = sbr.rel target = $region3
    $region8: #{dncnn_pallas.19} parent=1 // loop_exit
      _
    %1813 = vsyncpa [#allocation3], 1
    %s1814 = scalar_lea.sflag [#allocation3], 1
    %1815 = vsyncpa %s1814, 1

</llo_original>
